<compile_context>
chip_gen: v6e
topology: v6e:2x2x1
jax: 0.10.0
libtpu: 0.0.40
codegen_flags: <defaults>
</compile_context>

<pallas_src>
import jax
import jax.numpy as jnp
from jax.experimental import pallas as pl
from jax.experimental.pallas import tpu as pltpu


def _mlp_kernel(x_ref, w1_ref, b1_ref, w2_ref, b2_ref, w3_ref, b3_ref, o_ref):
    # fc1: Linear + Tanh (Dropout = identity at eval). bf16 x bf16 on the MXU, f32 accumulate.
    h1 = jnp.tanh(
        jnp.dot(x_ref[...], w1_ref[...], preferred_element_type=jnp.float32)
        + b1_ref[...]
    )
    # fc2: Linear + Tanh (Dropout = identity at eval).
    h2 = jnp.tanh(
        jnp.dot(h1.astype(jnp.bfloat16), w2_ref[...], preferred_element_type=jnp.float32)
        + b2_ref[...]
    )
    # fc_final: Linear(H2 -> 1) as a VPU multiply + lane reduction (w3 is a (1, H2) row;
    # avoids an N=1 MXU matmul and the pathological (H2, 1) weight tile).
    out = jnp.sum(h2 * w3_ref[...], axis=1, keepdims=True) + b3_ref[0, 0]
    o_ref[...] = out.astype(o_ref.dtype)


def simple_nn_for_vector_find_v9(x, params, *, block_b=256):
    """Fused forward pass (eval mode). x: (B, D) float32.

    params:
      w1: (D, H1) bf16, b1: (1, H1) f32,
      w2: (H1, H2) bf16, b2: (1, H2) f32,
      w3: (1, H2) f32,  b3: (1, 1) f32.
    block_b: batch rows per grid step (256 matches v6e/v7x MXU height; use 128 on v5e).
    """
    B, D = x.shape
    w1, b1 = params["w1"], params["b1"]
    w2, b2 = params["w2"], params["b2"]
    w3, b3 = params["w3"], params["b3"]
    H1 = w1.shape[1]
    H2 = w2.shape[1]

    tb = int(block_b)
    num_tiles = pl.cdiv(B, tb)
    b_pad = num_tiles * tb

    # Pad the batch to a whole number of tiles; feed the MXU its native bf16 inputs.
    x_pad = jnp.pad(x, ((0, b_pad - B), (0, 0))).astype(jnp.bfloat16)

    # Constant block index => operand is fetched once and stays VMEM-resident across steps.
    resident = lambda shape: pl.BlockSpec(shape, lambda i: (0,) * len(shape))

    out = pl.pallas_call(
        _mlp_kernel,
        out_shape=jax.ShapeDtypeStruct((b_pad, 1), jnp.float32),
        grid=(num_tiles,),
        in_specs=[
            pl.BlockSpec((tb, D), lambda i: (i, 0)),            # x: streamed per batch tile
            resident((D, H1)),                                  # w1 (bf16, resident)
            resident((1, H1)),                                  # b1
            resident((H1, H2)),                                 # w2 (bf16, resident)
            resident((1, H2)),                                  # b2
            resident((1, H2)),                                  # w3 row
            pl.BlockSpec(memory_space=pltpu.MemorySpace.SMEM),  # b3 scalar in SMEM
        ],
        out_specs=pl.BlockSpec((tb, 1), lambda i: (i, 0)),
        compiler_params=pltpu.CompilerParams(
            dimension_semantics=("parallel",),   # batch tiles are independent (v7x megacore)
            vmem_limit_bytes=32 * 1024 * 1024,
        ),
    )(x_pad, w1, b1, w2, b2, w3, b3)

    return out[:B]


def init_params(key, mid_vector_dim):
    """Synthetic init matching nn.Linear shapes; large weights stored transposed + bf16."""
    h1 = 768 + mid_vector_dim // 4
    h2 = 128 + mid_vector_dim // 8
    ks = jax.random.split(key, 6)
    scale = 0.02
    # PyTorch nn.Linear weight is (out, in); w1/w2 stored as W.T = (in, out) for x @ W.T.
    w1 = (scale * jax.random.normal(ks[0], (h1, mid_vector_dim), jnp.float32)).T
    b1 = scale * jax.random.normal(ks[1], (1, h1), jnp.float32)
    w2 = (scale * jax.random.normal(ks[2], (h2, h1), jnp.float32)).T
    b2 = scale * jax.random.normal(ks[3], (1, h2), jnp.float32)
    w3 = scale * jax.random.normal(ks[4], (1, h2), jnp.float32)   # fc_final weight, native (1, H2)
    b3 = scale * jax.random.normal(ks[5], (1, 1), jnp.float32)
    return {
        "w1": w1.astype(jnp.bfloat16), "b1": b1,
        "w2": w2.astype(jnp.bfloat16), "b2": b2,
        "w3": w3, "b3": b3,
    }


def reference_forward(x, params):
    """Pure-JAX reference with the same bf16-in / f32-accumulate numerics (eval mode)."""
    h1 = jnp.tanh(
        jnp.dot(x.astype(jnp.bfloat16), params["w1"], preferred_element_type=jnp.float32)
        + params["b1"]
    )
    h2 = jnp.tanh(
        jnp.dot(h1.astype(jnp.bfloat16), params["w2"], preferred_element_type=jnp.float32)
        + params["b2"]
    )
    return jnp.sum(h2 * params["w3"], axis=-1, keepdims=True) + params["b3"]


if __name__ == "__main__":
    key = jax.random.PRNGKey(0)
    kx, kp = jax.random.split(key)

    mid_vector_dim = 512          # -> H1 = 896, H2 = 192, out_features = 1
    batch = 1000                  # not a multiple of the batch tile: exercises padding path

    x = jax.random.normal(kx, (batch, mid_vector_dim), jnp.float32)
    params = init_params(kp, mid_vector_dim)

    fwd = jax.jit(simple_nn_for_vector_find_v9)
    out = jax.block_until_ready(fwd(x, params))

    ref = reference_forward(x, params)
    assert out.shape == (batch, 1), out.shape
    max_err = float(jnp.max(jnp.abs(out - ref)))
    assert jnp.allclose(out, ref, atol=1e-3, rtol=5e-3), f"mismatch vs reference: {max_err}"

    print("KERNEL_OK")
</pallas_src>

<mosaic_0001>
module attributes {stable_mosaic.version = 11 : i64} {
  func.func @_mlp_kernel(%arg0: i32, %arg1: memref<256x512xbf16, #tpu.memory_space<vmem>>, %arg2: memref<512x896xbf16, #tpu.memory_space<vmem>>, %arg3: memref<1x896xf32, #tpu.memory_space<vmem>>, %arg4: memref<896x192xbf16, #tpu.memory_space<vmem>>, %arg5: memref<1x192xf32, #tpu.memory_space<vmem>>, %arg6: memref<1x192xf32, #tpu.memory_space<vmem>>, %arg7: memref<1x1xf32, #tpu.memory_space<smem>>, %arg8: memref<256x1xf32, #tpu.memory_space<vmem>>) attributes {dimension_semantics = [#tpu.dimension_semantics<parallel>], iteration_bounds = array<i64: 4>, scalar_prefetch = 0 : i64, scratch_operands = 0 : i64, tpu.core_type = #tpu.core_type<tc>, window_params = [{transform_indices = @transform_0, window_bounds = array<i64: 256, 512>}, {pipeline_mode = #tpu.pipeline_mode<synchronous>, transform_indices = @transform_1, window_bounds = array<i64: 512, 896>}, {pipeline_mode = #tpu.pipeline_mode<synchronous>, transform_indices = @transform_2, window_bounds = array<i64: 1, 896>}, {pipeline_mode = #tpu.pipeline_mode<synchronous>, transform_indices = @transform_3, window_bounds = array<i64: 896, 192>}, {pipeline_mode = #tpu.pipeline_mode<synchronous>, transform_indices = @transform_4, window_bounds = array<i64: 1, 192>}, {pipeline_mode = #tpu.pipeline_mode<synchronous>, transform_indices = @transform_5, window_bounds = array<i64: 1, 192>}, {transform_indices = @transform_6, window_bounds = array<i64: 1, 1>}, {transform_indices = @transform_7, window_bounds = array<i64: 256, 1>}]} {
    %c0 = arith.constant 0 : index
    %c0_0 = arith.constant 0 : index
    %0 = vector.load %arg1[%c0, %c0_0] : memref<256x512xbf16, #tpu.memory_space<vmem>>, vector<256x512xbf16>
    %c0_1 = arith.constant 0 : index
    %c0_2 = arith.constant 0 : index
    %1 = vector.load %arg2[%c0_1, %c0_2] : memref<512x896xbf16, #tpu.memory_space<vmem>>, vector<512x896xbf16>
    %cst = arith.constant dense<0.000000e+00> : vector<256x896xf32>
    %2 = tpu.matmul %0, %1, %cst {dimension_numbers = #tpu.dot_dimension_numbers<[1], [0], [0], [1], [0, 0, 1, 1], [], []>} : vector<256x512xbf16>, vector<512x896xbf16>, vector<256x896xf32> -> vector<256x896xf32>
    %c0_3 = arith.constant 0 : index
    %c0_4 = arith.constant 0 : index
    %3 = vector.load %arg3[%c0_3, %c0_4] : memref<1x896xf32, #tpu.memory_space<vmem>>, vector<1x896xf32>
    %4 = vector.broadcast %3 : vector<1x896xf32> to vector<256x896xf32>
    %5 = arith.addf %2, %4 : vector<256x896xf32>
    %6 = math.tanh %5 : vector<256x896xf32>
    %7 = arith.truncf %6 : vector<256x896xf32> to vector<256x896xbf16>
    %c0_5 = arith.constant 0 : index
    %c0_6 = arith.constant 0 : index
    %8 = vector.load %arg4[%c0_5, %c0_6] : memref<896x192xbf16, #tpu.memory_space<vmem>>, vector<896x192xbf16>
    %cst_7 = arith.constant dense<0.000000e+00> : vector<256x192xf32>
    %9 = tpu.matmul %7, %8, %cst_7 {dimension_numbers = #tpu.dot_dimension_numbers<[1], [0], [0], [1], [0, 0, 1, 1], [], []>} : vector<256x896xbf16>, vector<896x192xbf16>, vector<256x192xf32> -> vector<256x192xf32>
    %c0_8 = arith.constant 0 : index
    %c0_9 = arith.constant 0 : index
    %10 = vector.load %arg5[%c0_8, %c0_9] : memref<1x192xf32, #tpu.memory_space<vmem>>, vector<1x192xf32>
    %11 = vector.broadcast %10 : vector<1x192xf32> to vector<256x192xf32>
    %12 = arith.addf %9, %11 : vector<256x192xf32>
    %13 = math.tanh %12 : vector<256x192xf32>
    %c0_10 = arith.constant 0 : index
    %c0_11 = arith.constant 0 : index
    %14 = vector.load %arg6[%c0_10, %c0_11] : memref<1x192xf32, #tpu.memory_space<vmem>>, vector<1x192xf32>
    %15 = vector.broadcast %14 : vector<1x192xf32> to vector<256x192xf32>
    %16 = arith.mulf %13, %15 : vector<256x192xf32>
    %cst_12 = arith.constant dense<0.000000e+00> : vector<256xf32>
    %17 = vector.multi_reduction <add>, %16, %cst_12 [1] : vector<256x192xf32> to vector<256xf32>
    %18 = vector.shape_cast %17 : vector<256xf32> to vector<256x1xf32>
    %c0_13 = arith.constant 0 : index
    %c0_14 = arith.constant 0 : index
    %19 = memref.load %arg7[%c0_13, %c0_14] : memref<1x1xf32, #tpu.memory_space<smem>>
    %20 = vector.broadcast %19 : f32 to vector<256x1xf32>
    %21 = arith.addf %18, %20 : vector<256x1xf32>
    %c0_15 = arith.constant 0 : index
    %c0_16 = arith.constant 0 : index
    %22 = vector.load %arg8[%c0_15, %c0_16] : memref<256x1xf32, #tpu.memory_space<vmem>>, vector<256x1xf32>
    tpu.vector_store %arg8[%c0_15, %c0_16], %21 {strides = array<i32>} : memref<256x1xf32, #tpu.memory_space<vmem>>, vector<256x1xf32>,
    return
  }
  func.func @transform_0(%arg0: i32) -> (i32, i32) {
    %c0_i32 = arith.constant 0 : i32
    %c0_i32_0 = arith.constant 0 : i32
    return %arg0, %c0_i32 : i32, i32
  }
  func.func @transform_1(%arg0: i32) -> (i32, i32) {
    %c0_i32 = arith.constant 0 : i32
    %c0_i32_0 = arith.constant 0 : i32
    %c0_i32_1 = arith.constant 0 : i32
    return %c0_i32, %c0_i32_0 : i32, i32
  }
  func.func @transform_2(%arg0: i32) -> (i32, i32) {
    %c0_i32 = arith.constant 0 : i32
    %c0_i32_0 = arith.constant 0 : i32
    %c0_i32_1 = arith.constant 0 : i32
    return %c0_i32, %c0_i32_0 : i32, i32
  }
  func.func @transform_3(%arg0: i32) -> (i32, i32) {
    %c0_i32 = arith.constant 0 : i32
    %c0_i32_0 = arith.constant 0 : i32
    %c0_i32_1 = arith.constant 0 : i32
    return %c0_i32, %c0_i32_0 : i32, i32
  }
  func.func @transform_4(%arg0: i32) -> (i32, i32) {
    %c0_i32 = arith.constant 0 : i32
    %c0_i32_0 = arith.constant 0 : i32
    %c0_i32_1 = arith.constant 0 : i32
    return %c0_i32, %c0_i32_0 : i32, i32
  }
  func.func @transform_5(%arg0: i32) -> (i32, i32) {
    %c0_i32 = arith.constant 0 : i32
    %c0_i32_0 = arith.constant 0 : i32
    %c0_i32_1 = arith.constant 0 : i32
    return %c0_i32, %c0_i32_0 : i32, i32
  }
  func.func @transform_6(%arg0: i32) -> (i32, i32) {
    %c0_i32 = arith.constant 0 : i32
    %c0_i32_0 = arith.constant 0 : i32
    %c0_i32_1 = arith.constant 0 : i32
    return %c0_i32, %c0_i32_0 : i32, i32
  }
  func.func @transform_7(%arg0: i32) -> (i32, i32) {
    %c0_i32 = arith.constant 0 : i32
    %c0_i32_0 = arith.constant 0 : i32
    return %arg0, %c0_i32 : i32, i32
  }
}

</mosaic_0001>

<llo_original>
// kernel: simple_nn_for_vector_find_v9.1
$region0: #{simple_nn_for_vector_find_v9.1}
  #allocation0 [shape = 'u32[]', space=smem, size = 0x4, offset = 0x4, fixed_abs, tag = 'smem constant byte address 0x4 - core index']
  #allocation1 [shape = 'u32[144,128]{1,0:T(1,128)}', space=vmem, size = 0x12000, scoped, tag = 'internal scratch']
  #allocation2 [shape = 'f32[1,1]{1,0:T(1,128)S(6)}', space=smem, size = 0x200, scoped, tag = 'scoped memory for simple_nn_for_vector_find_v9.1']
  %s0 = inlined_call_operand.vmem [shape: bf16[1024,512], index: 0, kind: input, shape index: {}]
  %s1 = inlined_call_operand.vmem [shape: bf16[512,896], index: 1, kind: input, shape index: {}]
  %s2 = inlined_call_operand.vmem [shape: f32[1,896], index: 2, kind: input, shape index: {}]
  %s3 = inlined_call_operand.vmem [shape: bf16[896,192], index: 3, kind: input, shape index: {}]
  %s4 = inlined_call_operand.vmem [shape: f32[1,192], index: 4, kind: input, shape index: {}]
  %s5 = inlined_call_operand.vmem [shape: f32[1,192], index: 5, kind: input, shape index: {}]
  %s6 = inlined_call_operand.<no memory space> [shape: f32[1,1], index: 6, kind: input, shape index: {}]
  %s7 = inlined_call_operand.vmem [shape: f32[1024,1], index: 7, kind: output, shape index: {}]
  %s8 = sld [smem:[#allocation0]]
  $region61: #{simple_nn_for_vector_find_v9.1} parent=0
    _
  %s10 = ssub.s32 1, %s8
  %s11 = scalar_select 0, %s10, %s8
  %12 = sst [smem:[#allocation2]] %s6
  loop: start=0, step=1, limit=6
  $region2: #{simple_nn_for_vector_find_v9.1} parent=0 // loop_pre_header
    _
  $region3: #{simple_nn_for_vector_find_v9.1} parent=0 // loop_header
    %s14 = sphi 0, %s18
    %p15 = scmp.ge.s32.totalorder %s14, 6
    %s24 = sphi 0, %s26
    %s27 = sphi 0, %s24
    %s28 = sphi 0, %s27
    %s44 = sphi 0, %s28
    %s48 = sphi 0, %s48
    %s50 = sphi 0, %s48
    %s51 = sphi 0, %s50
    %s65 = sphi 0, %s51
    %s69 = sphi 0, %s69
    %s71 = sphi 0, %s69
    %s72 = sphi 0, %s71
    %s86 = sphi 0, %s72
    %s90 = sphi 0, %s90
    %s92 = sphi 0, %s90
    %s93 = sphi 0, %s92
    %s107 = sphi 0, %s93
    %s111 = sphi 0, %s111
    %s113 = sphi 0, %s111
    %s114 = sphi 0, %s113
    %s128 = sphi 0, %s114
    %s132 = sphi 0, %s132
    %s134 = sphi 0, %s132
    %s135 = sphi 0, %s134
    %s149 = sphi 0, %s135
    %s153 = sphi 0, %s153
    %s155 = sphi 0, %s153
    %s156 = sphi 0, %s155
    %s170 = sphi 0, %s156
    %s176 = sphi 0, %s178
    %s179 = sphi 0, %s176
    %s180 = sphi 0, %s179
    %s196 = sphi 0, %s180
  $region4: #{simple_nn_for_vector_find_v9.1} parent=0 // loop_header_branch
    %17 = sbr.rel (%p15) target = $region8
  $region5: #{simple_nn_for_vector_find_v9.1} parent=0 // loop_body
    %s19 = ssub.s32 %s14, 1
    %s20 = ssub.s32 %s14, 2
    %s21 = sadd.s32 %s14, 1
    %s22 = ssub.s32 %s14, %s21
    %p23 = scmp.eq.s32.totalorder %s22, 0
    %s25 = sadd.s32 %s24, 1
    %s26 = scalar_select %p23, %s24, %s25
    %p29 = pneg %p23
    %p30 = scmp.eq.s32.totalorder %s14, 3
    %p31 = por %p29, %p30
    %p32 = scmp.ne.s32.totalorder %s24, %s27
    %p33 = scmp.eq.s32.totalorder %s14, 0
    %p34 = por %p32, %p33
    %p35 = scmp.ne.s32.totalorder %s24, %s27
    %p36 = scmp.eq.s32.totalorder %s19, 3
    %p37 = por %p35, %p36
    %p38 = scmp.ne.s32.totalorder %s27, %s28
    %p39 = scmp.eq.s32.totalorder %s19, 0
    %p40 = por %p38, %p39
    %p41 = scmp.ne.s32.totalorder %s27, %s28
    %p42 = scmp.eq.s32.totalorder %s20, 3
    %p43 = por %p41, %p42
    %p45 = scmp.ne.s32.totalorder %s28, %s44
    %p46 = scmp.eq.s32.totalorder %s20, 0
    %p47 = por %p45, %p46
    %s49 = sadd.s32 %s48, 1
    %p52 = scmp.eq.s32.totalorder %s14, 3
    %p53 = scmp.ne.s32.totalorder %s48, %s50
    %p54 = scmp.eq.s32.totalorder %s14, 0
    %p55 = por %p53, %p54
    %p56 = scmp.ne.s32.totalorder %s48, %s50
    %p57 = scmp.eq.s32.totalorder %s19, 3
    %p58 = por %p56, %p57
    %p59 = scmp.ne.s32.totalorder %s50, %s51
    %p60 = scmp.eq.s32.totalorder %s19, 0
    %p61 = por %p59, %p60
    %p62 = scmp.ne.s32.totalorder %s50, %s51
    %p63 = scmp.eq.s32.totalorder %s20, 3
    %p64 = por %p62, %p63
    %p66 = scmp.ne.s32.totalorder %s51, %s65
    %p67 = scmp.eq.s32.totalorder %s20, 0
    %p68 = por %p66, %p67
    %s70 = sadd.s32 %s69, 1
    %p73 = scmp.eq.s32.totalorder %s14, 3
    %p74 = scmp.ne.s32.totalorder %s69, %s71
    %p75 = scmp.eq.s32.totalorder %s14, 0
    %p76 = por %p74, %p75
    %p77 = scmp.ne.s32.totalorder %s69, %s71
    %p78 = scmp.eq.s32.totalorder %s19, 3
    %p79 = por %p77, %p78
    %p80 = scmp.ne.s32.totalorder %s71, %s72
    %p81 = scmp.eq.s32.totalorder %s19, 0
    %p82 = por %p80, %p81
    %p83 = scmp.ne.s32.totalorder %s71, %s72
    %p84 = scmp.eq.s32.totalorder %s20, 3
    %p85 = por %p83, %p84
    %p87 = scmp.ne.s32.totalorder %s72, %s86
    %p88 = scmp.eq.s32.totalorder %s20, 0
    %p89 = por %p87, %p88
    %s91 = sadd.s32 %s90, 1
    %p94 = scmp.eq.s32.totalorder %s14, 3
    %p95 = scmp.ne.s32.totalorder %s90, %s92
    %p96 = scmp.eq.s32.totalorder %s14, 0
    %p97 = por %p95, %p96
    %p98 = scmp.ne.s32.totalorder %s90, %s92
    %p99 = scmp.eq.s32.totalorder %s19, 3
    %p100 = por %p98, %p99
    %p101 = scmp.ne.s32.totalorder %s92, %s93
    %p102 = scmp.eq.s32.totalorder %s19, 0
    %p103 = por %p101, %p102
    %p104 = scmp.ne.s32.totalorder %s92, %s93
    %p105 = scmp.eq.s32.totalorder %s20, 3
    %p106 = por %p104, %p105
    %p108 = scmp.ne.s32.totalorder %s93, %s107
    %p109 = scmp.eq.s32.totalorder %s20, 0
    %p110 = por %p108, %p109
    %s112 = sadd.s32 %s111, 1
    %p115 = scmp.eq.s32.totalorder %s14, 3
    %p116 = scmp.ne.s32.totalorder %s111, %s113
    %p117 = scmp.eq.s32.totalorder %s14, 0
    %p118 = por %p116, %p117
    %p119 = scmp.ne.s32.totalorder %s111, %s113
    %p120 = scmp.eq.s32.totalorder %s19, 3
    %p121 = por %p119, %p120
    %p122 = scmp.ne.s32.totalorder %s113, %s114
    %p123 = scmp.eq.s32.totalorder %s19, 0
    %p124 = por %p122, %p123
    %p125 = scmp.ne.s32.totalorder %s113, %s114
    %p126 = scmp.eq.s32.totalorder %s20, 3
    %p127 = por %p125, %p126
    %p129 = scmp.ne.s32.totalorder %s114, %s128
    %p130 = scmp.eq.s32.totalorder %s20, 0
    %p131 = por %p129, %p130
    %s133 = sadd.s32 %s132, 1
    %p136 = scmp.eq.s32.totalorder %s14, 3
    %p137 = scmp.ne.s32.totalorder %s132, %s134
    %p138 = scmp.eq.s32.totalorder %s14, 0
    %p139 = por %p137, %p138
    %p140 = scmp.ne.s32.totalorder %s132, %s134
    %p141 = scmp.eq.s32.totalorder %s19, 3
    %p142 = por %p140, %p141
    %p143 = scmp.ne.s32.totalorder %s134, %s135
    %p144 = scmp.eq.s32.totalorder %s19, 0
    %p145 = por %p143, %p144
    %p146 = scmp.ne.s32.totalorder %s134, %s135
    %p147 = scmp.eq.s32.totalorder %s20, 3
    %p148 = por %p146, %p147
    %p150 = scmp.ne.s32.totalorder %s135, %s149
    %p151 = scmp.eq.s32.totalorder %s20, 0
    %p152 = por %p150, %p151
    %s154 = sadd.s32 %s153, 1
    %p157 = scmp.eq.s32.totalorder %s14, 3
    %p158 = scmp.ne.s32.totalorder %s153, %s155
    %p159 = scmp.eq.s32.totalorder %s14, 0
    %p160 = por %p158, %p159
    %p161 = scmp.ne.s32.totalorder %s153, %s155
    %p162 = scmp.eq.s32.totalorder %s19, 3
    %p163 = por %p161, %p162
    %p164 = scmp.ne.s32.totalorder %s155, %s156
    %p165 = scmp.eq.s32.totalorder %s19, 0
    %p166 = por %p164, %p165
    %p167 = scmp.ne.s32.totalorder %s155, %s156
    %p168 = scmp.eq.s32.totalorder %s20, 3
    %p169 = por %p167, %p168
    %p171 = scmp.ne.s32.totalorder %s156, %s170
    %p172 = scmp.eq.s32.totalorder %s20, 0
    %p173 = por %p171, %p172
    %s174 = ssub.s32 %s14, %s21
    %p175 = scmp.eq.s32.totalorder %s174, 0
    %s177 = sadd.s32 %s176, 1
    %s178 = scalar_select %p175, %s176, %s177
    %p181 = pneg %p175
    %p182 = scmp.eq.s32.totalorder %s14, 3
    %p183 = por %p181, %p182
    %p184 = scmp.ne.s32.totalorder %s176, %s179
    %p185 = scmp.eq.s32.totalorder %s14, 0
    %p186 = por %p184, %p185
    %p187 = scmp.ne.s32.totalorder %s176, %s179
    %p188 = scmp.eq.s32.totalorder %s19, 3
    %p189 = por %p187, %p188
    %p190 = scmp.ne.s32.totalorder %s179, %s180
    %p191 = scmp.eq.s32.totalorder %s19, 0
    %p192 = por %p190, %p191
    %p193 = scmp.ne.s32.totalorder %s179, %s180
    %p194 = scmp.eq.s32.totalorder %s20, 3
    %p195 = por %p193, %p194
    %p197 = scmp.ne.s32.totalorder %s180, %s196
    %p198 = scmp.eq.s32.totalorder %s20, 0
    %p199 = por %p197, %p198
    %p200 = scmp.le.s32.totalorder 1, %s14
    %p201 = scmp.lt.s32.totalorder %s14, 5
    %p202 = pnand %p200, %p201
    %p203 = pneg %p202
    // Predicated region
    $region9: #{simple_nn_for_vector_find_v9.1} parent=5 // pred_check
      _
    $region10: #{simple_nn_for_vector_find_v9.1} parent=5 // pred_check_branch
      %205 = sbr.rel (%p202) target = $region12
    $region11: #{simple_nn_for_vector_find_v9.1} parent=5 // pred_region
      %s206 = ssub.s32 %s14, 1
      // Predicated region
      $region13: #{simple_nn_for_vector_find_v9.1} parent=11 // pred_check
        %p207 = pneg %p61
      $region14: #{simple_nn_for_vector_find_v9.1} parent=11 // pred_check_branch
        %209 = sbr.rel (%p207) target = $region16
      $region15: #{simple_nn_for_vector_find_v9.1} parent=11 // pred_region
        _
      $region16: #{simple_nn_for_vector_find_v9.1} parent=11 // pred_fallthru
        _
      // Predicated region
      $region17: #{simple_nn_for_vector_find_v9.1} parent=11 // pred_check
        %p210 = pneg %p82
      $region18: #{simple_nn_for_vector_find_v9.1} parent=11 // pred_check_branch
        %212 = sbr.rel (%p210) target = $region20
      $region19: #{simple_nn_for_vector_find_v9.1} parent=11 // pred_region
        _
      $region20: #{simple_nn_for_vector_find_v9.1} parent=11 // pred_fallthru
        _
      // Predicated region
      $region21: #{simple_nn_for_vector_find_v9.1} parent=11 // pred_check
        %p213 = pneg %p103
      $region22: #{simple_nn_for_vector_find_v9.1} parent=11 // pred_check_branch
        %215 = sbr.rel (%p213) target = $region24
      $region23: #{simple_nn_for_vector_find_v9.1} parent=11 // pred_region
        _
      $region24: #{simple_nn_for_vector_find_v9.1} parent=11 // pred_fallthru
        _
      // Predicated region
      $region25: #{simple_nn_for_vector_find_v9.1} parent=11 // pred_check
        %p216 = pneg %p124
      $region26: #{simple_nn_for_vector_find_v9.1} parent=11 // pred_check_branch
        %218 = sbr.rel (%p216) target = $region28
      $region27: #{simple_nn_for_vector_find_v9.1} parent=11 // pred_region
        _
      $region28: #{simple_nn_for_vector_find_v9.1} parent=11 // pred_fallthru
        _
      // Predicated region
      $region29: #{simple_nn_for_vector_find_v9.1} parent=11 // pred_check
        %p219 = pneg %p145
      $region30: #{simple_nn_for_vector_find_v9.1} parent=11 // pred_check_branch
        %221 = sbr.rel (%p219) target = $region32
      $region31: #{simple_nn_for_vector_find_v9.1} parent=11 // pred_region
        _
      $region32: #{simple_nn_for_vector_find_v9.1} parent=11 // pred_fallthru
        _
      // Predicated region
      $region33: #{simple_nn_for_vector_find_v9.1} parent=11 // pred_check
        %p222 = pneg %p166
      $region34: #{simple_nn_for_vector_find_v9.1} parent=11 // pred_check_branch
        %224 = sbr.rel (%p222) target = $region36
      $region35: #{simple_nn_for_vector_find_v9.1} parent=11 // pred_region
        _
      $region36: #{simple_nn_for_vector_find_v9.1} parent=11 // pred_fallthru
        _
    $region12: #{simple_nn_for_vector_find_v9.1} parent=5 // pred_fallthru
      _
    %p225 = scmp.lt.s32.totalorder %s14, 4
    // Predicated region
    $region37: #{simple_nn_for_vector_find_v9.1} parent=5 // pred_check
      %p226 = pneg %p225
    $region38: #{simple_nn_for_vector_find_v9.1} parent=5 // pred_check_branch
      %228 = sbr.rel (%p226) target = $region40
    $region39: #{simple_nn_for_vector_find_v9.1} parent=5 // pred_region
      // Predicated region
      $region41: #{simple_nn_for_vector_find_v9.1} parent=39 // pred_check
        %p229 = pneg %p34
      $region42: #{simple_nn_for_vector_find_v9.1} parent=39 // pred_check_branch
        %231 = sbr.rel (%p229) target = $region44
      $region43: #{simple_nn_for_vector_find_v9.1} parent=39 // pred_region
        %s232 = smul.u32 32, %s14
        %p233 = scmp.lt.s32.totalorder %s232, 127
        %s234 = scalar_select %p233, %s232, 127
        %s235 = smul.addr %s234, 4
        %s236 = smul.addr %s235, 4
        %s237 = scalar_lea.vmem %s0, %s236
        %s238 = smul.u32 32, %s14
      $region44: #{simple_nn_for_vector_find_v9.1} parent=39 // pred_fallthru
        _
    $region40: #{simple_nn_for_vector_find_v9.1} parent=5 // pred_fallthru
      _
    %p239 = scmp.le.s32.totalorder 1, %s14
    %p240 = scmp.lt.s32.totalorder %s14, 5
    %p241 = pnand %p239, %p240
    %p242 = pneg %p241
    // Predicated region
    $region45: #{simple_nn_for_vector_find_v9.1} parent=5 // pred_check
      _
    $region46: #{simple_nn_for_vector_find_v9.1} parent=5 // pred_check_branch
      %244 = sbr.rel (%p241) target = $region48
    $region47: #{simple_nn_for_vector_find_v9.1} parent=5 // pred_region
      %s245 = ssub.s32 %s14, 1
      %s246 = smul.u32 32, %s19
      %p247 = scmp.lt.s32.totalorder %s246, 127
      %s248 = scalar_select %p247, %s246, 127
      %s249 = smul.addr %s248, 4
      %s250 = smul.addr %s249, 4
      %s251 = scalar_lea.vmem %s0, %s250
      %p252 = pneg %p40
      %p253 = pneg %p37
      %p254 = pneg %p61
      %p255 = pneg %p58
      %p256 = pneg %p82
      %p257 = pneg %p79
      %p258 = pneg %p103
      %p259 = pneg %p100
      %p260 = pneg %p124
      %p261 = pneg %p121
      %p262 = pneg %p145
      %p263 = pneg %p142
      %p264 = pneg %p166
      %p265 = pneg %p163
      %p266 = pneg %p192
      %p267 = pneg %p189
      %s268 = smul.u32 32, %s19
      %p269 = scmp.lt.s32.totalorder %s268, 127
      %s270 = scalar_select %p269, %s268, 127
      %s271 = smul.addr %s270, 8
      %s272 = scalar_lea.vmem %s7, %s271
      %s273 = smul.u32 32, %s19
      %p274 = scmp.lt.s32.totalorder %s273, 127
      %s275 = scalar_select %p274, %s273, 127
      %s276 = smul.addr %s275, 4
      %s277 = smul.addr %s276, 4
      %s278 = scalar_lea.vmem %s0, %s277
      %s279 = smul.u32 32, %s19
      %s280 = smul.u32 32, %s19
      %p281 = scmp.lt.s32.totalorder %s280, 127
      %s282 = scalar_select %p281, %s280, 127
      %s283 = smul.addr %s282, 8
      %s284 = scalar_lea.vmem %s7, %s283
      %s285 = smul.u32 32, %s19
      %v287 = vld [vmem:[%s278] sm:$0xff]
      %v288 = vld [vmem:[%s278 + $0x8] sm:$0xff]
      %v289 = vld [vmem:[%s278 + $0x10] sm:$0xff]
      %v290 = vld [vmem:[%s278 + $0x18] sm:$0xff]
      %v291 = vld [vmem:[%s278 + $0x20] sm:$0xff]
      %v292 = vld [vmem:[%s278 + $0x28] sm:$0xff]
      %v293 = vld [vmem:[%s278 + $0x30] sm:$0xff]
      %v294 = vld [vmem:[%s278 + $0x38] sm:$0xff]
      %v295 = vld [vmem:[%s278 + $0x40] sm:$0xff]
      %v296 = vld [vmem:[%s278 + $0x48] sm:$0xff]
      %v297 = vld [vmem:[%s278 + $0x50] sm:$0xff]
      %v298 = vld [vmem:[%s278 + $0x58] sm:$0xff]
      %v299 = vld [vmem:[%s278 + $0x60] sm:$0xff]
      %v300 = vld [vmem:[%s278 + $0x68] sm:$0xff]
      %v301 = vld [vmem:[%s278 + $0x70] sm:$0xff]
      %v302 = vld [vmem:[%s278 + $0x78] sm:$0xff]
      %v303 = vld [vmem:[%s278 + $0x80] sm:$0xff]
      %v304 = vld [vmem:[%s278 + $0x88] sm:$0xff]
      %v305 = vld [vmem:[%s278 + $0x90] sm:$0xff]
      %v306 = vld [vmem:[%s278 + $0x98] sm:$0xff]
      %v307 = vld [vmem:[%s278 + $0xa0] sm:$0xff]
      %v308 = vld [vmem:[%s278 + $0xa8] sm:$0xff]
      %v309 = vld [vmem:[%s278 + $0xb0] sm:$0xff]
      %v310 = vld [vmem:[%s278 + $0xb8] sm:$0xff]
      %v311 = vld [vmem:[%s278 + $0xc0] sm:$0xff]
      %v312 = vld [vmem:[%s278 + $0xc8] sm:$0xff]
      %v313 = vld [vmem:[%s278 + $0xd0] sm:$0xff]
      %v314 = vld [vmem:[%s278 + $0xd8] sm:$0xff]
      %v315 = vld [vmem:[%s278 + $0xe0] sm:$0xff]
      %v316 = vld [vmem:[%s278 + $0xe8] sm:$0xff]
      %v317 = vld [vmem:[%s278 + $0xf0] sm:$0xff]
      %v318 = vld [vmem:[%s278 + $0xf8] sm:$0xff]
      %v319 = vld [vmem:[%s278 + $0x100] sm:$0xff]
      %v320 = vld [vmem:[%s278 + $0x108] sm:$0xff]
      %v321 = vld [vmem:[%s278 + $0x110] sm:$0xff]
      %v322 = vld [vmem:[%s278 + $0x118] sm:$0xff]
      %v323 = vld [vmem:[%s278 + $0x120] sm:$0xff]
      %v324 = vld [vmem:[%s278 + $0x128] sm:$0xff]
      %v325 = vld [vmem:[%s278 + $0x130] sm:$0xff]
      %v326 = vld [vmem:[%s278 + $0x138] sm:$0xff]
      %v327 = vld [vmem:[%s278 + $0x140] sm:$0xff]
      %v328 = vld [vmem:[%s278 + $0x148] sm:$0xff]
      %v329 = vld [vmem:[%s278 + $0x150] sm:$0xff]
      %v330 = vld [vmem:[%s278 + $0x158] sm:$0xff]
      %v331 = vld [vmem:[%s278 + $0x160] sm:$0xff]
      %v332 = vld [vmem:[%s278 + $0x168] sm:$0xff]
      %v333 = vld [vmem:[%s278 + $0x170] sm:$0xff]
      %v334 = vld [vmem:[%s278 + $0x178] sm:$0xff]
      %v335 = vld [vmem:[%s278 + $0x180] sm:$0xff]
      %v336 = vld [vmem:[%s278 + $0x188] sm:$0xff]
      %v337 = vld [vmem:[%s278 + $0x190] sm:$0xff]
      %v338 = vld [vmem:[%s278 + $0x198] sm:$0xff]
      %v339 = vld [vmem:[%s278 + $0x1a0] sm:$0xff]
      %v340 = vld [vmem:[%s278 + $0x1a8] sm:$0xff]
      %v341 = vld [vmem:[%s278 + $0x1b0] sm:$0xff]
      %v342 = vld [vmem:[%s278 + $0x1b8] sm:$0xff]
      %v343 = vld [vmem:[%s278 + $0x1c0] sm:$0xff]
      %v344 = vld [vmem:[%s278 + $0x1c8] sm:$0xff]
      %v345 = vld [vmem:[%s278 + $0x1d0] sm:$0xff]
      %v346 = vld [vmem:[%s278 + $0x1d8] sm:$0xff]
      %v347 = vld [vmem:[%s278 + $0x1e0] sm:$0xff]
      %v348 = vld [vmem:[%s278 + $0x1e8] sm:$0xff]
      %v349 = vld [vmem:[%s278 + $0x1f0] sm:$0xff]
      %v350 = vld [vmem:[%s278 + $0x1f8] sm:$0xff]
      %v351 = vld [vmem:[%s1] sm:$0xff]
      %v352 = vld [vmem:[%s1 + $0x8] sm:$0xff]
      %v353 = vld [vmem:[%s1 + $0x10] sm:$0xff]
      %v354 = vld [vmem:[%s1 + $0x18] sm:$0xf]
      %v355 = vld [vmem:[%s1 + $0x1c] sm:$0xff]
      %v356 = vld [vmem:[%s1 + $0x24] sm:$0xff]
      %v357 = vld [vmem:[%s1 + $0x2c] sm:$0xff]
      %v358 = vld [vmem:[%s1 + $0x34] sm:$0xf]
      %v359 = vld [vmem:[%s1 + $0x38] sm:$0xff]
      %v360 = vld [vmem:[%s1 + $0x40] sm:$0xff]
      %v361 = vld [vmem:[%s1 + $0x48] sm:$0xff]
      %v362 = vld [vmem:[%s1 + $0x50] sm:$0xf]
      %v363 = vld [vmem:[%s1 + $0x54] sm:$0xff]
      %v364 = vld [vmem:[%s1 + $0x5c] sm:$0xff]
      %v365 = vld [vmem:[%s1 + $0x64] sm:$0xff]
      %v366 = vld [vmem:[%s1 + $0x6c] sm:$0xf]
      %v367 = vld [vmem:[%s1 + $0x70] sm:$0xff]
      %v368 = vld [vmem:[%s1 + $0x78] sm:$0xff]
      %v369 = vld [vmem:[%s1 + $0x80] sm:$0xff]
      %v370 = vld [vmem:[%s1 + $0x88] sm:$0xf]
      %v371 = vld [vmem:[%s1 + $0x8c] sm:$0xff]
      %v372 = vld [vmem:[%s1 + $0x94] sm:$0xff]
      %v373 = vld [vmem:[%s1 + $0x9c] sm:$0xff]
      %v374 = vld [vmem:[%s1 + $0xa4] sm:$0xf]
      %v375 = vld [vmem:[%s1 + $0xa8] sm:$0xff]
      %v376 = vld [vmem:[%s1 + $0xb0] sm:$0xff]
      %v377 = vld [vmem:[%s1 + $0xb8] sm:$0xff]
      %v378 = vld [vmem:[%s1 + $0xc0] sm:$0xf]
      %v379 = vld [vmem:[%s1 + $0xc4] sm:$0xff]
      %v380 = vld [vmem:[%s1 + $0xcc] sm:$0xff]
      %v381 = vld [vmem:[%s1 + $0xd4] sm:$0xff]
      %v382 = vld [vmem:[%s1 + $0xdc] sm:$0xf]
      %v383 = vld [vmem:[%s1 + $0xe0] sm:$0xff]
      %v384 = vld [vmem:[%s1 + $0xe8] sm:$0xff]
      %v385 = vld [vmem:[%s1 + $0xf0] sm:$0xff]
      %v386 = vld [vmem:[%s1 + $0xf8] sm:$0xf]
      %v387 = vld [vmem:[%s1 + $0xfc] sm:$0xff]
      %v388 = vld [vmem:[%s1 + $0x104] sm:$0xff]
      %v389 = vld [vmem:[%s1 + $0x10c] sm:$0xff]
      %v390 = vld [vmem:[%s1 + $0x114] sm:$0xf]
      %v391 = vld [vmem:[%s1 + $0x118] sm:$0xff]
      %v392 = vld [vmem:[%s1 + $0x120] sm:$0xff]
      %v393 = vld [vmem:[%s1 + $0x128] sm:$0xff]
      %v394 = vld [vmem:[%s1 + $0x130] sm:$0xf]
      %v395 = vld [vmem:[%s1 + $0x134] sm:$0xff]
      %v396 = vld [vmem:[%s1 + $0x13c] sm:$0xff]
      %v397 = vld [vmem:[%s1 + $0x144] sm:$0xff]
      %v398 = vld [vmem:[%s1 + $0x14c] sm:$0xf]
      %v399 = vld [vmem:[%s1 + $0x150] sm:$0xff]
      %v400 = vld [vmem:[%s1 + $0x158] sm:$0xff]
      %v401 = vld [vmem:[%s1 + $0x160] sm:$0xff]
      %v402 = vld [vmem:[%s1 + $0x168] sm:$0xf]
      %v403 = vld [vmem:[%s1 + $0x16c] sm:$0xff]
      %v404 = vld [vmem:[%s1 + $0x174] sm:$0xff]
      %v405 = vld [vmem:[%s1 + $0x17c] sm:$0xff]
      %v406 = vld [vmem:[%s1 + $0x184] sm:$0xf]
      %v407 = vld [vmem:[%s1 + $0x188] sm:$0xff]
      %v408 = vld [vmem:[%s1 + $0x190] sm:$0xff]
      %v409 = vld [vmem:[%s1 + $0x198] sm:$0xff]
      %v410 = vld [vmem:[%s1 + $0x1a0] sm:$0xf]
      %v411 = vld [vmem:[%s1 + $0x1a4] sm:$0xff]
      %v412 = vld [vmem:[%s1 + $0x1ac] sm:$0xff]
      %v413 = vld [vmem:[%s1 + $0x1b4] sm:$0xff]
      %v414 = vld [vmem:[%s1 + $0x1bc] sm:$0xf]
      %v415 = vld [vmem:[%s1 + $0x1c0] sm:$0xff]
      %v416 = vld [vmem:[%s1 + $0x1c8] sm:$0xff]
      %v417 = vld [vmem:[%s1 + $0x1d0] sm:$0xff]
      %v418 = vld [vmem:[%s1 + $0x1d8] sm:$0xf]
      %v419 = vld [vmem:[%s1 + $0x1dc] sm:$0xff]
      %v420 = vld [vmem:[%s1 + $0x1e4] sm:$0xff]
      %v421 = vld [vmem:[%s1 + $0x1ec] sm:$0xff]
      %v422 = vld [vmem:[%s1 + $0x1f4] sm:$0xf]
      %v423 = vld [vmem:[%s1 + $0x1f8] sm:$0xff]
      %v424 = vld [vmem:[%s1 + $0x200] sm:$0xff]
      %v425 = vld [vmem:[%s1 + $0x208] sm:$0xff]
      %v426 = vld [vmem:[%s1 + $0x210] sm:$0xf]
      %v427 = vld [vmem:[%s1 + $0x214] sm:$0xff]
      %v428 = vld [vmem:[%s1 + $0x21c] sm:$0xff]
      %v429 = vld [vmem:[%s1 + $0x224] sm:$0xff]
      %v430 = vld [vmem:[%s1 + $0x22c] sm:$0xf]
      %v431 = vld [vmem:[%s1 + $0x230] sm:$0xff]
      %v432 = vld [vmem:[%s1 + $0x238] sm:$0xff]
      %v433 = vld [vmem:[%s1 + $0x240] sm:$0xff]
      %v434 = vld [vmem:[%s1 + $0x248] sm:$0xf]
      %v435 = vld [vmem:[%s1 + $0x24c] sm:$0xff]
      %v436 = vld [vmem:[%s1 + $0x254] sm:$0xff]
      %v437 = vld [vmem:[%s1 + $0x25c] sm:$0xff]
      %v438 = vld [vmem:[%s1 + $0x264] sm:$0xf]
      %v439 = vld [vmem:[%s1 + $0x268] sm:$0xff]
      %v440 = vld [vmem:[%s1 + $0x270] sm:$0xff]
      %v441 = vld [vmem:[%s1 + $0x278] sm:$0xff]
      %v442 = vld [vmem:[%s1 + $0x280] sm:$0xf]
      %v443 = vld [vmem:[%s1 + $0x284] sm:$0xff]
      %v444 = vld [vmem:[%s1 + $0x28c] sm:$0xff]
      %v445 = vld [vmem:[%s1 + $0x294] sm:$0xff]
      %v446 = vld [vmem:[%s1 + $0x29c] sm:$0xf]
      %v447 = vld [vmem:[%s1 + $0x2a0] sm:$0xff]
      %v448 = vld [vmem:[%s1 + $0x2a8] sm:$0xff]
      %v449 = vld [vmem:[%s1 + $0x2b0] sm:$0xff]
      %v450 = vld [vmem:[%s1 + $0x2b8] sm:$0xf]
      %v451 = vld [vmem:[%s1 + $0x2bc] sm:$0xff]
      %v452 = vld [vmem:[%s1 + $0x2c4] sm:$0xff]
      %v453 = vld [vmem:[%s1 + $0x2cc] sm:$0xff]
      %v454 = vld [vmem:[%s1 + $0x2d4] sm:$0xf]
      %v455 = vld [vmem:[%s1 + $0x2d8] sm:$0xff]
      %v456 = vld [vmem:[%s1 + $0x2e0] sm:$0xff]
      %v457 = vld [vmem:[%s1 + $0x2e8] sm:$0xff]
      %v458 = vld [vmem:[%s1 + $0x2f0] sm:$0xf]
      %v459 = vld [vmem:[%s1 + $0x2f4] sm:$0xff]
      %v460 = vld [vmem:[%s1 + $0x2fc] sm:$0xff]
      %v461 = vld [vmem:[%s1 + $0x304] sm:$0xff]
      %v462 = vld [vmem:[%s1 + $0x30c] sm:$0xf]
      %v463 = vld [vmem:[%s1 + $0x310] sm:$0xff]
      %v464 = vld [vmem:[%s1 + $0x318] sm:$0xff]
      %v465 = vld [vmem:[%s1 + $0x320] sm:$0xff]
      %v466 = vld [vmem:[%s1 + $0x328] sm:$0xf]
      %v467 = vld [vmem:[%s1 + $0x32c] sm:$0xff]
      %v468 = vld [vmem:[%s1 + $0x334] sm:$0xff]
      %v469 = vld [vmem:[%s1 + $0x33c] sm:$0xff]
      %v470 = vld [vmem:[%s1 + $0x344] sm:$0xf]
      %v471 = vld [vmem:[%s1 + $0x348] sm:$0xff]
      %v472 = vld [vmem:[%s1 + $0x350] sm:$0xff]
      %v473 = vld [vmem:[%s1 + $0x358] sm:$0xff]
      %v474 = vld [vmem:[%s1 + $0x360] sm:$0xf]
      %v475 = vld [vmem:[%s1 + $0x364] sm:$0xff]
      %v476 = vld [vmem:[%s1 + $0x36c] sm:$0xff]
      %v477 = vld [vmem:[%s1 + $0x374] sm:$0xff]
      %v478 = vld [vmem:[%s1 + $0x37c] sm:$0xf]
      %v479 = vld [vmem:[%s1 + $0x380] sm:$0xff]
      %v480 = vld [vmem:[%s1 + $0x388] sm:$0xff]
      %v481 = vld [vmem:[%s1 + $0x390] sm:$0xff]
      %v482 = vld [vmem:[%s1 + $0x398] sm:$0xf]
      %v483 = vld [vmem:[%s1 + $0x39c] sm:$0xff]
      %v484 = vld [vmem:[%s1 + $0x3a4] sm:$0xff]
      %v485 = vld [vmem:[%s1 + $0x3ac] sm:$0xff]
      %v486 = vld [vmem:[%s1 + $0x3b4] sm:$0xf]
      %v487 = vld [vmem:[%s1 + $0x3b8] sm:$0xff]
      %v488 = vld [vmem:[%s1 + $0x3c0] sm:$0xff]
      %v489 = vld [vmem:[%s1 + $0x3c8] sm:$0xff]
      %v490 = vld [vmem:[%s1 + $0x3d0] sm:$0xf]
      %v491 = vld [vmem:[%s1 + $0x3d4] sm:$0xff]
      %v492 = vld [vmem:[%s1 + $0x3dc] sm:$0xff]
      %v493 = vld [vmem:[%s1 + $0x3e4] sm:$0xff]
      %v494 = vld [vmem:[%s1 + $0x3ec] sm:$0xf]
      %v495 = vld [vmem:[%s1 + $0x3f0] sm:$0xff]
      %v496 = vld [vmem:[%s1 + $0x3f8] sm:$0xff]
      %v497 = vld [vmem:[%s1 + $0x400] sm:$0xff]
      %v498 = vld [vmem:[%s1 + $0x408] sm:$0xf]
      %v499 = vld [vmem:[%s1 + $0x40c] sm:$0xff]
      %v500 = vld [vmem:[%s1 + $0x414] sm:$0xff]
      %v501 = vld [vmem:[%s1 + $0x41c] sm:$0xff]
      %v502 = vld [vmem:[%s1 + $0x424] sm:$0xf]
      %v503 = vld [vmem:[%s1 + $0x428] sm:$0xff]
      %v504 = vld [vmem:[%s1 + $0x430] sm:$0xff]
      %v505 = vld [vmem:[%s1 + $0x438] sm:$0xff]
      %v506 = vld [vmem:[%s1 + $0x440] sm:$0xf]
      %v507 = vld [vmem:[%s1 + $0x444] sm:$0xff]
      %v508 = vld [vmem:[%s1 + $0x44c] sm:$0xff]
      %v509 = vld [vmem:[%s1 + $0x454] sm:$0xff]
      %v510 = vld [vmem:[%s1 + $0x45c] sm:$0xf]
      %v511 = vld [vmem:[%s1 + $0x460] sm:$0xff]
      %v512 = vld [vmem:[%s1 + $0x468] sm:$0xff]
      %v513 = vld [vmem:[%s1 + $0x470] sm:$0xff]
      %v514 = vld [vmem:[%s1 + $0x478] sm:$0xf]
      %v515 = vld [vmem:[%s1 + $0x47c] sm:$0xff]
      %v516 = vld [vmem:[%s1 + $0x484] sm:$0xff]
      %v517 = vld [vmem:[%s1 + $0x48c] sm:$0xff]
      %v518 = vld [vmem:[%s1 + $0x494] sm:$0xf]
      %v519 = vld [vmem:[%s1 + $0x498] sm:$0xff]
      %v520 = vld [vmem:[%s1 + $0x4a0] sm:$0xff]
      %v521 = vld [vmem:[%s1 + $0x4a8] sm:$0xff]
      %v522 = vld [vmem:[%s1 + $0x4b0] sm:$0xf]
      %v523 = vld [vmem:[%s1 + $0x4b4] sm:$0xff]
      %v524 = vld [vmem:[%s1 + $0x4bc] sm:$0xff]
      %v525 = vld [vmem:[%s1 + $0x4c4] sm:$0xff]
      %v526 = vld [vmem:[%s1 + $0x4cc] sm:$0xf]
      %v527 = vld [vmem:[%s1 + $0x4d0] sm:$0xff]
      %v528 = vld [vmem:[%s1 + $0x4d8] sm:$0xff]
      %v529 = vld [vmem:[%s1 + $0x4e0] sm:$0xff]
      %v530 = vld [vmem:[%s1 + $0x4e8] sm:$0xf]
      %v531 = vld [vmem:[%s1 + $0x4ec] sm:$0xff]
      %v532 = vld [vmem:[%s1 + $0x4f4] sm:$0xff]
      %v533 = vld [vmem:[%s1 + $0x4fc] sm:$0xff]
      %v534 = vld [vmem:[%s1 + $0x504] sm:$0xf]
      %v535 = vld [vmem:[%s1 + $0x508] sm:$0xff]
      %v536 = vld [vmem:[%s1 + $0x510] sm:$0xff]
      %v537 = vld [vmem:[%s1 + $0x518] sm:$0xff]
      %v538 = vld [vmem:[%s1 + $0x520] sm:$0xf]
      %v539 = vld [vmem:[%s1 + $0x524] sm:$0xff]
      %v540 = vld [vmem:[%s1 + $0x52c] sm:$0xff]
      %v541 = vld [vmem:[%s1 + $0x534] sm:$0xff]
      %v542 = vld [vmem:[%s1 + $0x53c] sm:$0xf]
      %v543 = vld [vmem:[%s1 + $0x540] sm:$0xff]
      %v544 = vld [vmem:[%s1 + $0x548] sm:$0xff]
      %v545 = vld [vmem:[%s1 + $0x550] sm:$0xff]
      %v546 = vld [vmem:[%s1 + $0x558] sm:$0xf]
      %v547 = vld [vmem:[%s1 + $0x55c] sm:$0xff]
      %v548 = vld [vmem:[%s1 + $0x564] sm:$0xff]
      %v549 = vld [vmem:[%s1 + $0x56c] sm:$0xff]
      %v550 = vld [vmem:[%s1 + $0x574] sm:$0xf]
      %v551 = vld [vmem:[%s1 + $0x578] sm:$0xff]
      %v552 = vld [vmem:[%s1 + $0x580] sm:$0xff]
      %v553 = vld [vmem:[%s1 + $0x588] sm:$0xff]
      %v554 = vld [vmem:[%s1 + $0x590] sm:$0xf]
      %v555 = vld [vmem:[%s1 + $0x594] sm:$0xff]
      %v556 = vld [vmem:[%s1 + $0x59c] sm:$0xff]
      %v557 = vld [vmem:[%s1 + $0x5a4] sm:$0xff]
      %v558 = vld [vmem:[%s1 + $0x5ac] sm:$0xf]
      %v559 = vld [vmem:[%s1 + $0x5b0] sm:$0xff]
      %v560 = vld [vmem:[%s1 + $0x5b8] sm:$0xff]
      %v561 = vld [vmem:[%s1 + $0x5c0] sm:$0xff]
      %v562 = vld [vmem:[%s1 + $0x5c8] sm:$0xf]
      %v563 = vld [vmem:[%s1 + $0x5cc] sm:$0xff]
      %v564 = vld [vmem:[%s1 + $0x5d4] sm:$0xff]
      %v565 = vld [vmem:[%s1 + $0x5dc] sm:$0xff]
      %v566 = vld [vmem:[%s1 + $0x5e4] sm:$0xf]
      %v567 = vld [vmem:[%s1 + $0x5e8] sm:$0xff]
      %v568 = vld [vmem:[%s1 + $0x5f0] sm:$0xff]
      %v569 = vld [vmem:[%s1 + $0x5f8] sm:$0xff]
      %v570 = vld [vmem:[%s1 + $0x600] sm:$0xf]
      %v571 = vld [vmem:[%s1 + $0x604] sm:$0xff]
      %v572 = vld [vmem:[%s1 + $0x60c] sm:$0xff]
      %v573 = vld [vmem:[%s1 + $0x614] sm:$0xff]
      %v574 = vld [vmem:[%s1 + $0x61c] sm:$0xf]
      %v575 = vld [vmem:[%s1 + $0x620] sm:$0xff]
      %v576 = vld [vmem:[%s1 + $0x628] sm:$0xff]
      %v577 = vld [vmem:[%s1 + $0x630] sm:$0xff]
      %v578 = vld [vmem:[%s1 + $0x638] sm:$0xf]
      %v579 = vld [vmem:[%s1 + $0x63c] sm:$0xff]
      %v580 = vld [vmem:[%s1 + $0x644] sm:$0xff]
      %v581 = vld [vmem:[%s1 + $0x64c] sm:$0xff]
      %v582 = vld [vmem:[%s1 + $0x654] sm:$0xf]
      %v583 = vld [vmem:[%s1 + $0x658] sm:$0xff]
      %v584 = vld [vmem:[%s1 + $0x660] sm:$0xff]
      %v585 = vld [vmem:[%s1 + $0x668] sm:$0xff]
      %v586 = vld [vmem:[%s1 + $0x670] sm:$0xf]
      %v587 = vld [vmem:[%s1 + $0x674] sm:$0xff]
      %v588 = vld [vmem:[%s1 + $0x67c] sm:$0xff]
      %v589 = vld [vmem:[%s1 + $0x684] sm:$0xff]
      %v590 = vld [vmem:[%s1 + $0x68c] sm:$0xf]
      %v591 = vld [vmem:[%s1 + $0x690] sm:$0xff]
      %v592 = vld [vmem:[%s1 + $0x698] sm:$0xff]
      %v593 = vld [vmem:[%s1 + $0x6a0] sm:$0xff]
      %v594 = vld [vmem:[%s1 + $0x6a8] sm:$0xf]
      %v595 = vld [vmem:[%s1 + $0x6ac] sm:$0xff]
      %v596 = vld [vmem:[%s1 + $0x6b4] sm:$0xff]
      %v597 = vld [vmem:[%s1 + $0x6bc] sm:$0xff]
      %v598 = vld [vmem:[%s1 + $0x6c4] sm:$0xf]
      %v599 = vld [vmem:[%s1 + $0x6c8] sm:$0xff]
      %v600 = vld [vmem:[%s1 + $0x6d0] sm:$0xff]
      %v601 = vld [vmem:[%s1 + $0x6d8] sm:$0xff]
      %v602 = vld [vmem:[%s1 + $0x6e0] sm:$0xf]
      %v603 = vld [vmem:[%s1 + $0x6e4] sm:$0xff]
      %v604 = vld [vmem:[%s1 + $0x6ec] sm:$0xff]
      %v605 = vld [vmem:[%s1 + $0x6f4] sm:$0xff]
      %v606 = vld [vmem:[%s1 + $0x6fc] sm:$0xf]
      %v607 = vld [vmem:[%s2] sm:$0xff]
      %v609 = vlaneseq
      %v610 = vshrl.u32 %v609, 7
      %v611 = vsub.s32 0, %v610
      %v612 = vrot.slane %v607, %v611
      %v613 = vlaneseq
      %v614 = vshrl.u32 %v613, 7
      %v615 = vsub.s32 1, %v614
      %v616 = vrot.slane %v607, %v615
      %v617 = vlaneseq
      %v618 = vshrl.u32 %v617, 7
      %v619 = vsub.s32 2, %v618
      %v620 = vrot.slane %v607, %v619
      %v621 = vlaneseq
      %v622 = vshrl.u32 %v621, 7
      %v623 = vsub.s32 3, %v622
      %v624 = vrot.slane %v607, %v623
      %v625 = vlaneseq
      %v626 = vshrl.u32 %v625, 7
      %v627 = vsub.s32 4, %v626
      %v628 = vrot.slane %v607, %v627
      %v629 = vlaneseq
      %v630 = vshrl.u32 %v629, 7
      %v631 = vsub.s32 5, %v630
      %v632 = vrot.slane %v607, %v631
      %v633 = vlaneseq
      %v634 = vshrl.u32 %v633, 7
      %v635 = vsub.s32 6, %v634
      %v636 = vrot.slane %v607, %v635
      %v708 = vunpack.c.l.b16 %v287
      %v709 = vunpack.c.h.b16 %v287
      %v710 = vunpack.c.l.b16 %v288
      %v711 = vunpack.c.h.b16 %v288
      %v712 = vunpack.c.l.b16 %v289
      %v713 = vunpack.c.h.b16 %v289
      %v714 = vunpack.c.l.b16 %v290
      %v715 = vunpack.c.h.b16 %v290
      %v716 = vunpack.c.l.b16 %v291
      %v717 = vunpack.c.h.b16 %v291
      %v718 = vunpack.c.l.b16 %v292
      %v719 = vunpack.c.h.b16 %v292
      %v720 = vunpack.c.l.b16 %v293
      %v721 = vunpack.c.h.b16 %v293
      %v722 = vunpack.c.l.b16 %v294
      %v723 = vunpack.c.h.b16 %v294
      %v724 = vunpack.c.l.b16 %v295
      %v725 = vunpack.c.h.b16 %v295
      %v726 = vunpack.c.l.b16 %v296
      %v727 = vunpack.c.h.b16 %v296
      %v728 = vunpack.c.l.b16 %v297
      %v729 = vunpack.c.h.b16 %v297
      %v730 = vunpack.c.l.b16 %v298
      %v731 = vunpack.c.h.b16 %v298
      %v732 = vunpack.c.l.b16 %v299
      %v733 = vunpack.c.h.b16 %v299
      %v734 = vunpack.c.l.b16 %v300
      %v735 = vunpack.c.h.b16 %v300
      %v736 = vunpack.c.l.b16 %v301
      %v737 = vunpack.c.h.b16 %v301
      %v738 = vunpack.c.l.b16 %v302
      %v739 = vunpack.c.h.b16 %v302
      %v740 = vunpack.c.l.b16 %v303
      %v741 = vunpack.c.h.b16 %v303
      %v742 = vunpack.c.l.b16 %v304
      %v743 = vunpack.c.h.b16 %v304
      %v744 = vunpack.c.l.b16 %v305
      %v745 = vunpack.c.h.b16 %v305
      %v746 = vunpack.c.l.b16 %v306
      %v747 = vunpack.c.h.b16 %v306
      %v748 = vunpack.c.l.b16 %v307
      %v749 = vunpack.c.h.b16 %v307
      %v750 = vunpack.c.l.b16 %v308
      %v751 = vunpack.c.h.b16 %v308
      %v752 = vunpack.c.l.b16 %v309
      %v753 = vunpack.c.h.b16 %v309
      %v754 = vunpack.c.l.b16 %v310
      %v755 = vunpack.c.h.b16 %v310
      %v756 = vunpack.c.l.b16 %v311
      %v757 = vunpack.c.h.b16 %v311
      %v758 = vunpack.c.l.b16 %v312
      %v759 = vunpack.c.h.b16 %v312
      %v760 = vunpack.c.l.b16 %v313
      %v761 = vunpack.c.h.b16 %v313
      %v762 = vunpack.c.l.b16 %v314
      %v763 = vunpack.c.h.b16 %v314
      %v764 = vunpack.c.l.b16 %v315
      %v765 = vunpack.c.h.b16 %v315
      %v766 = vunpack.c.l.b16 %v316
      %v767 = vunpack.c.h.b16 %v316
      %v768 = vunpack.c.l.b16 %v317
      %v769 = vunpack.c.h.b16 %v317
      %v770 = vunpack.c.l.b16 %v318
      %v771 = vunpack.c.h.b16 %v318
      %v772 = vunpack.c.l.b16 %v319
      %v773 = vunpack.c.h.b16 %v319
      %v774 = vunpack.c.l.b16 %v320
      %v775 = vunpack.c.h.b16 %v320
      %v776 = vunpack.c.l.b16 %v321
      %v777 = vunpack.c.h.b16 %v321
      %v778 = vunpack.c.l.b16 %v322
      %v779 = vunpack.c.h.b16 %v322
      %v780 = vunpack.c.l.b16 %v323
      %v781 = vunpack.c.h.b16 %v323
      %v782 = vunpack.c.l.b16 %v324
      %v783 = vunpack.c.h.b16 %v324
      %v784 = vunpack.c.l.b16 %v325
      %v785 = vunpack.c.h.b16 %v325
      %v786 = vunpack.c.l.b16 %v326
      %v787 = vunpack.c.h.b16 %v326
      %v788 = vunpack.c.l.b16 %v327
      %v789 = vunpack.c.h.b16 %v327
      %v790 = vunpack.c.l.b16 %v328
      %v791 = vunpack.c.h.b16 %v328
      %v792 = vunpack.c.l.b16 %v329
      %v793 = vunpack.c.h.b16 %v329
      %v794 = vunpack.c.l.b16 %v330
      %v795 = vunpack.c.h.b16 %v330
      %v796 = vunpack.c.l.b16 %v331
      %v797 = vunpack.c.h.b16 %v331
      %v798 = vunpack.c.l.b16 %v332
      %v799 = vunpack.c.h.b16 %v332
      %v800 = vunpack.c.l.b16 %v333
      %v801 = vunpack.c.h.b16 %v333
      %v802 = vunpack.c.l.b16 %v334
      %v803 = vunpack.c.h.b16 %v334
      %v804 = vunpack.c.l.b16 %v335
      %v805 = vunpack.c.h.b16 %v335
      %v806 = vunpack.c.l.b16 %v336
      %v807 = vunpack.c.h.b16 %v336
      %v808 = vunpack.c.l.b16 %v337
      %v809 = vunpack.c.h.b16 %v337
      %v810 = vunpack.c.l.b16 %v338
      %v811 = vunpack.c.h.b16 %v338
      %v812 = vunpack.c.l.b16 %v339
      %v813 = vunpack.c.h.b16 %v339
      %v814 = vunpack.c.l.b16 %v340
      %v815 = vunpack.c.h.b16 %v340
      %v816 = vunpack.c.l.b16 %v341
      %v817 = vunpack.c.h.b16 %v341
      %v818 = vunpack.c.l.b16 %v342
      %v819 = vunpack.c.h.b16 %v342
      %v820 = vunpack.c.l.b16 %v343
      %v821 = vunpack.c.h.b16 %v343
      %v822 = vunpack.c.l.b16 %v344
      %v823 = vunpack.c.h.b16 %v344
      %v824 = vunpack.c.l.b16 %v345
      %v825 = vunpack.c.h.b16 %v345
      %v826 = vunpack.c.l.b16 %v346
      %v827 = vunpack.c.h.b16 %v346
      %v828 = vunpack.c.l.b16 %v347
      %v829 = vunpack.c.h.b16 %v347
      %v830 = vunpack.c.l.b16 %v348
      %v831 = vunpack.c.h.b16 %v348
      %v832 = vunpack.c.l.b16 %v349
      %v833 = vunpack.c.h.b16 %v349
      %v834 = vunpack.c.l.b16 %v350
      %v835 = vunpack.c.h.b16 %v350
      %v836 = vpack.c.b16 %v712, %v708
      %v837 = vpack.c.b16 %v713, %v709
      %v838 = vpack.c.b16 %v714, %v710
      %v839 = vpack.c.b16 %v715, %v711
      %v840 = vpack.c.b16 %v720, %v716
      %v841 = vpack.c.b16 %v721, %v717
      %v842 = vpack.c.b16 %v722, %v718
      %v843 = vpack.c.b16 %v723, %v719
      %v844 = vpack.c.b16 %v728, %v724
      %v845 = vpack.c.b16 %v729, %v725
      %v846 = vpack.c.b16 %v730, %v726
      %v847 = vpack.c.b16 %v731, %v727
      %v848 = vpack.c.b16 %v736, %v732
      %v849 = vpack.c.b16 %v737, %v733
      %v850 = vpack.c.b16 %v738, %v734
      %v851 = vpack.c.b16 %v739, %v735
      %v852 = vpack.c.b16 %v744, %v740
      %v853 = vpack.c.b16 %v745, %v741
      %v854 = vpack.c.b16 %v746, %v742
      %v855 = vpack.c.b16 %v747, %v743
      %v856 = vpack.c.b16 %v752, %v748
      %v857 = vpack.c.b16 %v753, %v749
      %v858 = vpack.c.b16 %v754, %v750
      %v859 = vpack.c.b16 %v755, %v751
      %v860 = vpack.c.b16 %v760, %v756
      %v861 = vpack.c.b16 %v761, %v757
      %v862 = vpack.c.b16 %v762, %v758
      %v863 = vpack.c.b16 %v763, %v759
      %v864 = vpack.c.b16 %v768, %v764
      %v865 = vpack.c.b16 %v769, %v765
      %v866 = vpack.c.b16 %v770, %v766
      %v867 = vpack.c.b16 %v771, %v767
      %v868 = vpack.c.b16 %v776, %v772
      %v869 = vpack.c.b16 %v777, %v773
      %v870 = vpack.c.b16 %v778, %v774
      %v871 = vpack.c.b16 %v779, %v775
      %v872 = vpack.c.b16 %v784, %v780
      %v873 = vpack.c.b16 %v785, %v781
      %v874 = vpack.c.b16 %v786, %v782
      %v875 = vpack.c.b16 %v787, %v783
      %v876 = vpack.c.b16 %v792, %v788
      %v877 = vpack.c.b16 %v793, %v789
      %v878 = vpack.c.b16 %v794, %v790
      %v879 = vpack.c.b16 %v795, %v791
      %v880 = vpack.c.b16 %v800, %v796
      %v881 = vpack.c.b16 %v801, %v797
      %v882 = vpack.c.b16 %v802, %v798
      %v883 = vpack.c.b16 %v803, %v799
      %v884 = vpack.c.b16 %v808, %v804
      %v885 = vpack.c.b16 %v809, %v805
      %v886 = vpack.c.b16 %v810, %v806
      %v887 = vpack.c.b16 %v811, %v807
      %v888 = vpack.c.b16 %v816, %v812
      %v889 = vpack.c.b16 %v817, %v813
      %v890 = vpack.c.b16 %v818, %v814
      %v891 = vpack.c.b16 %v819, %v815
      %v892 = vpack.c.b16 %v824, %v820
      %v893 = vpack.c.b16 %v825, %v821
      %v894 = vpack.c.b16 %v826, %v822
      %v895 = vpack.c.b16 %v827, %v823
      %v896 = vpack.c.b16 %v832, %v828
      %v897 = vpack.c.b16 %v833, %v829
      %v898 = vpack.c.b16 %v834, %v830
      %v899 = vpack.c.b16 %v835, %v831
      %v1220 = vunpack.c.l.b16 %v351
      %v1221 = vunpack.c.h.b16 %v351
      %v1222 = vunpack.c.l.b16 %v352
      %v1223 = vunpack.c.h.b16 %v352
      %v1224 = vunpack.c.l.b16 %v353
      %v1225 = vunpack.c.h.b16 %v353
      %v1226 = vunpack.c.l.b16 %v354
      %v1227 = vunpack.c.l.b16 %v355
      %v1228 = vunpack.c.h.b16 %v355
      %v1229 = vunpack.c.l.b16 %v356
      %v1230 = vunpack.c.h.b16 %v356
      %v1231 = vunpack.c.l.b16 %v357
      %v1232 = vunpack.c.h.b16 %v357
      %v1233 = vunpack.c.l.b16 %v358
      %v1234 = vunpack.c.l.b16 %v359
      %v1235 = vunpack.c.h.b16 %v359
      %v1236 = vunpack.c.l.b16 %v360
      %v1237 = vunpack.c.h.b16 %v360
      %v1238 = vunpack.c.l.b16 %v361
      %v1239 = vunpack.c.h.b16 %v361
      %v1240 = vunpack.c.l.b16 %v362
      %v1241 = vunpack.c.l.b16 %v363
      %v1242 = vunpack.c.h.b16 %v363
      %v1243 = vunpack.c.l.b16 %v364
      %v1244 = vunpack.c.h.b16 %v364
      %v1245 = vunpack.c.l.b16 %v365
      %v1246 = vunpack.c.h.b16 %v365
      %v1247 = vunpack.c.l.b16 %v366
      %v1248 = vunpack.c.l.b16 %v367
      %v1249 = vunpack.c.h.b16 %v367
      %v1250 = vunpack.c.l.b16 %v368
      %v1251 = vunpack.c.h.b16 %v368
      %v1252 = vunpack.c.l.b16 %v369
      %v1253 = vunpack.c.h.b16 %v369
      %v1254 = vunpack.c.l.b16 %v370
      %v1255 = vunpack.c.l.b16 %v371
      %v1256 = vunpack.c.h.b16 %v371
      %v1257 = vunpack.c.l.b16 %v372
      %v1258 = vunpack.c.h.b16 %v372
      %v1259 = vunpack.c.l.b16 %v373
      %v1260 = vunpack.c.h.b16 %v373
      %v1261 = vunpack.c.l.b16 %v374
      %v1262 = vunpack.c.l.b16 %v375
      %v1263 = vunpack.c.h.b16 %v375
      %v1264 = vunpack.c.l.b16 %v376
      %v1265 = vunpack.c.h.b16 %v376
      %v1266 = vunpack.c.l.b16 %v377
      %v1267 = vunpack.c.h.b16 %v377
      %v1268 = vunpack.c.l.b16 %v378
      %v1269 = vunpack.c.l.b16 %v379
      %v1270 = vunpack.c.h.b16 %v379
      %v1271 = vunpack.c.l.b16 %v380
      %v1272 = vunpack.c.h.b16 %v380
      %v1273 = vunpack.c.l.b16 %v381
      %v1274 = vunpack.c.h.b16 %v381
      %v1275 = vunpack.c.l.b16 %v382
      %v1276 = vunpack.c.l.b16 %v383
      %v1277 = vunpack.c.h.b16 %v383
      %v1278 = vunpack.c.l.b16 %v384
      %v1279 = vunpack.c.h.b16 %v384
      %v1280 = vunpack.c.l.b16 %v385
      %v1281 = vunpack.c.h.b16 %v385
      %v1282 = vunpack.c.l.b16 %v386
      %v1283 = vunpack.c.l.b16 %v387
      %v1284 = vunpack.c.h.b16 %v387
      %v1285 = vunpack.c.l.b16 %v388
      %v1286 = vunpack.c.h.b16 %v388
      %v1287 = vunpack.c.l.b16 %v389
      %v1288 = vunpack.c.h.b16 %v389
      %v1289 = vunpack.c.l.b16 %v390
      %v1290 = vunpack.c.l.b16 %v391
      %v1291 = vunpack.c.h.b16 %v391
      %v1292 = vunpack.c.l.b16 %v392
      %v1293 = vunpack.c.h.b16 %v392
      %v1294 = vunpack.c.l.b16 %v393
      %v1295 = vunpack.c.h.b16 %v393
      %v1296 = vunpack.c.l.b16 %v394
      %v1297 = vunpack.c.l.b16 %v395
      %v1298 = vunpack.c.h.b16 %v395
      %v1299 = vunpack.c.l.b16 %v396
      %v1300 = vunpack.c.h.b16 %v396
      %v1301 = vunpack.c.l.b16 %v397
      %v1302 = vunpack.c.h.b16 %v397
      %v1303 = vunpack.c.l.b16 %v398
      %v1304 = vunpack.c.l.b16 %v399
      %v1305 = vunpack.c.h.b16 %v399
      %v1306 = vunpack.c.l.b16 %v400
      %v1307 = vunpack.c.h.b16 %v400
      %v1308 = vunpack.c.l.b16 %v401
      %v1309 = vunpack.c.h.b16 %v401
      %v1310 = vunpack.c.l.b16 %v402
      %v1311 = vunpack.c.l.b16 %v403
      %v1312 = vunpack.c.h.b16 %v403
      %v1313 = vunpack.c.l.b16 %v404
      %v1314 = vunpack.c.h.b16 %v404
      %v1315 = vunpack.c.l.b16 %v405
      %v1316 = vunpack.c.h.b16 %v405
      %v1317 = vunpack.c.l.b16 %v406
      %v1318 = vunpack.c.l.b16 %v407
      %v1319 = vunpack.c.h.b16 %v407
      %v1320 = vunpack.c.l.b16 %v408
      %v1321 = vunpack.c.h.b16 %v408
      %v1322 = vunpack.c.l.b16 %v409
      %v1323 = vunpack.c.h.b16 %v409
      %v1324 = vunpack.c.l.b16 %v410
      %v1325 = vunpack.c.l.b16 %v411
      %v1326 = vunpack.c.h.b16 %v411
      %v1327 = vunpack.c.l.b16 %v412
      %v1328 = vunpack.c.h.b16 %v412
      %v1329 = vunpack.c.l.b16 %v413
      %v1330 = vunpack.c.h.b16 %v413
      %v1331 = vunpack.c.l.b16 %v414
      %v1332 = vunpack.c.l.b16 %v415
      %v1333 = vunpack.c.h.b16 %v415
      %v1334 = vunpack.c.l.b16 %v416
      %v1335 = vunpack.c.h.b16 %v416
      %v1336 = vunpack.c.l.b16 %v417
      %v1337 = vunpack.c.h.b16 %v417
      %v1338 = vunpack.c.l.b16 %v418
      %v1339 = vunpack.c.l.b16 %v419
      %v1340 = vunpack.c.h.b16 %v419
      %v1341 = vunpack.c.l.b16 %v420
      %v1342 = vunpack.c.h.b16 %v420
      %v1343 = vunpack.c.l.b16 %v421
      %v1344 = vunpack.c.h.b16 %v421
      %v1345 = vunpack.c.l.b16 %v422
      %v1346 = vunpack.c.l.b16 %v423
      %v1347 = vunpack.c.h.b16 %v423
      %v1348 = vunpack.c.l.b16 %v424
      %v1349 = vunpack.c.h.b16 %v424
      %v1350 = vunpack.c.l.b16 %v425
      %v1351 = vunpack.c.h.b16 %v425
      %v1352 = vunpack.c.l.b16 %v426
      %v1353 = vunpack.c.l.b16 %v427
      %v1354 = vunpack.c.h.b16 %v427
      %v1355 = vunpack.c.l.b16 %v428
      %v1356 = vunpack.c.h.b16 %v428
      %v1357 = vunpack.c.l.b16 %v429
      %v1358 = vunpack.c.h.b16 %v429
      %v1359 = vunpack.c.l.b16 %v430
      %v1360 = vunpack.c.l.b16 %v431
      %v1361 = vunpack.c.h.b16 %v431
      %v1362 = vunpack.c.l.b16 %v432
      %v1363 = vunpack.c.h.b16 %v432
      %v1364 = vunpack.c.l.b16 %v433
      %v1365 = vunpack.c.h.b16 %v433
      %v1366 = vunpack.c.l.b16 %v434
      %v1367 = vunpack.c.l.b16 %v435
      %v1368 = vunpack.c.h.b16 %v435
      %v1369 = vunpack.c.l.b16 %v436
      %v1370 = vunpack.c.h.b16 %v436
      %v1371 = vunpack.c.l.b16 %v437
      %v1372 = vunpack.c.h.b16 %v437
      %v1373 = vunpack.c.l.b16 %v438
      %v1374 = vunpack.c.l.b16 %v439
      %v1375 = vunpack.c.h.b16 %v439
      %v1376 = vunpack.c.l.b16 %v440
      %v1377 = vunpack.c.h.b16 %v440
      %v1378 = vunpack.c.l.b16 %v441
      %v1379 = vunpack.c.h.b16 %v441
      %v1380 = vunpack.c.l.b16 %v442
      %v1381 = vunpack.c.l.b16 %v443
      %v1382 = vunpack.c.h.b16 %v443
      %v1383 = vunpack.c.l.b16 %v444
      %v1384 = vunpack.c.h.b16 %v444
      %v1385 = vunpack.c.l.b16 %v445
      %v1386 = vunpack.c.h.b16 %v445
      %v1387 = vunpack.c.l.b16 %v446
      %v1388 = vunpack.c.l.b16 %v447
      %v1389 = vunpack.c.h.b16 %v447
      %v1390 = vunpack.c.l.b16 %v448
      %v1391 = vunpack.c.h.b16 %v448
      %v1392 = vunpack.c.l.b16 %v449
      %v1393 = vunpack.c.h.b16 %v449
      %v1394 = vunpack.c.l.b16 %v450
      %v1395 = vunpack.c.l.b16 %v451
      %v1396 = vunpack.c.h.b16 %v451
      %v1397 = vunpack.c.l.b16 %v452
      %v1398 = vunpack.c.h.b16 %v452
      %v1399 = vunpack.c.l.b16 %v453
      %v1400 = vunpack.c.h.b16 %v453
      %v1401 = vunpack.c.l.b16 %v454
      %v1402 = vunpack.c.l.b16 %v455
      %v1403 = vunpack.c.h.b16 %v455
      %v1404 = vunpack.c.l.b16 %v456
      %v1405 = vunpack.c.h.b16 %v456
      %v1406 = vunpack.c.l.b16 %v457
      %v1407 = vunpack.c.h.b16 %v457
      %v1408 = vunpack.c.l.b16 %v458
      %v1409 = vunpack.c.l.b16 %v459
      %v1410 = vunpack.c.h.b16 %v459
      %v1411 = vunpack.c.l.b16 %v460
      %v1412 = vunpack.c.h.b16 %v460
      %v1413 = vunpack.c.l.b16 %v461
      %v1414 = vunpack.c.h.b16 %v461
      %v1415 = vunpack.c.l.b16 %v462
      %v1416 = vunpack.c.l.b16 %v463
      %v1417 = vunpack.c.h.b16 %v463
      %v1418 = vunpack.c.l.b16 %v464
      %v1419 = vunpack.c.h.b16 %v464
      %v1420 = vunpack.c.l.b16 %v465
      %v1421 = vunpack.c.h.b16 %v465
      %v1422 = vunpack.c.l.b16 %v466
      %v1423 = vunpack.c.l.b16 %v467
      %v1424 = vunpack.c.h.b16 %v467
      %v1425 = vunpack.c.l.b16 %v468
      %v1426 = vunpack.c.h.b16 %v468
      %v1427 = vunpack.c.l.b16 %v469
      %v1428 = vunpack.c.h.b16 %v469
      %v1429 = vunpack.c.l.b16 %v470
      %v1430 = vunpack.c.l.b16 %v471
      %v1431 = vunpack.c.h.b16 %v471
      %v1432 = vunpack.c.l.b16 %v472
      %v1433 = vunpack.c.h.b16 %v472
      %v1434 = vunpack.c.l.b16 %v473
      %v1435 = vunpack.c.h.b16 %v473
      %v1436 = vunpack.c.l.b16 %v474
      %v1437 = vunpack.c.l.b16 %v475
      %v1438 = vunpack.c.h.b16 %v475
      %v1439 = vunpack.c.l.b16 %v476
      %v1440 = vunpack.c.h.b16 %v476
      %v1441 = vunpack.c.l.b16 %v477
      %v1442 = vunpack.c.h.b16 %v477
      %v1443 = vunpack.c.l.b16 %v478
      %v1444 = vunpack.c.l.b16 %v479
      %v1445 = vunpack.c.h.b16 %v479
      %v1446 = vunpack.c.l.b16 %v480
      %v1447 = vunpack.c.h.b16 %v480
      %v1448 = vunpack.c.l.b16 %v481
      %v1449 = vunpack.c.h.b16 %v481
      %v1450 = vunpack.c.l.b16 %v482
      %v1451 = vunpack.c.l.b16 %v483
      %v1452 = vunpack.c.h.b16 %v483
      %v1453 = vunpack.c.l.b16 %v484
      %v1454 = vunpack.c.h.b16 %v484
      %v1455 = vunpack.c.l.b16 %v485
      %v1456 = vunpack.c.h.b16 %v485
      %v1457 = vunpack.c.l.b16 %v486
      %v1458 = vunpack.c.l.b16 %v487
      %v1459 = vunpack.c.h.b16 %v487
      %v1460 = vunpack.c.l.b16 %v488
      %v1461 = vunpack.c.h.b16 %v488
      %v1462 = vunpack.c.l.b16 %v489
      %v1463 = vunpack.c.h.b16 %v489
      %v1464 = vunpack.c.l.b16 %v490
      %v1465 = vunpack.c.l.b16 %v491
      %v1466 = vunpack.c.h.b16 %v491
      %v1467 = vunpack.c.l.b16 %v492
      %v1468 = vunpack.c.h.b16 %v492
      %v1469 = vunpack.c.l.b16 %v493
      %v1470 = vunpack.c.h.b16 %v493
      %v1471 = vunpack.c.l.b16 %v494
      %v1472 = vunpack.c.l.b16 %v495
      %v1473 = vunpack.c.h.b16 %v495
      %v1474 = vunpack.c.l.b16 %v496
      %v1475 = vunpack.c.h.b16 %v496
      %v1476 = vunpack.c.l.b16 %v497
      %v1477 = vunpack.c.h.b16 %v497
      %v1478 = vunpack.c.l.b16 %v498
      %v1479 = vunpack.c.l.b16 %v499
      %v1480 = vunpack.c.h.b16 %v499
      %v1481 = vunpack.c.l.b16 %v500
      %v1482 = vunpack.c.h.b16 %v500
      %v1483 = vunpack.c.l.b16 %v501
      %v1484 = vunpack.c.h.b16 %v501
      %v1485 = vunpack.c.l.b16 %v502
      %v1486 = vunpack.c.l.b16 %v503
      %v1487 = vunpack.c.h.b16 %v503
      %v1488 = vunpack.c.l.b16 %v504
      %v1489 = vunpack.c.h.b16 %v504
      %v1490 = vunpack.c.l.b16 %v505
      %v1491 = vunpack.c.h.b16 %v505
      %v1492 = vunpack.c.l.b16 %v506
      %v1493 = vunpack.c.l.b16 %v507
      %v1494 = vunpack.c.h.b16 %v507
      %v1495 = vunpack.c.l.b16 %v508
      %v1496 = vunpack.c.h.b16 %v508
      %v1497 = vunpack.c.l.b16 %v509
      %v1498 = vunpack.c.h.b16 %v509
      %v1499 = vunpack.c.l.b16 %v510
      %v1500 = vunpack.c.l.b16 %v511
      %v1501 = vunpack.c.h.b16 %v511
      %v1502 = vunpack.c.l.b16 %v512
      %v1503 = vunpack.c.h.b16 %v512
      %v1504 = vunpack.c.l.b16 %v513
      %v1505 = vunpack.c.h.b16 %v513
      %v1506 = vunpack.c.l.b16 %v514
      %v1507 = vunpack.c.l.b16 %v515
      %v1508 = vunpack.c.h.b16 %v515
      %v1509 = vunpack.c.l.b16 %v516
      %v1510 = vunpack.c.h.b16 %v516
      %v1511 = vunpack.c.l.b16 %v517
      %v1512 = vunpack.c.h.b16 %v517
      %v1513 = vunpack.c.l.b16 %v518
      %v1514 = vunpack.c.l.b16 %v519
      %v1515 = vunpack.c.h.b16 %v519
      %v1516 = vunpack.c.l.b16 %v520
      %v1517 = vunpack.c.h.b16 %v520
      %v1518 = vunpack.c.l.b16 %v521
      %v1519 = vunpack.c.h.b16 %v521
      %v1520 = vunpack.c.l.b16 %v522
      %v1521 = vunpack.c.l.b16 %v523
      %v1522 = vunpack.c.h.b16 %v523
      %v1523 = vunpack.c.l.b16 %v524
      %v1524 = vunpack.c.h.b16 %v524
      %v1525 = vunpack.c.l.b16 %v525
      %v1526 = vunpack.c.h.b16 %v525
      %v1527 = vunpack.c.l.b16 %v526
      %v1528 = vunpack.c.l.b16 %v527
      %v1529 = vunpack.c.h.b16 %v527
      %v1530 = vunpack.c.l.b16 %v528
      %v1531 = vunpack.c.h.b16 %v528
      %v1532 = vunpack.c.l.b16 %v529
      %v1533 = vunpack.c.h.b16 %v529
      %v1534 = vunpack.c.l.b16 %v530
      %v1535 = vunpack.c.l.b16 %v531
      %v1536 = vunpack.c.h.b16 %v531
      %v1537 = vunpack.c.l.b16 %v532
      %v1538 = vunpack.c.h.b16 %v532
      %v1539 = vunpack.c.l.b16 %v533
      %v1540 = vunpack.c.h.b16 %v533
      %v1541 = vunpack.c.l.b16 %v534
      %v1542 = vunpack.c.l.b16 %v535
      %v1543 = vunpack.c.h.b16 %v535
      %v1544 = vunpack.c.l.b16 %v536
      %v1545 = vunpack.c.h.b16 %v536
      %v1546 = vunpack.c.l.b16 %v537
      %v1547 = vunpack.c.h.b16 %v537
      %v1548 = vunpack.c.l.b16 %v538
      %v1549 = vunpack.c.l.b16 %v539
      %v1550 = vunpack.c.h.b16 %v539
      %v1551 = vunpack.c.l.b16 %v540
      %v1552 = vunpack.c.h.b16 %v540
      %v1553 = vunpack.c.l.b16 %v541
      %v1554 = vunpack.c.h.b16 %v541
      %v1555 = vunpack.c.l.b16 %v542
      %v1556 = vunpack.c.l.b16 %v543
      %v1557 = vunpack.c.h.b16 %v543
      %v1558 = vunpack.c.l.b16 %v544
      %v1559 = vunpack.c.h.b16 %v544
      %v1560 = vunpack.c.l.b16 %v545
      %v1561 = vunpack.c.h.b16 %v545
      %v1562 = vunpack.c.l.b16 %v546
      %v1563 = vunpack.c.l.b16 %v547
      %v1564 = vunpack.c.h.b16 %v547
      %v1565 = vunpack.c.l.b16 %v548
      %v1566 = vunpack.c.h.b16 %v548
      %v1567 = vunpack.c.l.b16 %v549
      %v1568 = vunpack.c.h.b16 %v549
      %v1569 = vunpack.c.l.b16 %v550
      %v1570 = vunpack.c.l.b16 %v551
      %v1571 = vunpack.c.h.b16 %v551
      %v1572 = vunpack.c.l.b16 %v552
      %v1573 = vunpack.c.h.b16 %v552
      %v1574 = vunpack.c.l.b16 %v553
      %v1575 = vunpack.c.h.b16 %v553
      %v1576 = vunpack.c.l.b16 %v554
      %v1577 = vunpack.c.l.b16 %v555
      %v1578 = vunpack.c.h.b16 %v555
      %v1579 = vunpack.c.l.b16 %v556
      %v1580 = vunpack.c.h.b16 %v556
      %v1581 = vunpack.c.l.b16 %v557
      %v1582 = vunpack.c.h.b16 %v557
      %v1583 = vunpack.c.l.b16 %v558
      %v1584 = vunpack.c.l.b16 %v559
      %v1585 = vunpack.c.h.b16 %v559
      %v1586 = vunpack.c.l.b16 %v560
      %v1587 = vunpack.c.h.b16 %v560
      %v1588 = vunpack.c.l.b16 %v561
      %v1589 = vunpack.c.h.b16 %v561
      %v1590 = vunpack.c.l.b16 %v562
      %v1591 = vunpack.c.l.b16 %v563
      %v1592 = vunpack.c.h.b16 %v563
      %v1593 = vunpack.c.l.b16 %v564
      %v1594 = vunpack.c.h.b16 %v564
      %v1595 = vunpack.c.l.b16 %v565
      %v1596 = vunpack.c.h.b16 %v565
      %v1597 = vunpack.c.l.b16 %v566
      %v1598 = vunpack.c.l.b16 %v567
      %v1599 = vunpack.c.h.b16 %v567
      %v1600 = vunpack.c.l.b16 %v568
      %v1601 = vunpack.c.h.b16 %v568
      %v1602 = vunpack.c.l.b16 %v569
      %v1603 = vunpack.c.h.b16 %v569
      %v1604 = vunpack.c.l.b16 %v570
      %v1605 = vunpack.c.l.b16 %v571
      %v1606 = vunpack.c.h.b16 %v571
      %v1607 = vunpack.c.l.b16 %v572
      %v1608 = vunpack.c.h.b16 %v572
      %v1609 = vunpack.c.l.b16 %v573
      %v1610 = vunpack.c.h.b16 %v573
      %v1611 = vunpack.c.l.b16 %v574
      %v1612 = vunpack.c.l.b16 %v575
      %v1613 = vunpack.c.h.b16 %v575
      %v1614 = vunpack.c.l.b16 %v576
      %v1615 = vunpack.c.h.b16 %v576
      %v1616 = vunpack.c.l.b16 %v577
      %v1617 = vunpack.c.h.b16 %v577
      %v1618 = vunpack.c.l.b16 %v578
      %v1619 = vunpack.c.l.b16 %v579
      %v1620 = vunpack.c.h.b16 %v579
      %v1621 = vunpack.c.l.b16 %v580
      %v1622 = vunpack.c.h.b16 %v580
      %v1623 = vunpack.c.l.b16 %v581
      %v1624 = vunpack.c.h.b16 %v581
      %v1625 = vunpack.c.l.b16 %v582
      %v1626 = vunpack.c.l.b16 %v583
      %v1627 = vunpack.c.h.b16 %v583
      %v1628 = vunpack.c.l.b16 %v584
      %v1629 = vunpack.c.h.b16 %v584
      %v1630 = vunpack.c.l.b16 %v585
      %v1631 = vunpack.c.h.b16 %v585
      %v1632 = vunpack.c.l.b16 %v586
      %v1633 = vunpack.c.l.b16 %v587
      %v1634 = vunpack.c.h.b16 %v587
      %v1635 = vunpack.c.l.b16 %v588
      %v1636 = vunpack.c.h.b16 %v588
      %v1637 = vunpack.c.l.b16 %v589
      %v1638 = vunpack.c.h.b16 %v589
      %v1639 = vunpack.c.l.b16 %v590
      %v1640 = vunpack.c.l.b16 %v591
      %v1641 = vunpack.c.h.b16 %v591
      %v1642 = vunpack.c.l.b16 %v592
      %v1643 = vunpack.c.h.b16 %v592
      %v1644 = vunpack.c.l.b16 %v593
      %v1645 = vunpack.c.h.b16 %v593
      %v1646 = vunpack.c.l.b16 %v594
      %v1647 = vunpack.c.l.b16 %v595
      %v1648 = vunpack.c.h.b16 %v595
      %v1649 = vunpack.c.l.b16 %v596
      %v1650 = vunpack.c.h.b16 %v596
      %v1651 = vunpack.c.l.b16 %v597
      %v1652 = vunpack.c.h.b16 %v597
      %v1653 = vunpack.c.l.b16 %v598
      %v1654 = vunpack.c.l.b16 %v599
      %v1655 = vunpack.c.h.b16 %v599
      %v1656 = vunpack.c.l.b16 %v600
      %v1657 = vunpack.c.h.b16 %v600
      %v1658 = vunpack.c.l.b16 %v601
      %v1659 = vunpack.c.h.b16 %v601
      %v1660 = vunpack.c.l.b16 %v602
      %v1661 = vunpack.c.l.b16 %v603
      %v1662 = vunpack.c.h.b16 %v603
      %v1663 = vunpack.c.l.b16 %v604
      %v1664 = vunpack.c.h.b16 %v604
      %v1665 = vunpack.c.l.b16 %v605
      %v1666 = vunpack.c.h.b16 %v605
      %v1667 = vunpack.c.l.b16 %v606
      %v1668 = vpack.c.b16 %v1227, %v1220
      %v1669 = vpack.c.b16 %v1228, %v1221
      %v1670 = vpack.c.b16 %v1229, %v1222
      %v1671 = vpack.c.b16 %v1230, %v1223
      %v1672 = vpack.c.b16 %v1231, %v1224
      %v1673 = vpack.c.b16 %v1232, %v1225
      %v1674 = vpack.c.b16 %v1233, %v1226
      %v1675 = vpack.c.b16 %v1241, %v1234
      %v1676 = vpack.c.b16 %v1242, %v1235
      %v1677 = vpack.c.b16 %v1243, %v1236
      %v1678 = vpack.c.b16 %v1244, %v1237
      %v1679 = vpack.c.b16 %v1245, %v1238
      %v1680 = vpack.c.b16 %v1246, %v1239
      %v1681 = vpack.c.b16 %v1247, %v1240
      %v1682 = vpack.c.b16 %v1255, %v1248
      %v1683 = vpack.c.b16 %v1256, %v1249
      %v1684 = vpack.c.b16 %v1257, %v1250
      %v1685 = vpack.c.b16 %v1258, %v1251
      %v1686 = vpack.c.b16 %v1259, %v1252
      %v1687 = vpack.c.b16 %v1260, %v1253
      %v1688 = vpack.c.b16 %v1261, %v1254
      %v1689 = vpack.c.b16 %v1269, %v1262
      %v1690 = vpack.c.b16 %v1270, %v1263
      %v1691 = vpack.c.b16 %v1271, %v1264
      %v1692 = vpack.c.b16 %v1272, %v1265
      %v1693 = vpack.c.b16 %v1273, %v1266
      %v1694 = vpack.c.b16 %v1274, %v1267
      %v1695 = vpack.c.b16 %v1275, %v1268
      %v1696 = vpack.c.b16 %v1283, %v1276
      %v1697 = vpack.c.b16 %v1284, %v1277
      %v1698 = vpack.c.b16 %v1285, %v1278
      %v1699 = vpack.c.b16 %v1286, %v1279
      %v1700 = vpack.c.b16 %v1287, %v1280
      %v1701 = vpack.c.b16 %v1288, %v1281
      %v1702 = vpack.c.b16 %v1289, %v1282
      %v1703 = vpack.c.b16 %v1297, %v1290
      %v1704 = vpack.c.b16 %v1298, %v1291
      %v1705 = vpack.c.b16 %v1299, %v1292
      %v1706 = vpack.c.b16 %v1300, %v1293
      %v1707 = vpack.c.b16 %v1301, %v1294
      %v1708 = vpack.c.b16 %v1302, %v1295
      %v1709 = vpack.c.b16 %v1303, %v1296
      %v1710 = vpack.c.b16 %v1311, %v1304
      %v1711 = vpack.c.b16 %v1312, %v1305
      %v1712 = vpack.c.b16 %v1313, %v1306
      %v1713 = vpack.c.b16 %v1314, %v1307
      %v1714 = vpack.c.b16 %v1315, %v1308
      %v1715 = vpack.c.b16 %v1316, %v1309
      %v1716 = vpack.c.b16 %v1317, %v1310
      %v1717 = vpack.c.b16 %v1325, %v1318
      %v1718 = vpack.c.b16 %v1326, %v1319
      %v1719 = vpack.c.b16 %v1327, %v1320
      %v1720 = vpack.c.b16 %v1328, %v1321
      %v1721 = vpack.c.b16 %v1329, %v1322
      %v1722 = vpack.c.b16 %v1330, %v1323
      %v1723 = vpack.c.b16 %v1331, %v1324
      %v1724 = vpack.c.b16 %v1339, %v1332
      %v1725 = vpack.c.b16 %v1340, %v1333
      %v1726 = vpack.c.b16 %v1341, %v1334
      %v1727 = vpack.c.b16 %v1342, %v1335
      %v1728 = vpack.c.b16 %v1343, %v1336
      %v1729 = vpack.c.b16 %v1344, %v1337
      %v1730 = vpack.c.b16 %v1345, %v1338
      %v1731 = vpack.c.b16 %v1353, %v1346
      %v1732 = vpack.c.b16 %v1354, %v1347
      %v1733 = vpack.c.b16 %v1355, %v1348
      %v1734 = vpack.c.b16 %v1356, %v1349
      %v1735 = vpack.c.b16 %v1357, %v1350
      %v1736 = vpack.c.b16 %v1358, %v1351
      %v1737 = vpack.c.b16 %v1359, %v1352
      %v1738 = vpack.c.b16 %v1367, %v1360
      %v1739 = vpack.c.b16 %v1368, %v1361
      %v1740 = vpack.c.b16 %v1369, %v1362
      %v1741 = vpack.c.b16 %v1370, %v1363
      %v1742 = vpack.c.b16 %v1371, %v1364
      %v1743 = vpack.c.b16 %v1372, %v1365
      %v1744 = vpack.c.b16 %v1373, %v1366
      %v1745 = vpack.c.b16 %v1381, %v1374
      %v1746 = vpack.c.b16 %v1382, %v1375
      %v1747 = vpack.c.b16 %v1383, %v1376
      %v1748 = vpack.c.b16 %v1384, %v1377
      %v1749 = vpack.c.b16 %v1385, %v1378
      %v1750 = vpack.c.b16 %v1386, %v1379
      %v1751 = vpack.c.b16 %v1387, %v1380
      %v1752 = vpack.c.b16 %v1395, %v1388
      %v1753 = vpack.c.b16 %v1396, %v1389
      %v1754 = vpack.c.b16 %v1397, %v1390
      %v1755 = vpack.c.b16 %v1398, %v1391
      %v1756 = vpack.c.b16 %v1399, %v1392
      %v1757 = vpack.c.b16 %v1400, %v1393
      %v1758 = vpack.c.b16 %v1401, %v1394
      %v1759 = vpack.c.b16 %v1409, %v1402
      %v1760 = vpack.c.b16 %v1410, %v1403
      %v1761 = vpack.c.b16 %v1411, %v1404
      %v1762 = vpack.c.b16 %v1412, %v1405
      %v1763 = vpack.c.b16 %v1413, %v1406
      %v1764 = vpack.c.b16 %v1414, %v1407
      %v1765 = vpack.c.b16 %v1415, %v1408
      %v1766 = vpack.c.b16 %v1423, %v1416
      %v1767 = vpack.c.b16 %v1424, %v1417
      %v1768 = vpack.c.b16 %v1425, %v1418
      %v1769 = vpack.c.b16 %v1426, %v1419
      %v1770 = vpack.c.b16 %v1427, %v1420
      %v1771 = vpack.c.b16 %v1428, %v1421
      %v1772 = vpack.c.b16 %v1429, %v1422
      %v1773 = vpack.c.b16 %v1437, %v1430
      %v1774 = vpack.c.b16 %v1438, %v1431
      %v1775 = vpack.c.b16 %v1439, %v1432
      %v1776 = vpack.c.b16 %v1440, %v1433
      %v1777 = vpack.c.b16 %v1441, %v1434
      %v1778 = vpack.c.b16 %v1442, %v1435
      %v1779 = vpack.c.b16 %v1443, %v1436
      %v1780 = vpack.c.b16 %v1451, %v1444
      %v1781 = vpack.c.b16 %v1452, %v1445
      %v1782 = vpack.c.b16 %v1453, %v1446
      %v1783 = vpack.c.b16 %v1454, %v1447
      %v1784 = vpack.c.b16 %v1455, %v1448
      %v1785 = vpack.c.b16 %v1456, %v1449
      %v1786 = vpack.c.b16 %v1457, %v1450
      %v1787 = vpack.c.b16 %v1465, %v1458
      %v1788 = vpack.c.b16 %v1466, %v1459
      %v1789 = vpack.c.b16 %v1467, %v1460
      %v1790 = vpack.c.b16 %v1468, %v1461
      %v1791 = vpack.c.b16 %v1469, %v1462
      %v1792 = vpack.c.b16 %v1470, %v1463
      %v1793 = vpack.c.b16 %v1471, %v1464
      %v1794 = vpack.c.b16 %v1479, %v1472
      %v1795 = vpack.c.b16 %v1480, %v1473
      %v1796 = vpack.c.b16 %v1481, %v1474
      %v1797 = vpack.c.b16 %v1482, %v1475
      %v1798 = vpack.c.b16 %v1483, %v1476
      %v1799 = vpack.c.b16 %v1484, %v1477
      %v1800 = vpack.c.b16 %v1485, %v1478
      %v1801 = vpack.c.b16 %v1493, %v1486
      %v1802 = vpack.c.b16 %v1494, %v1487
      %v1803 = vpack.c.b16 %v1495, %v1488
      %v1804 = vpack.c.b16 %v1496, %v1489
      %v1805 = vpack.c.b16 %v1497, %v1490
      %v1806 = vpack.c.b16 %v1498, %v1491
      %v1807 = vpack.c.b16 %v1499, %v1492
      %v1808 = vpack.c.b16 %v1507, %v1500
      %v1809 = vpack.c.b16 %v1508, %v1501
      %v1810 = vpack.c.b16 %v1509, %v1502
      %v1811 = vpack.c.b16 %v1510, %v1503
      %v1812 = vpack.c.b16 %v1511, %v1504
      %v1813 = vpack.c.b16 %v1512, %v1505
      %v1814 = vpack.c.b16 %v1513, %v1506
      %v1815 = vpack.c.b16 %v1521, %v1514
      %v1816 = vpack.c.b16 %v1522, %v1515
      %v1817 = vpack.c.b16 %v1523, %v1516
      %v1818 = vpack.c.b16 %v1524, %v1517
      %v1819 = vpack.c.b16 %v1525, %v1518
      %v1820 = vpack.c.b16 %v1526, %v1519
      %v1821 = vpack.c.b16 %v1527, %v1520
      %v1822 = vpack.c.b16 %v1535, %v1528
      %v1823 = vpack.c.b16 %v1536, %v1529
      %v1824 = vpack.c.b16 %v1537, %v1530
      %v1825 = vpack.c.b16 %v1538, %v1531
      %v1826 = vpack.c.b16 %v1539, %v1532
      %v1827 = vpack.c.b16 %v1540, %v1533
      %v1828 = vpack.c.b16 %v1541, %v1534
      %v1829 = vpack.c.b16 %v1549, %v1542
      %v1830 = vpack.c.b16 %v1550, %v1543
      %v1831 = vpack.c.b16 %v1551, %v1544
      %v1832 = vpack.c.b16 %v1552, %v1545
      %v1833 = vpack.c.b16 %v1553, %v1546
      %v1834 = vpack.c.b16 %v1554, %v1547
      %v1835 = vpack.c.b16 %v1555, %v1548
      %v1836 = vpack.c.b16 %v1563, %v1556
      %v1837 = vpack.c.b16 %v1564, %v1557
      %v1838 = vpack.c.b16 %v1565, %v1558
      %v1839 = vpack.c.b16 %v1566, %v1559
      %v1840 = vpack.c.b16 %v1567, %v1560
      %v1841 = vpack.c.b16 %v1568, %v1561
      %v1842 = vpack.c.b16 %v1569, %v1562
      %v1843 = vpack.c.b16 %v1577, %v1570
      %v1844 = vpack.c.b16 %v1578, %v1571
      %v1845 = vpack.c.b16 %v1579, %v1572
      %v1846 = vpack.c.b16 %v1580, %v1573
      %v1847 = vpack.c.b16 %v1581, %v1574
      %v1848 = vpack.c.b16 %v1582, %v1575
      %v1849 = vpack.c.b16 %v1583, %v1576
      %v1850 = vpack.c.b16 %v1591, %v1584
      %v1851 = vpack.c.b16 %v1592, %v1585
      %v1852 = vpack.c.b16 %v1593, %v1586
      %v1853 = vpack.c.b16 %v1594, %v1587
      %v1854 = vpack.c.b16 %v1595, %v1588
      %v1855 = vpack.c.b16 %v1596, %v1589
      %v1856 = vpack.c.b16 %v1597, %v1590
      %v1857 = vpack.c.b16 %v1605, %v1598
      %v1858 = vpack.c.b16 %v1606, %v1599
      %v1859 = vpack.c.b16 %v1607, %v1600
      %v1860 = vpack.c.b16 %v1608, %v1601
      %v1861 = vpack.c.b16 %v1609, %v1602
      %v1862 = vpack.c.b16 %v1610, %v1603
      %v1863 = vpack.c.b16 %v1611, %v1604
      %v1864 = vpack.c.b16 %v1619, %v1612
      %v1865 = vpack.c.b16 %v1620, %v1613
      %v1866 = vpack.c.b16 %v1621, %v1614
      %v1867 = vpack.c.b16 %v1622, %v1615
      %v1868 = vpack.c.b16 %v1623, %v1616
      %v1869 = vpack.c.b16 %v1624, %v1617
      %v1870 = vpack.c.b16 %v1625, %v1618
      %v1871 = vpack.c.b16 %v1633, %v1626
      %v1872 = vpack.c.b16 %v1634, %v1627
      %v1873 = vpack.c.b16 %v1635, %v1628
      %v1874 = vpack.c.b16 %v1636, %v1629
      %v1875 = vpack.c.b16 %v1637, %v1630
      %v1876 = vpack.c.b16 %v1638, %v1631
      %v1877 = vpack.c.b16 %v1639, %v1632
      %v1878 = vpack.c.b16 %v1647, %v1640
      %v1879 = vpack.c.b16 %v1648, %v1641
      %v1880 = vpack.c.b16 %v1649, %v1642
      %v1881 = vpack.c.b16 %v1650, %v1643
      %v1882 = vpack.c.b16 %v1651, %v1644
      %v1883 = vpack.c.b16 %v1652, %v1645
      %v1884 = vpack.c.b16 %v1653, %v1646
      %v1885 = vpack.c.b16 %v1661, %v1654
      %v1886 = vpack.c.b16 %v1662, %v1655
      %v1887 = vpack.c.b16 %v1663, %v1656
      %v1888 = vpack.c.b16 %v1664, %v1657
      %v1889 = vpack.c.b16 %v1665, %v1658
      %v1890 = vpack.c.b16 %v1666, %v1659
      %v1891 = vpack.c.b16 %v1667, %v1660
      %2116 = vmatprep.subr.bf16.mxu0 %v1718
      %2117 = vmatpush1.bf16.msra.mxu0 %v1717
      %2118 = vmatprep.subr.bf16.mxu0 %v1711
      %2119 = vmatpush1.bf16.msra.mxu0 %v1710
      %2120 = vmatprep.subr.bf16.mxu0 %v1704
      %2121 = vmatpush1.bf16.msra.mxu0 %v1703
      %2122 = vmatprep.subr.bf16.mxu0 %v1697
      %2123 = vmatpush1.bf16.msra.mxu0 %v1696
      %2124 = vmatprep.subr.bf16.mxu0 %v1690
      %2125 = vmatpush1.bf16.msra.mxu0 %v1689
      %2126 = vmatprep.subr.bf16.mxu0 %v1683
      %2127 = vmatpush1.bf16.msra.mxu0 %v1682
      %2128 = vmatprep.subr.bf16.mxu0 %v1676
      %2129 = vmatpush1.bf16.msra.mxu0 %v1675
      %2130 = vmatprep.subr.bf16.mxu0 %v1669
      %2131 = vmatpush1.bf16.msra.mxu0 %v1668
      %2132 = vmatprep.subr.bf16.mxu0 %v1774
      %2133 = vmatpush2.bf16.msra.mxu0 %v1773
      %2134 = vmatprep.subr.bf16.mxu0 %v1767
      %2135 = vmatpush2.bf16.msra.mxu0 %v1766
      %2136 = vmatprep.subr.bf16.mxu0 %v1760
      %2137 = vmatpush2.bf16.msra.mxu0 %v1759
      %2138 = vmatprep.subr.bf16.mxu0 %v1753
      %2139 = vmatpush2.bf16.msra.mxu0 %v1752
      %2140 = vmatprep.subr.bf16.mxu0 %v1746
      %2141 = vmatpush2.bf16.msra.mxu0 %v1745
      %2142 = vmatprep.subr.bf16.mxu0 %v1739
      %2143 = vmatpush2.bf16.msra.mxu0 %v1738
      %2144 = vmatprep.subr.bf16.mxu0 %v1732
      %2145 = vmatpush2.bf16.msra.mxu0 %v1731
      %2146 = vmatprep.subr.bf16.mxu0 %v1725
      %2147 = vmatpush2.bf16.msra.mxu0 %v1724
      %2148 = vmatprep.mubr.bf16.mxu0 %v837
      %2149 = vmatmul.mubr.bf16.gmra.mxu0 %v836
      %v2150 = vpop.f32.mrf.mxu0
      %v2151 = vadd.f32 %v612, %v2150
      %v2152 = vpop.f32.mrf.mxu0
      %v2153 = vadd.f32 %v616, %v2152
      %v2154 = vpop.f32.mrf.mxu0
      %v2155 = vadd.f32 %v612, %v2154
      %v2156 = vpop.f32.mrf.mxu0
      %v2157 = vadd.f32 %v616, %v2156
      %2158 = vmatprep.mubr.bf16.mxu0 %v841
      %2159 = vmatmul.mubr.bf16.gmra.mxu0 %v840
      %v2160 = vpop.f32.mrf.mxu0
      %v2161 = vadd.f32 %v612, %v2160
      %v2162 = vpop.f32.mrf.mxu0
      %v2163 = vadd.f32 %v616, %v2162
      %v2164 = vpop.f32.mrf.mxu0
      %v2165 = vadd.f32 %v612, %v2164
      %v2166 = vpop.f32.mrf.mxu0
      %v2167 = vadd.f32 %v616, %v2166
      %2168 = vmatprep.mubr.bf16.mxu0 %v845
      %2169 = vmatmul.mubr.bf16.gmra.mxu0 %v844
      %v2170 = vpop.f32.mrf.mxu0
      %v2171 = vadd.f32 %v612, %v2170
      %v2172 = vpop.f32.mrf.mxu0
      %v2173 = vadd.f32 %v616, %v2172
      %v2174 = vpop.f32.mrf.mxu0
      %v2175 = vadd.f32 %v612, %v2174
      %v2176 = vpop.f32.mrf.mxu0
      %v2177 = vadd.f32 %v616, %v2176
      %2178 = vmatprep.mubr.bf16.mxu0 %v849
      %2179 = vmatmul.mubr.bf16.gmra.mxu0 %v848
      %v2180 = vpop.f32.mrf.mxu0
      %v2181 = vadd.f32 %v612, %v2180
      %v2182 = vpop.f32.mrf.mxu0
      %v2183 = vadd.f32 %v616, %v2182
      %v2184 = vpop.f32.mrf.mxu0
      %v2185 = vadd.f32 %v612, %v2184
      %v2186 = vpop.f32.mrf.mxu0
      %v2187 = vadd.f32 %v616, %v2186
      %2188 = vmatprep.mubr.bf16.mxu0 %v853
      %2189 = vmatmul.mubr.bf16.gmra.mxu0 %v852
      %v2190 = vpop.f32.mrf.mxu0
      %v2191 = vadd.f32 %v612, %v2190
      %v2192 = vpop.f32.mrf.mxu0
      %v2193 = vadd.f32 %v616, %v2192
      %v2194 = vpop.f32.mrf.mxu0
      %v2195 = vadd.f32 %v612, %v2194
      %v2196 = vpop.f32.mrf.mxu0
      %v2197 = vadd.f32 %v616, %v2196
      %2198 = vmatprep.mubr.bf16.mxu0 %v857
      %2199 = vmatmul.mubr.bf16.gmra.mxu0 %v856
      %v2200 = vpop.f32.mrf.mxu0
      %v2201 = vadd.f32 %v612, %v2200
      %v2202 = vpop.f32.mrf.mxu0
      %v2203 = vadd.f32 %v616, %v2202
      %v2204 = vpop.f32.mrf.mxu0
      %v2205 = vadd.f32 %v612, %v2204
      %v2206 = vpop.f32.mrf.mxu0
      %v2207 = vadd.f32 %v616, %v2206
      %2208 = vmatprep.mubr.bf16.mxu0 %v861
      %2209 = vmatmul.mubr.bf16.gmra.mxu0 %v860
      %v2210 = vpop.f32.mrf.mxu0
      %v2211 = vadd.f32 %v612, %v2210
      %v2212 = vpop.f32.mrf.mxu0
      %v2213 = vadd.f32 %v616, %v2212
      %v2214 = vpop.f32.mrf.mxu0
      %v2215 = vadd.f32 %v612, %v2214
      %v2216 = vpop.f32.mrf.mxu0
      %v2217 = vadd.f32 %v616, %v2216
      %2218 = vmatprep.mubr.bf16.mxu0 %v865
      %2219 = vmatmul.mubr.bf16.gmra.mxu0 %v864
      %v2220 = vpop.f32.mrf.mxu0
      %v2221 = vadd.f32 %v612, %v2220
      %v2222 = vpop.f32.mrf.mxu0
      %v2223 = vadd.f32 %v616, %v2222
      %v2224 = vpop.f32.mrf.mxu0
      %v2225 = vadd.f32 %v612, %v2224
      %v2226 = vpop.f32.mrf.mxu0
      %v2227 = vadd.f32 %v616, %v2226
      %2228 = vmatprep.mubr.bf16.mxu0 %v869
      %2229 = vmatmul.mubr.bf16.gmra.mxu0 %v868
      %v2230 = vpop.f32.mrf.mxu0
      %v2231 = vadd.f32 %v612, %v2230
      %v2232 = vpop.f32.mrf.mxu0
      %v2233 = vadd.f32 %v616, %v2232
      %v2234 = vpop.f32.mrf.mxu0
      %v2235 = vadd.f32 %v612, %v2234
      %v2236 = vpop.f32.mrf.mxu0
      %v2237 = vadd.f32 %v616, %v2236
      %2238 = vmatprep.mubr.bf16.mxu0 %v873
      %2239 = vmatmul.mubr.bf16.gmra.mxu0 %v872
      %v2240 = vpop.f32.mrf.mxu0
      %v2241 = vadd.f32 %v612, %v2240
      %v2242 = vpop.f32.mrf.mxu0
      %v2243 = vadd.f32 %v616, %v2242
      %v2244 = vpop.f32.mrf.mxu0
      %v2245 = vadd.f32 %v612, %v2244
      %v2246 = vpop.f32.mrf.mxu0
      %v2247 = vadd.f32 %v616, %v2246
      %2248 = vmatprep.mubr.bf16.mxu0 %v877
      %2249 = vmatmul.mubr.bf16.gmra.mxu0 %v876
      %v2250 = vpop.f32.mrf.mxu0
      %v2251 = vadd.f32 %v612, %v2250
      %v2252 = vpop.f32.mrf.mxu0
      %v2253 = vadd.f32 %v616, %v2252
      %v2254 = vpop.f32.mrf.mxu0
      %v2255 = vadd.f32 %v612, %v2254
      %v2256 = vpop.f32.mrf.mxu0
      %v2257 = vadd.f32 %v616, %v2256
      %2258 = vmatprep.mubr.bf16.mxu0 %v881
      %2259 = vmatmul.mubr.bf16.gmra.mxu0 %v880
      %v2260 = vpop.f32.mrf.mxu0
      %v2261 = vadd.f32 %v612, %v2260
      %v2262 = vpop.f32.mrf.mxu0
      %v2263 = vadd.f32 %v616, %v2262
      %v2264 = vpop.f32.mrf.mxu0
      %v2265 = vadd.f32 %v612, %v2264
      %v2266 = vpop.f32.mrf.mxu0
      %v2267 = vadd.f32 %v616, %v2266
      %2268 = vmatprep.mubr.bf16.mxu0 %v885
      %2269 = vmatmul.mubr.bf16.gmra.mxu0 %v884
      %v2270 = vpop.f32.mrf.mxu0
      %v2271 = vadd.f32 %v612, %v2270
      %v2272 = vpop.f32.mrf.mxu0
      %v2273 = vadd.f32 %v616, %v2272
      %v2274 = vpop.f32.mrf.mxu0
      %v2275 = vadd.f32 %v612, %v2274
      %v2276 = vpop.f32.mrf.mxu0
      %v2277 = vadd.f32 %v616, %v2276
      %2278 = vmatprep.mubr.bf16.mxu0 %v889
      %2279 = vmatmul.mubr.bf16.gmra.mxu0 %v888
      %v2280 = vpop.f32.mrf.mxu0
      %v2281 = vadd.f32 %v612, %v2280
      %v2282 = vpop.f32.mrf.mxu0
      %v2283 = vadd.f32 %v616, %v2282
      %v2284 = vpop.f32.mrf.mxu0
      %v2285 = vadd.f32 %v612, %v2284
      %v2286 = vpop.f32.mrf.mxu0
      %v2287 = vadd.f32 %v616, %v2286
      %2288 = vmatprep.mubr.bf16.mxu0 %v893
      %2289 = vmatmul.mubr.bf16.gmra.mxu0 %v892
      %v2290 = vpop.f32.mrf.mxu0
      %v2291 = vadd.f32 %v612, %v2290
      %v2292 = vpop.f32.mrf.mxu0
      %v2293 = vadd.f32 %v616, %v2292
      %v2294 = vpop.f32.mrf.mxu0
      %v2295 = vadd.f32 %v612, %v2294
      %v2296 = vpop.f32.mrf.mxu0
      %v2297 = vadd.f32 %v616, %v2296
      %2298 = vmatprep.mubr.bf16.mxu0 %v897
      %2299 = vmatmul.mubr.bf16.gmra.mxu0 %v896
      %v2300 = vpop.f32.mrf.mxu0
      %v2301 = vadd.f32 %v612, %v2300
      %v2302 = vpop.f32.mrf.mxu0
      %v2303 = vadd.f32 %v616, %v2302
      %v2304 = vpop.f32.mrf.mxu0
      %v2305 = vadd.f32 %v612, %v2304
      %v2306 = vpop.f32.mrf.mxu0
      %v2307 = vadd.f32 %v616, %v2306
      %2308 = vdwg.mxu0
      %2309 = vmatprep.subr.bf16.mxu0 %v1830
      %2310 = vmatpush1.bf16.msra.mxu0 %v1829
      %2311 = vmatprep.subr.bf16.mxu0 %v1823
      %2312 = vmatpush1.bf16.msra.mxu0 %v1822
      %2313 = vmatprep.subr.bf16.mxu0 %v1816
      %2314 = vmatpush1.bf16.msra.mxu0 %v1815
      %2315 = vmatprep.subr.bf16.mxu0 %v1809
      %2316 = vmatpush1.bf16.msra.mxu0 %v1808
      %2317 = vmatprep.subr.bf16.mxu0 %v1802
      %2318 = vmatpush1.bf16.msra.mxu0 %v1801
      %2319 = vmatprep.subr.bf16.mxu0 %v1795
      %2320 = vmatpush1.bf16.msra.mxu0 %v1794
      %2321 = vmatprep.subr.bf16.mxu0 %v1788
      %2322 = vmatpush1.bf16.msra.mxu0 %v1787
      %2323 = vmatprep.subr.bf16.mxu0 %v1781
      %2324 = vmatpush1.bf16.msra.mxu0 %v1780
      %2325 = vmatprep.subr.bf16.mxu0 %v1886
      %2326 = vmatpush2.bf16.msra.mxu0 %v1885
      %2327 = vmatprep.subr.bf16.mxu0 %v1879
      %2328 = vmatpush2.bf16.msra.mxu0 %v1878
      %2329 = vmatprep.subr.bf16.mxu0 %v1872
      %2330 = vmatpush2.bf16.msra.mxu0 %v1871
      %2331 = vmatprep.subr.bf16.mxu0 %v1865
      %2332 = vmatpush2.bf16.msra.mxu0 %v1864
      %2333 = vmatprep.subr.bf16.mxu0 %v1858
      %2334 = vmatpush2.bf16.msra.mxu0 %v1857
      %2335 = vmatprep.subr.bf16.mxu0 %v1851
      %2336 = vmatpush2.bf16.msra.mxu0 %v1850
      %2337 = vmatprep.subr.bf16.mxu0 %v1844
      %2338 = vmatpush2.bf16.msra.mxu0 %v1843
      %2339 = vmatprep.subr.bf16.mxu0 %v1837
      %2340 = vmatpush2.bf16.msra.mxu0 %v1836
      %2341 = vmatprep.mubr.bf16.mxu0 %v839
      %2342 = vmatmul.mubr.bf16.gmra.mxu0 %v838
      %v2343 = vpop.f32.mrf.mxu0
      %v2344 = vadd.f32 %v2151, %v2343
      %v2345 = vpop.f32.mrf.mxu0
      %v2346 = vadd.f32 %v2153, %v2345
      %v2347 = vpop.f32.mrf.mxu0
      %v2348 = vadd.f32 %v2155, %v2347
      %v2349 = vpop.f32.mrf.mxu0
      %v2350 = vadd.f32 %v2157, %v2349
      %2351 = vmatprep.mubr.bf16.mxu0 %v843
      %2352 = vmatmul.mubr.bf16.gmra.mxu0 %v842
      %v2353 = vpop.f32.mrf.mxu0
      %v2354 = vadd.f32 %v2161, %v2353
      %v2355 = vpop.f32.mrf.mxu0
      %v2356 = vadd.f32 %v2163, %v2355
      %v2357 = vpop.f32.mrf.mxu0
      %v2358 = vadd.f32 %v2165, %v2357
      %v2359 = vpop.f32.mrf.mxu0
      %v2360 = vadd.f32 %v2167, %v2359
      %2361 = vmatprep.mubr.bf16.mxu0 %v847
      %2362 = vmatmul.mubr.bf16.gmra.mxu0 %v846
      %v2363 = vpop.f32.mrf.mxu0
      %v2364 = vadd.f32 %v2171, %v2363
      %v2365 = vpop.f32.mrf.mxu0
      %v2366 = vadd.f32 %v2173, %v2365
      %v2367 = vpop.f32.mrf.mxu0
      %v2368 = vadd.f32 %v2175, %v2367
      %v2369 = vpop.f32.mrf.mxu0
      %v2370 = vadd.f32 %v2177, %v2369
      %2371 = vmatprep.mubr.bf16.mxu0 %v851
      %2372 = vmatmul.mubr.bf16.gmra.mxu0 %v850
      %v2373 = vpop.f32.mrf.mxu0
      %v2374 = vadd.f32 %v2181, %v2373
      %v2375 = vpop.f32.mrf.mxu0
      %v2376 = vadd.f32 %v2183, %v2375
      %v2377 = vpop.f32.mrf.mxu0
      %v2378 = vadd.f32 %v2185, %v2377
      %v2379 = vpop.f32.mrf.mxu0
      %v2380 = vadd.f32 %v2187, %v2379
      %2381 = vmatprep.mubr.bf16.mxu0 %v855
      %2382 = vmatmul.mubr.bf16.gmra.mxu0 %v854
      %v2383 = vpop.f32.mrf.mxu0
      %v2384 = vadd.f32 %v2191, %v2383
      %v2385 = vpop.f32.mrf.mxu0
      %v2386 = vadd.f32 %v2193, %v2385
      %v2387 = vpop.f32.mrf.mxu0
      %v2388 = vadd.f32 %v2195, %v2387
      %v2389 = vpop.f32.mrf.mxu0
      %v2390 = vadd.f32 %v2197, %v2389
      %2391 = vmatprep.mubr.bf16.mxu0 %v859
      %2392 = vmatmul.mubr.bf16.gmra.mxu0 %v858
      %v2393 = vpop.f32.mrf.mxu0
      %v2394 = vadd.f32 %v2201, %v2393
      %v2395 = vpop.f32.mrf.mxu0
      %v2396 = vadd.f32 %v2203, %v2395
      %v2397 = vpop.f32.mrf.mxu0
      %v2398 = vadd.f32 %v2205, %v2397
      %v2399 = vpop.f32.mrf.mxu0
      %v2400 = vadd.f32 %v2207, %v2399
      %2401 = vmatprep.mubr.bf16.mxu0 %v863
      %2402 = vmatmul.mubr.bf16.gmra.mxu0 %v862
      %v2403 = vpop.f32.mrf.mxu0
      %v2404 = vadd.f32 %v2211, %v2403
      %v2405 = vpop.f32.mrf.mxu0
      %v2406 = vadd.f32 %v2213, %v2405
      %v2407 = vpop.f32.mrf.mxu0
      %v2408 = vadd.f32 %v2215, %v2407
      %v2409 = vpop.f32.mrf.mxu0
      %v2410 = vadd.f32 %v2217, %v2409
      %2411 = vmatprep.mubr.bf16.mxu0 %v867
      %2412 = vmatmul.mubr.bf16.gmra.mxu0 %v866
      %v2413 = vpop.f32.mrf.mxu0
      %v2414 = vadd.f32 %v2221, %v2413
      %v2415 = vpop.f32.mrf.mxu0
      %v2416 = vadd.f32 %v2223, %v2415
      %v2417 = vpop.f32.mrf.mxu0
      %v2418 = vadd.f32 %v2225, %v2417
      %v2419 = vpop.f32.mrf.mxu0
      %v2420 = vadd.f32 %v2227, %v2419
      %2421 = vmatprep.mubr.bf16.mxu0 %v871
      %2422 = vmatmul.mubr.bf16.gmra.mxu0 %v870
      %v2423 = vpop.f32.mrf.mxu0
      %v2424 = vadd.f32 %v2231, %v2423
      %v2425 = vpop.f32.mrf.mxu0
      %v2426 = vadd.f32 %v2233, %v2425
      %v2427 = vpop.f32.mrf.mxu0
      %v2428 = vadd.f32 %v2235, %v2427
      %v2429 = vpop.f32.mrf.mxu0
      %v2430 = vadd.f32 %v2237, %v2429
      %2431 = vmatprep.mubr.bf16.mxu0 %v875
      %2432 = vmatmul.mubr.bf16.gmra.mxu0 %v874
      %v2433 = vpop.f32.mrf.mxu0
      %v2434 = vadd.f32 %v2241, %v2433
      %v2435 = vpop.f32.mrf.mxu0
      %v2436 = vadd.f32 %v2243, %v2435
      %v2437 = vpop.f32.mrf.mxu0
      %v2438 = vadd.f32 %v2245, %v2437
      %v2439 = vpop.f32.mrf.mxu0
      %v2440 = vadd.f32 %v2247, %v2439
      %2441 = vmatprep.mubr.bf16.mxu0 %v879
      %2442 = vmatmul.mubr.bf16.gmra.mxu0 %v878
      %v2443 = vpop.f32.mrf.mxu0
      %v2444 = vadd.f32 %v2251, %v2443
      %v2445 = vpop.f32.mrf.mxu0
      %v2446 = vadd.f32 %v2253, %v2445
      %v2447 = vpop.f32.mrf.mxu0
      %v2448 = vadd.f32 %v2255, %v2447
      %v2449 = vpop.f32.mrf.mxu0
      %v2450 = vadd.f32 %v2257, %v2449
      %2451 = vmatprep.mubr.bf16.mxu0 %v883
      %2452 = vmatmul.mubr.bf16.gmra.mxu0 %v882
      %v2453 = vpop.f32.mrf.mxu0
      %v2454 = vadd.f32 %v2261, %v2453
      %v2455 = vpop.f32.mrf.mxu0
      %v2456 = vadd.f32 %v2263, %v2455
      %v2457 = vpop.f32.mrf.mxu0
      %v2458 = vadd.f32 %v2265, %v2457
      %v2459 = vpop.f32.mrf.mxu0
      %v2460 = vadd.f32 %v2267, %v2459
      %2461 = vmatprep.mubr.bf16.mxu0 %v887
      %2462 = vmatmul.mubr.bf16.gmra.mxu0 %v886
      %v2463 = vpop.f32.mrf.mxu0
      %v2464 = vadd.f32 %v2271, %v2463
      %v2465 = vpop.f32.mrf.mxu0
      %v2466 = vadd.f32 %v2273, %v2465
      %v2467 = vpop.f32.mrf.mxu0
      %v2468 = vadd.f32 %v2275, %v2467
      %v2469 = vpop.f32.mrf.mxu0
      %v2470 = vadd.f32 %v2277, %v2469
      %2471 = vmatprep.mubr.bf16.mxu0 %v891
      %2472 = vmatmul.mubr.bf16.gmra.mxu0 %v890
      %v2473 = vpop.f32.mrf.mxu0
      %v2474 = vadd.f32 %v2281, %v2473
      %v2475 = vpop.f32.mrf.mxu0
      %v2476 = vadd.f32 %v2283, %v2475
      %v2477 = vpop.f32.mrf.mxu0
      %v2478 = vadd.f32 %v2285, %v2477
      %v2479 = vpop.f32.mrf.mxu0
      %v2480 = vadd.f32 %v2287, %v2479
      %2481 = vmatprep.mubr.bf16.mxu0 %v895
      %2482 = vmatmul.mubr.bf16.gmra.mxu0 %v894
      %v2483 = vpop.f32.mrf.mxu0
      %v2484 = vadd.f32 %v2291, %v2483
      %v2485 = vpop.f32.mrf.mxu0
      %v2486 = vadd.f32 %v2293, %v2485
      %v2487 = vpop.f32.mrf.mxu0
      %v2488 = vadd.f32 %v2295, %v2487
      %v2489 = vpop.f32.mrf.mxu0
      %v2490 = vadd.f32 %v2297, %v2489
      %2491 = vmatprep.mubr.bf16.mxu0 %v899
      %2492 = vmatmul.mubr.bf16.gmra.mxu0 %v898
      %v2493 = vpop.f32.mrf.mxu0
      %v2494 = vadd.f32 %v2301, %v2493
      %v2495 = vpop.f32.mrf.mxu0
      %v2496 = vadd.f32 %v2303, %v2495
      %v2497 = vpop.f32.mrf.mxu0
      %v2498 = vadd.f32 %v2305, %v2497
      %v2499 = vpop.f32.mrf.mxu0
      %v2500 = vadd.f32 %v2307, %v2499
      %2501 = vdwg.mxu0
      %2502 = vmatprep.subr.bf16.mxu0 %v1720
      %2503 = vmatpush1.bf16.msra.mxu0 %v1719
      %2504 = vmatprep.subr.bf16.mxu0 %v1713
      %2505 = vmatpush1.bf16.msra.mxu0 %v1712
      %2506 = vmatprep.subr.bf16.mxu0 %v1706
      %2507 = vmatpush1.bf16.msra.mxu0 %v1705
      %2508 = vmatprep.subr.bf16.mxu0 %v1699
      %2509 = vmatpush1.bf16.msra.mxu0 %v1698
      %2510 = vmatprep.subr.bf16.mxu0 %v1692
      %2511 = vmatpush1.bf16.msra.mxu0 %v1691
      %2512 = vmatprep.subr.bf16.mxu0 %v1685
      %2513 = vmatpush1.bf16.msra.mxu0 %v1684
      %2514 = vmatprep.subr.bf16.mxu0 %v1678
      %2515 = vmatpush1.bf16.msra.mxu0 %v1677
      %2516 = vmatprep.subr.bf16.mxu0 %v1671
      %2517 = vmatpush1.bf16.msra.mxu0 %v1670
      %2518 = vmatprep.subr.bf16.mxu0 %v1776
      %2519 = vmatpush2.bf16.msra.mxu0 %v1775
      %2520 = vmatprep.subr.bf16.mxu0 %v1769
      %2521 = vmatpush2.bf16.msra.mxu0 %v1768
      %2522 = vmatprep.subr.bf16.mxu0 %v1762
      %2523 = vmatpush2.bf16.msra.mxu0 %v1761
      %2524 = vmatprep.subr.bf16.mxu0 %v1755
      %2525 = vmatpush2.bf16.msra.mxu0 %v1754
      %2526 = vmatprep.subr.bf16.mxu0 %v1748
      %2527 = vmatpush2.bf16.msra.mxu0 %v1747
      %2528 = vmatprep.subr.bf16.mxu0 %v1741
      %2529 = vmatpush2.bf16.msra.mxu0 %v1740
      %2530 = vmatprep.subr.bf16.mxu0 %v1734
      %2531 = vmatpush2.bf16.msra.mxu0 %v1733
      %2532 = vmatprep.subr.bf16.mxu0 %v1727
      %2533 = vmatpush2.bf16.msra.mxu0 %v1726
      %2534 = vmatprep.mubr.bf16.mxu0 %v837
      %2535 = vmatmul.mubr.bf16.gmra.mxu0 %v836
      %v2536 = vpop.f32.mrf.mxu0
      %v2537 = vadd.f32 %v620, %v2536
      %v2538 = vpop.f32.mrf.mxu0
      %v2539 = vadd.f32 %v624, %v2538
      %v2540 = vpop.f32.mrf.mxu0
      %v2541 = vadd.f32 %v620, %v2540
      %v2542 = vpop.f32.mrf.mxu0
      %v2543 = vadd.f32 %v624, %v2542
      %2544 = vmatprep.mubr.bf16.mxu0 %v841
      %2545 = vmatmul.mubr.bf16.gmra.mxu0 %v840
      %v2546 = vpop.f32.mrf.mxu0
      %v2547 = vadd.f32 %v620, %v2546
      %v2548 = vpop.f32.mrf.mxu0
      %v2549 = vadd.f32 %v624, %v2548
      %v2550 = vpop.f32.mrf.mxu0
      %v2551 = vadd.f32 %v620, %v2550
      %v2552 = vpop.f32.mrf.mxu0
      %v2553 = vadd.f32 %v624, %v2552
      %2554 = vmatprep.mubr.bf16.mxu0 %v845
      %2555 = vmatmul.mubr.bf16.gmra.mxu0 %v844
      %v2556 = vpop.f32.mrf.mxu0
      %v2557 = vadd.f32 %v620, %v2556
      %v2558 = vpop.f32.mrf.mxu0
      %v2559 = vadd.f32 %v624, %v2558
      %v2560 = vpop.f32.mrf.mxu0
      %v2561 = vadd.f32 %v620, %v2560
      %v2562 = vpop.f32.mrf.mxu0
      %v2563 = vadd.f32 %v624, %v2562
      %2564 = vmatprep.mubr.bf16.mxu0 %v849
      %2565 = vmatmul.mubr.bf16.gmra.mxu0 %v848
      %v2566 = vpop.f32.mrf.mxu0
      %v2567 = vadd.f32 %v620, %v2566
      %v2568 = vpop.f32.mrf.mxu0
      %v2569 = vadd.f32 %v624, %v2568
      %v2570 = vpop.f32.mrf.mxu0
      %v2571 = vadd.f32 %v620, %v2570
      %v2572 = vpop.f32.mrf.mxu0
      %v2573 = vadd.f32 %v624, %v2572
      %2574 = vmatprep.mubr.bf16.mxu0 %v853
      %2575 = vmatmul.mubr.bf16.gmra.mxu0 %v852
      %v2576 = vpop.f32.mrf.mxu0
      %v2577 = vadd.f32 %v620, %v2576
      %v2578 = vpop.f32.mrf.mxu0
      %v2579 = vadd.f32 %v624, %v2578
      %v2580 = vpop.f32.mrf.mxu0
      %v2581 = vadd.f32 %v620, %v2580
      %v2582 = vpop.f32.mrf.mxu0
      %v2583 = vadd.f32 %v624, %v2582
      %2584 = vmatprep.mubr.bf16.mxu0 %v857
      %2585 = vmatmul.mubr.bf16.gmra.mxu0 %v856
      %v2586 = vpop.f32.mrf.mxu0
      %v2587 = vadd.f32 %v620, %v2586
      %v2588 = vpop.f32.mrf.mxu0
      %v2589 = vadd.f32 %v624, %v2588
      %v2590 = vpop.f32.mrf.mxu0
      %v2591 = vadd.f32 %v620, %v2590
      %v2592 = vpop.f32.mrf.mxu0
      %v2593 = vadd.f32 %v624, %v2592
      %2594 = vmatprep.mubr.bf16.mxu0 %v861
      %2595 = vmatmul.mubr.bf16.gmra.mxu0 %v860
      %v2596 = vpop.f32.mrf.mxu0
      %v2597 = vadd.f32 %v620, %v2596
      %v2598 = vpop.f32.mrf.mxu0
      %v2599 = vadd.f32 %v624, %v2598
      %v2600 = vpop.f32.mrf.mxu0
      %v2601 = vadd.f32 %v620, %v2600
      %v2602 = vpop.f32.mrf.mxu0
      %v2603 = vadd.f32 %v624, %v2602
      %2604 = vmatprep.mubr.bf16.mxu0 %v865
      %2605 = vmatmul.mubr.bf16.gmra.mxu0 %v864
      %v2606 = vpop.f32.mrf.mxu0
      %v2607 = vadd.f32 %v620, %v2606
      %v2608 = vpop.f32.mrf.mxu0
      %v2609 = vadd.f32 %v624, %v2608
      %v2610 = vpop.f32.mrf.mxu0
      %v2611 = vadd.f32 %v620, %v2610
      %v2612 = vpop.f32.mrf.mxu0
      %v2613 = vadd.f32 %v624, %v2612
      %2614 = vmatprep.mubr.bf16.mxu0 %v869
      %2615 = vmatmul.mubr.bf16.gmra.mxu0 %v868
      %v2616 = vpop.f32.mrf.mxu0
      %v2617 = vadd.f32 %v620, %v2616
      %v2618 = vpop.f32.mrf.mxu0
      %v2619 = vadd.f32 %v624, %v2618
      %v2620 = vpop.f32.mrf.mxu0
      %v2621 = vadd.f32 %v620, %v2620
      %v2622 = vpop.f32.mrf.mxu0
      %v2623 = vadd.f32 %v624, %v2622
      %2624 = vmatprep.mubr.bf16.mxu0 %v873
      %2625 = vmatmul.mubr.bf16.gmra.mxu0 %v872
      %v2626 = vpop.f32.mrf.mxu0
      %v2627 = vadd.f32 %v620, %v2626
      %v2628 = vpop.f32.mrf.mxu0
      %v2629 = vadd.f32 %v624, %v2628
      %v2630 = vpop.f32.mrf.mxu0
      %v2631 = vadd.f32 %v620, %v2630
      %v2632 = vpop.f32.mrf.mxu0
      %v2633 = vadd.f32 %v624, %v2632
      %2634 = vmatprep.mubr.bf16.mxu0 %v877
      %2635 = vmatmul.mubr.bf16.gmra.mxu0 %v876
      %v2636 = vpop.f32.mrf.mxu0
      %v2637 = vadd.f32 %v620, %v2636
      %v2638 = vpop.f32.mrf.mxu0
      %v2639 = vadd.f32 %v624, %v2638
      %v2640 = vpop.f32.mrf.mxu0
      %v2641 = vadd.f32 %v620, %v2640
      %v2642 = vpop.f32.mrf.mxu0
      %v2643 = vadd.f32 %v624, %v2642
      %2644 = vmatprep.mubr.bf16.mxu0 %v881
      %2645 = vmatmul.mubr.bf16.gmra.mxu0 %v880
      %v2646 = vpop.f32.mrf.mxu0
      %v2647 = vadd.f32 %v620, %v2646
      %v2648 = vpop.f32.mrf.mxu0
      %v2649 = vadd.f32 %v624, %v2648
      %v2650 = vpop.f32.mrf.mxu0
      %v2651 = vadd.f32 %v620, %v2650
      %v2652 = vpop.f32.mrf.mxu0
      %v2653 = vadd.f32 %v624, %v2652
      %2654 = vmatprep.mubr.bf16.mxu0 %v885
      %2655 = vmatmul.mubr.bf16.gmra.mxu0 %v884
      %v2656 = vpop.f32.mrf.mxu0
      %v2657 = vadd.f32 %v620, %v2656
      %v2658 = vpop.f32.mrf.mxu0
      %v2659 = vadd.f32 %v624, %v2658
      %v2660 = vpop.f32.mrf.mxu0
      %v2661 = vadd.f32 %v620, %v2660
      %v2662 = vpop.f32.mrf.mxu0
      %v2663 = vadd.f32 %v624, %v2662
      %2664 = vmatprep.mubr.bf16.mxu0 %v889
      %2665 = vmatmul.mubr.bf16.gmra.mxu0 %v888
      %v2666 = vpop.f32.mrf.mxu0
      %v2667 = vadd.f32 %v620, %v2666
      %v2668 = vpop.f32.mrf.mxu0
      %v2669 = vadd.f32 %v624, %v2668
      %v2670 = vpop.f32.mrf.mxu0
      %v2671 = vadd.f32 %v620, %v2670
      %v2672 = vpop.f32.mrf.mxu0
      %v2673 = vadd.f32 %v624, %v2672
      %2674 = vmatprep.mubr.bf16.mxu0 %v893
      %2675 = vmatmul.mubr.bf16.gmra.mxu0 %v892
      %v2676 = vpop.f32.mrf.mxu0
      %v2677 = vadd.f32 %v620, %v2676
      %v2678 = vpop.f32.mrf.mxu0
      %v2679 = vadd.f32 %v624, %v2678
      %v2680 = vpop.f32.mrf.mxu0
      %v2681 = vadd.f32 %v620, %v2680
      %v2682 = vpop.f32.mrf.mxu0
      %v2683 = vadd.f32 %v624, %v2682
      %2684 = vmatprep.mubr.bf16.mxu0 %v897
      %2685 = vmatmul.mubr.bf16.gmra.mxu0 %v896
      %v2686 = vpop.f32.mrf.mxu0
      %v2687 = vadd.f32 %v620, %v2686
      %v2688 = vpop.f32.mrf.mxu0
      %v2689 = vadd.f32 %v624, %v2688
      %v2690 = vpop.f32.mrf.mxu0
      %v2691 = vadd.f32 %v620, %v2690
      %v2692 = vpop.f32.mrf.mxu0
      %v2693 = vadd.f32 %v624, %v2692
      %2694 = vdwg.mxu0
      %2695 = vmatprep.subr.bf16.mxu0 %v1832
      %2696 = vmatpush1.bf16.msra.mxu0 %v1831
      %2697 = vmatprep.subr.bf16.mxu0 %v1825
      %2698 = vmatpush1.bf16.msra.mxu0 %v1824
      %2699 = vmatprep.subr.bf16.mxu0 %v1818
      %2700 = vmatpush1.bf16.msra.mxu0 %v1817
      %2701 = vmatprep.subr.bf16.mxu0 %v1811
      %2702 = vmatpush1.bf16.msra.mxu0 %v1810
      %2703 = vmatprep.subr.bf16.mxu0 %v1804
      %2704 = vmatpush1.bf16.msra.mxu0 %v1803
      %2705 = vmatprep.subr.bf16.mxu0 %v1797
      %2706 = vmatpush1.bf16.msra.mxu0 %v1796
      %2707 = vmatprep.subr.bf16.mxu0 %v1790
      %2708 = vmatpush1.bf16.msra.mxu0 %v1789
      %2709 = vmatprep.subr.bf16.mxu0 %v1783
      %2710 = vmatpush1.bf16.msra.mxu0 %v1782
      %2711 = vmatprep.subr.bf16.mxu0 %v1888
      %2712 = vmatpush2.bf16.msra.mxu0 %v1887
      %2713 = vmatprep.subr.bf16.mxu0 %v1881
      %2714 = vmatpush2.bf16.msra.mxu0 %v1880
      %2715 = vmatprep.subr.bf16.mxu0 %v1874
      %2716 = vmatpush2.bf16.msra.mxu0 %v1873
      %2717 = vmatprep.subr.bf16.mxu0 %v1867
      %2718 = vmatpush2.bf16.msra.mxu0 %v1866
      %2719 = vmatprep.subr.bf16.mxu0 %v1860
      %2720 = vmatpush2.bf16.msra.mxu0 %v1859
      %2721 = vmatprep.subr.bf16.mxu0 %v1853
      %2722 = vmatpush2.bf16.msra.mxu0 %v1852
      %2723 = vmatprep.subr.bf16.mxu0 %v1846
      %2724 = vmatpush2.bf16.msra.mxu0 %v1845
      %2725 = vmatprep.subr.bf16.mxu0 %v1839
      %2726 = vmatpush2.bf16.msra.mxu0 %v1838
      %2727 = vmatprep.mubr.bf16.mxu0 %v839
      %2728 = vmatmul.mubr.bf16.gmra.mxu0 %v838
      %v2729 = vpop.f32.mrf.mxu0
      %v2730 = vadd.f32 %v2537, %v2729
      %v2731 = vpop.f32.mrf.mxu0
      %v2732 = vadd.f32 %v2539, %v2731
      %v2733 = vpop.f32.mrf.mxu0
      %v2734 = vadd.f32 %v2541, %v2733
      %v2735 = vpop.f32.mrf.mxu0
      %v2736 = vadd.f32 %v2543, %v2735
      %2737 = vmatprep.mubr.bf16.mxu0 %v843
      %2738 = vmatmul.mubr.bf16.gmra.mxu0 %v842
      %v2739 = vpop.f32.mrf.mxu0
      %v2740 = vadd.f32 %v2547, %v2739
      %v2741 = vpop.f32.mrf.mxu0
      %v2742 = vadd.f32 %v2549, %v2741
      %v2743 = vpop.f32.mrf.mxu0
      %v2744 = vadd.f32 %v2551, %v2743
      %v2745 = vpop.f32.mrf.mxu0
      %v2746 = vadd.f32 %v2553, %v2745
      %2747 = vmatprep.mubr.bf16.mxu0 %v847
      %2748 = vmatmul.mubr.bf16.gmra.mxu0 %v846
      %v2749 = vpop.f32.mrf.mxu0
      %v2750 = vadd.f32 %v2557, %v2749
      %v2751 = vpop.f32.mrf.mxu0
      %v2752 = vadd.f32 %v2559, %v2751
      %v2753 = vpop.f32.mrf.mxu0
      %v2754 = vadd.f32 %v2561, %v2753
      %v2755 = vpop.f32.mrf.mxu0
      %v2756 = vadd.f32 %v2563, %v2755
      %2757 = vmatprep.mubr.bf16.mxu0 %v851
      %2758 = vmatmul.mubr.bf16.gmra.mxu0 %v850
      %v2759 = vpop.f32.mrf.mxu0
      %v2760 = vadd.f32 %v2567, %v2759
      %v2761 = vpop.f32.mrf.mxu0
      %v2762 = vadd.f32 %v2569, %v2761
      %v2763 = vpop.f32.mrf.mxu0
      %v2764 = vadd.f32 %v2571, %v2763
      %v2765 = vpop.f32.mrf.mxu0
      %v2766 = vadd.f32 %v2573, %v2765
      %2767 = vmatprep.mubr.bf16.mxu0 %v855
      %2768 = vmatmul.mubr.bf16.gmra.mxu0 %v854
      %v2769 = vpop.f32.mrf.mxu0
      %v2770 = vadd.f32 %v2577, %v2769
      %v2771 = vpop.f32.mrf.mxu0
      %v2772 = vadd.f32 %v2579, %v2771
      %v2773 = vpop.f32.mrf.mxu0
      %v2774 = vadd.f32 %v2581, %v2773
      %v2775 = vpop.f32.mrf.mxu0
      %v2776 = vadd.f32 %v2583, %v2775
      %2777 = vmatprep.mubr.bf16.mxu0 %v859
      %2778 = vmatmul.mubr.bf16.gmra.mxu0 %v858
      %v2779 = vpop.f32.mrf.mxu0
      %v2780 = vadd.f32 %v2587, %v2779
      %v2781 = vpop.f32.mrf.mxu0
      %v2782 = vadd.f32 %v2589, %v2781
      %v2783 = vpop.f32.mrf.mxu0
      %v2784 = vadd.f32 %v2591, %v2783
      %v2785 = vpop.f32.mrf.mxu0
      %v2786 = vadd.f32 %v2593, %v2785
      %2787 = vmatprep.mubr.bf16.mxu0 %v863
      %2788 = vmatmul.mubr.bf16.gmra.mxu0 %v862
      %v2789 = vpop.f32.mrf.mxu0
      %v2790 = vadd.f32 %v2597, %v2789
      %v2791 = vpop.f32.mrf.mxu0
      %v2792 = vadd.f32 %v2599, %v2791
      %v2793 = vpop.f32.mrf.mxu0
      %v2794 = vadd.f32 %v2601, %v2793
      %v2795 = vpop.f32.mrf.mxu0
      %v2796 = vadd.f32 %v2603, %v2795
      %2797 = vmatprep.mubr.bf16.mxu0 %v867
      %2798 = vmatmul.mubr.bf16.gmra.mxu0 %v866
      %v2799 = vpop.f32.mrf.mxu0
      %v2800 = vadd.f32 %v2607, %v2799
      %v2801 = vpop.f32.mrf.mxu0
      %v2802 = vadd.f32 %v2609, %v2801
      %v2803 = vpop.f32.mrf.mxu0
      %v2804 = vadd.f32 %v2611, %v2803
      %v2805 = vpop.f32.mrf.mxu0
      %v2806 = vadd.f32 %v2613, %v2805
      %2807 = vmatprep.mubr.bf16.mxu0 %v871
      %2808 = vmatmul.mubr.bf16.gmra.mxu0 %v870
      %v2809 = vpop.f32.mrf.mxu0
      %v2810 = vadd.f32 %v2617, %v2809
      %v2811 = vpop.f32.mrf.mxu0
      %v2812 = vadd.f32 %v2619, %v2811
      %v2813 = vpop.f32.mrf.mxu0
      %v2814 = vadd.f32 %v2621, %v2813
      %v2815 = vpop.f32.mrf.mxu0
      %v2816 = vadd.f32 %v2623, %v2815
      %2817 = vmatprep.mubr.bf16.mxu0 %v875
      %2818 = vmatmul.mubr.bf16.gmra.mxu0 %v874
      %v2819 = vpop.f32.mrf.mxu0
      %v2820 = vadd.f32 %v2627, %v2819
      %v2821 = vpop.f32.mrf.mxu0
      %v2822 = vadd.f32 %v2629, %v2821
      %v2823 = vpop.f32.mrf.mxu0
      %v2824 = vadd.f32 %v2631, %v2823
      %v2825 = vpop.f32.mrf.mxu0
      %v2826 = vadd.f32 %v2633, %v2825
      %2827 = vmatprep.mubr.bf16.mxu0 %v879
      %2828 = vmatmul.mubr.bf16.gmra.mxu0 %v878
      %v2829 = vpop.f32.mrf.mxu0
      %v2830 = vadd.f32 %v2637, %v2829
      %v2831 = vpop.f32.mrf.mxu0
      %v2832 = vadd.f32 %v2639, %v2831
      %v2833 = vpop.f32.mrf.mxu0
      %v2834 = vadd.f32 %v2641, %v2833
      %v2835 = vpop.f32.mrf.mxu0
      %v2836 = vadd.f32 %v2643, %v2835
      %2837 = vmatprep.mubr.bf16.mxu0 %v883
      %2838 = vmatmul.mubr.bf16.gmra.mxu0 %v882
      %v2839 = vpop.f32.mrf.mxu0
      %v2840 = vadd.f32 %v2647, %v2839
      %v2841 = vpop.f32.mrf.mxu0
      %v2842 = vadd.f32 %v2649, %v2841
      %v2843 = vpop.f32.mrf.mxu0
      %v2844 = vadd.f32 %v2651, %v2843
      %v2845 = vpop.f32.mrf.mxu0
      %v2846 = vadd.f32 %v2653, %v2845
      %2847 = vmatprep.mubr.bf16.mxu0 %v887
      %2848 = vmatmul.mubr.bf16.gmra.mxu0 %v886
      %v2849 = vpop.f32.mrf.mxu0
      %v2850 = vadd.f32 %v2657, %v2849
      %v2851 = vpop.f32.mrf.mxu0
      %v2852 = vadd.f32 %v2659, %v2851
      %v2853 = vpop.f32.mrf.mxu0
      %v2854 = vadd.f32 %v2661, %v2853
      %v2855 = vpop.f32.mrf.mxu0
      %v2856 = vadd.f32 %v2663, %v2855
      %2857 = vmatprep.mubr.bf16.mxu0 %v891
      %2858 = vmatmul.mubr.bf16.gmra.mxu0 %v890
      %v2859 = vpop.f32.mrf.mxu0
      %v2860 = vadd.f32 %v2667, %v2859
      %v2861 = vpop.f32.mrf.mxu0
      %v2862 = vadd.f32 %v2669, %v2861
      %v2863 = vpop.f32.mrf.mxu0
      %v2864 = vadd.f32 %v2671, %v2863
      %v2865 = vpop.f32.mrf.mxu0
      %v2866 = vadd.f32 %v2673, %v2865
      %2867 = vmatprep.mubr.bf16.mxu0 %v895
      %2868 = vmatmul.mubr.bf16.gmra.mxu0 %v894
      %v2869 = vpop.f32.mrf.mxu0
      %v2870 = vadd.f32 %v2677, %v2869
      %v2871 = vpop.f32.mrf.mxu0
      %v2872 = vadd.f32 %v2679, %v2871
      %v2873 = vpop.f32.mrf.mxu0
      %v2874 = vadd.f32 %v2681, %v2873
      %v2875 = vpop.f32.mrf.mxu0
      %v2876 = vadd.f32 %v2683, %v2875
      %2877 = vmatprep.mubr.bf16.mxu0 %v899
      %2878 = vmatmul.mubr.bf16.gmra.mxu0 %v898
      %v2879 = vpop.f32.mrf.mxu0
      %v2880 = vadd.f32 %v2687, %v2879
      %v2881 = vpop.f32.mrf.mxu0
      %v2882 = vadd.f32 %v2689, %v2881
      %v2883 = vpop.f32.mrf.mxu0
      %v2884 = vadd.f32 %v2691, %v2883
      %v2885 = vpop.f32.mrf.mxu0
      %v2886 = vadd.f32 %v2693, %v2885
      %2887 = vdwg.mxu0
      %2888 = vmatprep.subr.bf16.mxu0 %v1722
      %2889 = vmatpush1.bf16.msra.mxu0 %v1721
      %2890 = vmatprep.subr.bf16.mxu0 %v1715
      %2891 = vmatpush1.bf16.msra.mxu0 %v1714
      %2892 = vmatprep.subr.bf16.mxu0 %v1708
      %2893 = vmatpush1.bf16.msra.mxu0 %v1707
      %2894 = vmatprep.subr.bf16.mxu0 %v1701
      %2895 = vmatpush1.bf16.msra.mxu0 %v1700
      %2896 = vmatprep.subr.bf16.mxu0 %v1694
      %2897 = vmatpush1.bf16.msra.mxu0 %v1693
      %2898 = vmatprep.subr.bf16.mxu0 %v1687
      %2899 = vmatpush1.bf16.msra.mxu0 %v1686
      %2900 = vmatprep.subr.bf16.mxu0 %v1680
      %2901 = vmatpush1.bf16.msra.mxu0 %v1679
      %2902 = vmatprep.subr.bf16.mxu0 %v1673
      %2903 = vmatpush1.bf16.msra.mxu0 %v1672
      %2904 = vmatprep.subr.bf16.mxu0 %v1778
      %2905 = vmatpush2.bf16.msra.mxu0 %v1777
      %2906 = vmatprep.subr.bf16.mxu0 %v1771
      %2907 = vmatpush2.bf16.msra.mxu0 %v1770
      %2908 = vmatprep.subr.bf16.mxu0 %v1764
      %2909 = vmatpush2.bf16.msra.mxu0 %v1763
      %2910 = vmatprep.subr.bf16.mxu0 %v1757
      %2911 = vmatpush2.bf16.msra.mxu0 %v1756
      %2912 = vmatprep.subr.bf16.mxu0 %v1750
      %2913 = vmatpush2.bf16.msra.mxu0 %v1749
      %2914 = vmatprep.subr.bf16.mxu0 %v1743
      %2915 = vmatpush2.bf16.msra.mxu0 %v1742
      %2916 = vmatprep.subr.bf16.mxu0 %v1736
      %2917 = vmatpush2.bf16.msra.mxu0 %v1735
      %2918 = vmatprep.subr.bf16.mxu0 %v1729
      %2919 = vmatpush2.bf16.msra.mxu0 %v1728
      %2920 = vmatprep.mubr.bf16.mxu0 %v837
      %2921 = vmatmul.mubr.bf16.gmra.mxu0 %v836
      %v2922 = vpop.f32.mrf.mxu0
      %v2923 = vadd.f32 %v628, %v2922
      %v2924 = vpop.f32.mrf.mxu0
      %v2925 = vadd.f32 %v632, %v2924
      %v2926 = vpop.f32.mrf.mxu0
      %v2927 = vadd.f32 %v628, %v2926
      %v2928 = vpop.f32.mrf.mxu0
      %v2929 = vadd.f32 %v632, %v2928
      %2930 = vmatprep.mubr.bf16.mxu0 %v841
      %2931 = vmatmul.mubr.bf16.gmra.mxu0 %v840
      %v2932 = vpop.f32.mrf.mxu0
      %v2933 = vadd.f32 %v628, %v2932
      %v2934 = vpop.f32.mrf.mxu0
      %v2935 = vadd.f32 %v632, %v2934
      %v2936 = vpop.f32.mrf.mxu0
      %v2937 = vadd.f32 %v628, %v2936
      %v2938 = vpop.f32.mrf.mxu0
      %v2939 = vadd.f32 %v632, %v2938
      %2940 = vmatprep.mubr.bf16.mxu0 %v845
      %2941 = vmatmul.mubr.bf16.gmra.mxu0 %v844
      %v2942 = vpop.f32.mrf.mxu0
      %v2943 = vadd.f32 %v628, %v2942
      %v2944 = vpop.f32.mrf.mxu0
      %v2945 = vadd.f32 %v632, %v2944
      %v2946 = vpop.f32.mrf.mxu0
      %v2947 = vadd.f32 %v628, %v2946
      %v2948 = vpop.f32.mrf.mxu0
      %v2949 = vadd.f32 %v632, %v2948
      %2950 = vmatprep.mubr.bf16.mxu0 %v849
      %2951 = vmatmul.mubr.bf16.gmra.mxu0 %v848
      %v2952 = vpop.f32.mrf.mxu0
      %v2953 = vadd.f32 %v628, %v2952
      %v2954 = vpop.f32.mrf.mxu0
      %v2955 = vadd.f32 %v632, %v2954
      %v2956 = vpop.f32.mrf.mxu0
      %v2957 = vadd.f32 %v628, %v2956
      %v2958 = vpop.f32.mrf.mxu0
      %v2959 = vadd.f32 %v632, %v2958
      %2960 = vmatprep.mubr.bf16.mxu0 %v853
      %2961 = vmatmul.mubr.bf16.gmra.mxu0 %v852
      %v2962 = vpop.f32.mrf.mxu0
      %v2963 = vadd.f32 %v628, %v2962
      %v2964 = vpop.f32.mrf.mxu0
      %v2965 = vadd.f32 %v632, %v2964
      %v2966 = vpop.f32.mrf.mxu0
      %v2967 = vadd.f32 %v628, %v2966
      %v2968 = vpop.f32.mrf.mxu0
      %v2969 = vadd.f32 %v632, %v2968
      %2970 = vmatprep.mubr.bf16.mxu0 %v857
      %2971 = vmatmul.mubr.bf16.gmra.mxu0 %v856
      %v2972 = vpop.f32.mrf.mxu0
      %v2973 = vadd.f32 %v628, %v2972
      %v2974 = vpop.f32.mrf.mxu0
      %v2975 = vadd.f32 %v632, %v2974
      %v2976 = vpop.f32.mrf.mxu0
      %v2977 = vadd.f32 %v628, %v2976
      %v2978 = vpop.f32.mrf.mxu0
      %v2979 = vadd.f32 %v632, %v2978
      %2980 = vmatprep.mubr.bf16.mxu0 %v861
      %2981 = vmatmul.mubr.bf16.gmra.mxu0 %v860
      %v2982 = vpop.f32.mrf.mxu0
      %v2983 = vadd.f32 %v628, %v2982
      %v2984 = vpop.f32.mrf.mxu0
      %v2985 = vadd.f32 %v632, %v2984
      %v2986 = vpop.f32.mrf.mxu0
      %v2987 = vadd.f32 %v628, %v2986
      %v2988 = vpop.f32.mrf.mxu0
      %v2989 = vadd.f32 %v632, %v2988
      %2990 = vmatprep.mubr.bf16.mxu0 %v865
      %2991 = vmatmul.mubr.bf16.gmra.mxu0 %v864
      %v2992 = vpop.f32.mrf.mxu0
      %v2993 = vadd.f32 %v628, %v2992
      %v2994 = vpop.f32.mrf.mxu0
      %v2995 = vadd.f32 %v632, %v2994
      %v2996 = vpop.f32.mrf.mxu0
      %v2997 = vadd.f32 %v628, %v2996
      %v2998 = vpop.f32.mrf.mxu0
      %v2999 = vadd.f32 %v632, %v2998
      %3000 = vmatprep.mubr.bf16.mxu0 %v869
      %3001 = vmatmul.mubr.bf16.gmra.mxu0 %v868
      %v3002 = vpop.f32.mrf.mxu0
      %v3003 = vadd.f32 %v628, %v3002
      %v3004 = vpop.f32.mrf.mxu0
      %v3005 = vadd.f32 %v632, %v3004
      %v3006 = vpop.f32.mrf.mxu0
      %v3007 = vadd.f32 %v628, %v3006
      %v3008 = vpop.f32.mrf.mxu0
      %v3009 = vadd.f32 %v632, %v3008
      %3010 = vmatprep.mubr.bf16.mxu0 %v873
      %3011 = vmatmul.mubr.bf16.gmra.mxu0 %v872
      %v3012 = vpop.f32.mrf.mxu0
      %v3013 = vadd.f32 %v628, %v3012
      %v3014 = vpop.f32.mrf.mxu0
      %v3015 = vadd.f32 %v632, %v3014
      %v3016 = vpop.f32.mrf.mxu0
      %v3017 = vadd.f32 %v628, %v3016
      %v3018 = vpop.f32.mrf.mxu0
      %v3019 = vadd.f32 %v632, %v3018
      %3020 = vmatprep.mubr.bf16.mxu0 %v877
      %3021 = vmatmul.mubr.bf16.gmra.mxu0 %v876
      %v3022 = vpop.f32.mrf.mxu0
      %v3023 = vadd.f32 %v628, %v3022
      %v3024 = vpop.f32.mrf.mxu0
      %v3025 = vadd.f32 %v632, %v3024
      %v3026 = vpop.f32.mrf.mxu0
      %v3027 = vadd.f32 %v628, %v3026
      %v3028 = vpop.f32.mrf.mxu0
      %v3029 = vadd.f32 %v632, %v3028
      %3030 = vmatprep.mubr.bf16.mxu0 %v881
      %3031 = vmatmul.mubr.bf16.gmra.mxu0 %v880
      %v3032 = vpop.f32.mrf.mxu0
      %v3033 = vadd.f32 %v628, %v3032
      %v3034 = vpop.f32.mrf.mxu0
      %v3035 = vadd.f32 %v632, %v3034
      %v3036 = vpop.f32.mrf.mxu0
      %v3037 = vadd.f32 %v628, %v3036
      %v3038 = vpop.f32.mrf.mxu0
      %v3039 = vadd.f32 %v632, %v3038
      %3040 = vmatprep.mubr.bf16.mxu0 %v885
      %3041 = vmatmul.mubr.bf16.gmra.mxu0 %v884
      %v3042 = vpop.f32.mrf.mxu0
      %v3043 = vadd.f32 %v628, %v3042
      %v3044 = vpop.f32.mrf.mxu0
      %v3045 = vadd.f32 %v632, %v3044
      %v3046 = vpop.f32.mrf.mxu0
      %v3047 = vadd.f32 %v628, %v3046
      %v3048 = vpop.f32.mrf.mxu0
      %v3049 = vadd.f32 %v632, %v3048
      %3050 = vmatprep.mubr.bf16.mxu0 %v889
      %3051 = vmatmul.mubr.bf16.gmra.mxu0 %v888
      %v3052 = vpop.f32.mrf.mxu0
      %v3053 = vadd.f32 %v628, %v3052
      %v3054 = vpop.f32.mrf.mxu0
      %v3055 = vadd.f32 %v632, %v3054
      %v3056 = vpop.f32.mrf.mxu0
      %v3057 = vadd.f32 %v628, %v3056
      %v3058 = vpop.f32.mrf.mxu0
      %v3059 = vadd.f32 %v632, %v3058
      %3060 = vmatprep.mubr.bf16.mxu0 %v893
      %3061 = vmatmul.mubr.bf16.gmra.mxu0 %v892
      %v3062 = vpop.f32.mrf.mxu0
      %v3063 = vadd.f32 %v628, %v3062
      %v3064 = vpop.f32.mrf.mxu0
      %v3065 = vadd.f32 %v632, %v3064
      %v3066 = vpop.f32.mrf.mxu0
      %v3067 = vadd.f32 %v628, %v3066
      %v3068 = vpop.f32.mrf.mxu0
      %v3069 = vadd.f32 %v632, %v3068
      %3070 = vmatprep.mubr.bf16.mxu0 %v897
      %3071 = vmatmul.mubr.bf16.gmra.mxu0 %v896
      %v3072 = vpop.f32.mrf.mxu0
      %v3073 = vadd.f32 %v628, %v3072
      %v3074 = vpop.f32.mrf.mxu0
      %v3075 = vadd.f32 %v632, %v3074
      %v3076 = vpop.f32.mrf.mxu0
      %v3077 = vadd.f32 %v628, %v3076
      %v3078 = vpop.f32.mrf.mxu0
      %v3079 = vadd.f32 %v632, %v3078
      %3080 = vdwg.mxu0
      %3081 = vmatprep.subr.bf16.mxu0 %v1834
      %3082 = vmatpush1.bf16.msra.mxu0 %v1833
      %3083 = vmatprep.subr.bf16.mxu0 %v1827
      %3084 = vmatpush1.bf16.msra.mxu0 %v1826
      %3085 = vmatprep.subr.bf16.mxu0 %v1820
      %3086 = vmatpush1.bf16.msra.mxu0 %v1819
      %3087 = vmatprep.subr.bf16.mxu0 %v1813
      %3088 = vmatpush1.bf16.msra.mxu0 %v1812
      %3089 = vmatprep.subr.bf16.mxu0 %v1806
      %3090 = vmatpush1.bf16.msra.mxu0 %v1805
      %3091 = vmatprep.subr.bf16.mxu0 %v1799
      %3092 = vmatpush1.bf16.msra.mxu0 %v1798
      %3093 = vmatprep.subr.bf16.mxu0 %v1792
      %3094 = vmatpush1.bf16.msra.mxu0 %v1791
      %3095 = vmatprep.subr.bf16.mxu0 %v1785
      %3096 = vmatpush1.bf16.msra.mxu0 %v1784
      %3097 = vmatprep.subr.bf16.mxu0 %v1890
      %3098 = vmatpush2.bf16.msra.mxu0 %v1889
      %3099 = vmatprep.subr.bf16.mxu0 %v1883
      %3100 = vmatpush2.bf16.msra.mxu0 %v1882
      %3101 = vmatprep.subr.bf16.mxu0 %v1876
      %3102 = vmatpush2.bf16.msra.mxu0 %v1875
      %3103 = vmatprep.subr.bf16.mxu0 %v1869
      %3104 = vmatpush2.bf16.msra.mxu0 %v1868
      %3105 = vmatprep.subr.bf16.mxu0 %v1862
      %3106 = vmatpush2.bf16.msra.mxu0 %v1861
      %3107 = vmatprep.subr.bf16.mxu0 %v1855
      %3108 = vmatpush2.bf16.msra.mxu0 %v1854
      %3109 = vmatprep.subr.bf16.mxu0 %v1848
      %3110 = vmatpush2.bf16.msra.mxu0 %v1847
      %3111 = vmatprep.subr.bf16.mxu0 %v1841
      %3112 = vmatpush2.bf16.msra.mxu0 %v1840
      %3113 = vmatprep.mubr.bf16.mxu0 %v839
      %3114 = vmatmul.mubr.bf16.gmra.mxu0 %v838
      %v3115 = vpop.f32.mrf.mxu0
      %v3116 = vadd.f32 %v2923, %v3115
      %v3117 = vpop.f32.mrf.mxu0
      %v3118 = vadd.f32 %v2925, %v3117
      %v3119 = vpop.f32.mrf.mxu0
      %v3120 = vadd.f32 %v2927, %v3119
      %v3121 = vpop.f32.mrf.mxu0
      %v3122 = vadd.f32 %v2929, %v3121
      %3123 = vmatprep.mubr.bf16.mxu0 %v843
      %3124 = vmatmul.mubr.bf16.gmra.mxu0 %v842
      %v3125 = vpop.f32.mrf.mxu0
      %v3126 = vadd.f32 %v2933, %v3125
      %v3127 = vpop.f32.mrf.mxu0
      %v3128 = vadd.f32 %v2935, %v3127
      %v3129 = vpop.f32.mrf.mxu0
      %v3130 = vadd.f32 %v2937, %v3129
      %v3131 = vpop.f32.mrf.mxu0
      %v3132 = vadd.f32 %v2939, %v3131
      %3133 = vmatprep.mubr.bf16.mxu0 %v847
      %3134 = vmatmul.mubr.bf16.gmra.mxu0 %v846
      %v3135 = vpop.f32.mrf.mxu0
      %v3136 = vadd.f32 %v2943, %v3135
      %v3137 = vpop.f32.mrf.mxu0
      %v3138 = vadd.f32 %v2945, %v3137
      %v3139 = vpop.f32.mrf.mxu0
      %v3140 = vadd.f32 %v2947, %v3139
      %v3141 = vpop.f32.mrf.mxu0
      %v3142 = vadd.f32 %v2949, %v3141
      %3143 = vmatprep.mubr.bf16.mxu0 %v851
      %3144 = vmatmul.mubr.bf16.gmra.mxu0 %v850
      %v3145 = vpop.f32.mrf.mxu0
      %v3146 = vadd.f32 %v2953, %v3145
      %v3147 = vpop.f32.mrf.mxu0
      %v3148 = vadd.f32 %v2955, %v3147
      %v3149 = vpop.f32.mrf.mxu0
      %v3150 = vadd.f32 %v2957, %v3149
      %v3151 = vpop.f32.mrf.mxu0
      %v3152 = vadd.f32 %v2959, %v3151
      %3153 = vmatprep.mubr.bf16.mxu0 %v855
      %3154 = vmatmul.mubr.bf16.gmra.mxu0 %v854
      %v3155 = vpop.f32.mrf.mxu0
      %v3156 = vadd.f32 %v2963, %v3155
      %v3157 = vpop.f32.mrf.mxu0
      %v3158 = vadd.f32 %v2965, %v3157
      %v3159 = vpop.f32.mrf.mxu0
      %v3160 = vadd.f32 %v2967, %v3159
      %v3161 = vpop.f32.mrf.mxu0
      %v3162 = vadd.f32 %v2969, %v3161
      %3163 = vmatprep.mubr.bf16.mxu0 %v859
      %3164 = vmatmul.mubr.bf16.gmra.mxu0 %v858
      %v3165 = vpop.f32.mrf.mxu0
      %v3166 = vadd.f32 %v2973, %v3165
      %v3167 = vpop.f32.mrf.mxu0
      %v3168 = vadd.f32 %v2975, %v3167
      %v3169 = vpop.f32.mrf.mxu0
      %v3170 = vadd.f32 %v2977, %v3169
      %v3171 = vpop.f32.mrf.mxu0
      %v3172 = vadd.f32 %v2979, %v3171
      %3173 = vmatprep.mubr.bf16.mxu0 %v863
      %3174 = vmatmul.mubr.bf16.gmra.mxu0 %v862
      %v3175 = vpop.f32.mrf.mxu0
      %v3176 = vadd.f32 %v2983, %v3175
      %v3177 = vpop.f32.mrf.mxu0
      %v3178 = vadd.f32 %v2985, %v3177
      %v3179 = vpop.f32.mrf.mxu0
      %v3180 = vadd.f32 %v2987, %v3179
      %v3181 = vpop.f32.mrf.mxu0
      %v3182 = vadd.f32 %v2989, %v3181
      %3183 = vmatprep.mubr.bf16.mxu0 %v867
      %3184 = vmatmul.mubr.bf16.gmra.mxu0 %v866
      %v3185 = vpop.f32.mrf.mxu0
      %v3186 = vadd.f32 %v2993, %v3185
      %v3187 = vpop.f32.mrf.mxu0
      %v3188 = vadd.f32 %v2995, %v3187
      %v3189 = vpop.f32.mrf.mxu0
      %v3190 = vadd.f32 %v2997, %v3189
      %v3191 = vpop.f32.mrf.mxu0
      %v3192 = vadd.f32 %v2999, %v3191
      %3193 = vmatprep.mubr.bf16.mxu0 %v871
      %3194 = vmatmul.mubr.bf16.gmra.mxu0 %v870
      %v3195 = vpop.f32.mrf.mxu0
      %v3196 = vadd.f32 %v3003, %v3195
      %v3197 = vpop.f32.mrf.mxu0
      %v3198 = vadd.f32 %v3005, %v3197
      %v3199 = vpop.f32.mrf.mxu0
      %v3200 = vadd.f32 %v3007, %v3199
      %v3201 = vpop.f32.mrf.mxu0
      %v3202 = vadd.f32 %v3009, %v3201
      %3203 = vmatprep.mubr.bf16.mxu0 %v875
      %3204 = vmatmul.mubr.bf16.gmra.mxu0 %v874
      %v3205 = vpop.f32.mrf.mxu0
      %v3206 = vadd.f32 %v3013, %v3205
      %v3207 = vpop.f32.mrf.mxu0
      %v3208 = vadd.f32 %v3015, %v3207
      %v3209 = vpop.f32.mrf.mxu0
      %v3210 = vadd.f32 %v3017, %v3209
      %v3211 = vpop.f32.mrf.mxu0
      %v3212 = vadd.f32 %v3019, %v3211
      %3213 = vmatprep.mubr.bf16.mxu0 %v879
      %3214 = vmatmul.mubr.bf16.gmra.mxu0 %v878
      %v3215 = vpop.f32.mrf.mxu0
      %v3216 = vadd.f32 %v3023, %v3215
      %v3217 = vpop.f32.mrf.mxu0
      %v3218 = vadd.f32 %v3025, %v3217
      %v3219 = vpop.f32.mrf.mxu0
      %v3220 = vadd.f32 %v3027, %v3219
      %v3221 = vpop.f32.mrf.mxu0
      %v3222 = vadd.f32 %v3029, %v3221
      %3223 = vmatprep.mubr.bf16.mxu0 %v883
      %3224 = vmatmul.mubr.bf16.gmra.mxu0 %v882
      %v3225 = vpop.f32.mrf.mxu0
      %v3226 = vadd.f32 %v3033, %v3225
      %v3227 = vpop.f32.mrf.mxu0
      %v3228 = vadd.f32 %v3035, %v3227
      %v3229 = vpop.f32.mrf.mxu0
      %v3230 = vadd.f32 %v3037, %v3229
      %v3231 = vpop.f32.mrf.mxu0
      %v3232 = vadd.f32 %v3039, %v3231
      %3233 = vmatprep.mubr.bf16.mxu0 %v887
      %3234 = vmatmul.mubr.bf16.gmra.mxu0 %v886
      %v3235 = vpop.f32.mrf.mxu0
      %v3236 = vadd.f32 %v3043, %v3235
      %v3237 = vpop.f32.mrf.mxu0
      %v3238 = vadd.f32 %v3045, %v3237
      %v3239 = vpop.f32.mrf.mxu0
      %v3240 = vadd.f32 %v3047, %v3239
      %v3241 = vpop.f32.mrf.mxu0
      %v3242 = vadd.f32 %v3049, %v3241
      %3243 = vmatprep.mubr.bf16.mxu0 %v891
      %3244 = vmatmul.mubr.bf16.gmra.mxu0 %v890
      %v3245 = vpop.f32.mrf.mxu0
      %v3246 = vadd.f32 %v3053, %v3245
      %v3247 = vpop.f32.mrf.mxu0
      %v3248 = vadd.f32 %v3055, %v3247
      %v3249 = vpop.f32.mrf.mxu0
      %v3250 = vadd.f32 %v3057, %v3249
      %v3251 = vpop.f32.mrf.mxu0
      %v3252 = vadd.f32 %v3059, %v3251
      %3253 = vmatprep.mubr.bf16.mxu0 %v895
      %3254 = vmatmul.mubr.bf16.gmra.mxu0 %v894
      %v3255 = vpop.f32.mrf.mxu0
      %v3256 = vadd.f32 %v3063, %v3255
      %v3257 = vpop.f32.mrf.mxu0
      %v3258 = vadd.f32 %v3065, %v3257
      %v3259 = vpop.f32.mrf.mxu0
      %v3260 = vadd.f32 %v3067, %v3259
      %v3261 = vpop.f32.mrf.mxu0
      %v3262 = vadd.f32 %v3069, %v3261
      %3263 = vmatprep.mubr.bf16.mxu0 %v899
      %3264 = vmatmul.mubr.bf16.gmra.mxu0 %v898
      %v3265 = vpop.f32.mrf.mxu0
      %v3266 = vadd.f32 %v3073, %v3265
      %v3267 = vpop.f32.mrf.mxu0
      %v3268 = vadd.f32 %v3075, %v3267
      %v3269 = vpop.f32.mrf.mxu0
      %v3270 = vadd.f32 %v3077, %v3269
      %v3271 = vpop.f32.mrf.mxu0
      %v3272 = vadd.f32 %v3079, %v3271
      %3273 = vdwg.mxu0
      %3274 = vmatprep.subr.bf16.mxu0 0
      %3275 = vmatpush1.bf16.msra.mxu0 %v1723
      %3276 = vmatprep.subr.bf16.mxu0 0
      %3277 = vmatpush1.bf16.msra.mxu0 %v1716
      %3278 = vmatprep.subr.bf16.mxu0 0
      %3279 = vmatpush1.bf16.msra.mxu0 %v1709
      %3280 = vmatprep.subr.bf16.mxu0 0
      %3281 = vmatpush1.bf16.msra.mxu0 %v1702
      %3282 = vmatprep.subr.bf16.mxu0 0
      %3283 = vmatpush1.bf16.msra.mxu0 %v1695
      %3284 = vmatprep.subr.bf16.mxu0 0
      %3285 = vmatpush1.bf16.msra.mxu0 %v1688
      %3286 = vmatprep.subr.bf16.mxu0 0
      %3287 = vmatpush1.bf16.msra.mxu0 %v1681
      %3288 = vmatprep.subr.bf16.mxu0 0
      %3289 = vmatpush1.bf16.msra.mxu0 %v1674
      %3290 = vmatprep.subr.bf16.mxu0 0
      %3291 = vmatpush2.bf16.msra.mxu0 %v1779
      %3292 = vmatprep.subr.bf16.mxu0 0
      %3293 = vmatpush2.bf16.msra.mxu0 %v1772
      %3294 = vmatprep.subr.bf16.mxu0 0
      %3295 = vmatpush2.bf16.msra.mxu0 %v1765
      %3296 = vmatprep.subr.bf16.mxu0 0
      %3297 = vmatpush2.bf16.msra.mxu0 %v1758
      %3298 = vmatprep.subr.bf16.mxu0 0
      %3299 = vmatpush2.bf16.msra.mxu0 %v1751
      %3300 = vmatprep.subr.bf16.mxu0 0
      %3301 = vmatpush2.bf16.msra.mxu0 %v1744
      %3302 = vmatprep.subr.bf16.mxu0 0
      %3303 = vmatpush2.bf16.msra.mxu0 %v1737
      %3304 = vmatprep.subr.bf16.mxu0 0
      %3305 = vmatpush2.bf16.msra.mxu0 %v1730
      %3306 = vmatprep.mubr.bf16.mxu0 %v837
      %3307 = vmatmul.mubr.bf16.gmra.mxu0 %v836
      %v3308 = vpop.f32.mrf.mxu0
      %v3309 = vadd.f32 %v636, %v3308
      %v3310 = vpop.f32.mrf.mxu0
      %v3311 = vpop.f32.mrf.mxu0
      %v3312 = vadd.f32 %v636, %v3311
      %v3313 = vpop.f32.mrf.mxu0
      %3314 = vmatprep.mubr.bf16.mxu0 %v841
      %3315 = vmatmul.mubr.bf16.gmra.mxu0 %v840
      %v3316 = vpop.f32.mrf.mxu0
      %v3317 = vadd.f32 %v636, %v3316
      %v3318 = vpop.f32.mrf.mxu0
      %v3319 = vpop.f32.mrf.mxu0
      %v3320 = vadd.f32 %v636, %v3319
      %v3321 = vpop.f32.mrf.mxu0
      %3322 = vmatprep.mubr.bf16.mxu0 %v845
      %3323 = vmatmul.mubr.bf16.gmra.mxu0 %v844
      %v3324 = vpop.f32.mrf.mxu0
      %v3325 = vadd.f32 %v636, %v3324
      %v3326 = vpop.f32.mrf.mxu0
      %v3327 = vpop.f32.mrf.mxu0
      %v3328 = vadd.f32 %v636, %v3327
      %v3329 = vpop.f32.mrf.mxu0
      %3330 = vmatprep.mubr.bf16.mxu0 %v849
      %3331 = vmatmul.mubr.bf16.gmra.mxu0 %v848
      %v3332 = vpop.f32.mrf.mxu0
      %v3333 = vadd.f32 %v636, %v3332
      %v3334 = vpop.f32.mrf.mxu0
      %v3335 = vpop.f32.mrf.mxu0
      %v3336 = vadd.f32 %v636, %v3335
      %v3337 = vpop.f32.mrf.mxu0
      %3338 = vmatprep.mubr.bf16.mxu0 %v853
      %3339 = vmatmul.mubr.bf16.gmra.mxu0 %v852
      %v3340 = vpop.f32.mrf.mxu0
      %v3341 = vadd.f32 %v636, %v3340
      %v3342 = vpop.f32.mrf.mxu0
      %v3343 = vpop.f32.mrf.mxu0
      %v3344 = vadd.f32 %v636, %v3343
      %v3345 = vpop.f32.mrf.mxu0
      %3346 = vmatprep.mubr.bf16.mxu0 %v857
      %3347 = vmatmul.mubr.bf16.gmra.mxu0 %v856
      %v3348 = vpop.f32.mrf.mxu0
      %v3349 = vadd.f32 %v636, %v3348
      %v3350 = vpop.f32.mrf.mxu0
      %v3351 = vpop.f32.mrf.mxu0
      %v3352 = vadd.f32 %v636, %v3351
      %v3353 = vpop.f32.mrf.mxu0
      %3354 = vmatprep.mubr.bf16.mxu0 %v861
      %3355 = vmatmul.mubr.bf16.gmra.mxu0 %v860
      %v3356 = vpop.f32.mrf.mxu0
      %v3357 = vadd.f32 %v636, %v3356
      %v3358 = vpop.f32.mrf.mxu0
      %v3359 = vpop.f32.mrf.mxu0
      %v3360 = vadd.f32 %v636, %v3359
      %v3361 = vpop.f32.mrf.mxu0
      %3362 = vmatprep.mubr.bf16.mxu0 %v865
      %3363 = vmatmul.mubr.bf16.gmra.mxu0 %v864
      %v3364 = vpop.f32.mrf.mxu0
      %v3365 = vadd.f32 %v636, %v3364
      %v3366 = vpop.f32.mrf.mxu0
      %v3367 = vpop.f32.mrf.mxu0
      %v3368 = vadd.f32 %v636, %v3367
      %v3369 = vpop.f32.mrf.mxu0
      %3370 = vmatprep.mubr.bf16.mxu0 %v869
      %3371 = vmatmul.mubr.bf16.gmra.mxu0 %v868
      %v3372 = vpop.f32.mrf.mxu0
      %v3373 = vadd.f32 %v636, %v3372
      %v3374 = vpop.f32.mrf.mxu0
      %v3375 = vpop.f32.mrf.mxu0
      %v3376 = vadd.f32 %v636, %v3375
      %v3377 = vpop.f32.mrf.mxu0
      %3378 = vmatprep.mubr.bf16.mxu0 %v873
      %3379 = vmatmul.mubr.bf16.gmra.mxu0 %v872
      %v3380 = vpop.f32.mrf.mxu0
      %v3381 = vadd.f32 %v636, %v3380
      %v3382 = vpop.f32.mrf.mxu0
      %v3383 = vpop.f32.mrf.mxu0
      %v3384 = vadd.f32 %v636, %v3383
      %v3385 = vpop.f32.mrf.mxu0
      %3386 = vmatprep.mubr.bf16.mxu0 %v877
      %3387 = vmatmul.mubr.bf16.gmra.mxu0 %v876
      %v3388 = vpop.f32.mrf.mxu0
      %v3389 = vadd.f32 %v636, %v3388
      %v3390 = vpop.f32.mrf.mxu0
      %v3391 = vpop.f32.mrf.mxu0
      %v3392 = vadd.f32 %v636, %v3391
      %v3393 = vpop.f32.mrf.mxu0
      %3394 = vmatprep.mubr.bf16.mxu0 %v881
      %3395 = vmatmul.mubr.bf16.gmra.mxu0 %v880
      %v3396 = vpop.f32.mrf.mxu0
      %v3397 = vadd.f32 %v636, %v3396
      %v3398 = vpop.f32.mrf.mxu0
      %v3399 = vpop.f32.mrf.mxu0
      %v3400 = vadd.f32 %v636, %v3399
      %v3401 = vpop.f32.mrf.mxu0
      %3402 = vmatprep.mubr.bf16.mxu0 %v885
      %3403 = vmatmul.mubr.bf16.gmra.mxu0 %v884
      %v3404 = vpop.f32.mrf.mxu0
      %v3405 = vadd.f32 %v636, %v3404
      %v3406 = vpop.f32.mrf.mxu0
      %v3407 = vpop.f32.mrf.mxu0
      %v3408 = vadd.f32 %v636, %v3407
      %v3409 = vpop.f32.mrf.mxu0
      %3410 = vmatprep.mubr.bf16.mxu0 %v889
      %3411 = vmatmul.mubr.bf16.gmra.mxu0 %v888
      %v3412 = vpop.f32.mrf.mxu0
      %v3413 = vadd.f32 %v636, %v3412
      %v3414 = vpop.f32.mrf.mxu0
      %v3415 = vpop.f32.mrf.mxu0
      %v3416 = vadd.f32 %v636, %v3415
      %v3417 = vpop.f32.mrf.mxu0
      %3418 = vmatprep.mubr.bf16.mxu0 %v893
      %3419 = vmatmul.mubr.bf16.gmra.mxu0 %v892
      %v3420 = vpop.f32.mrf.mxu0
      %v3421 = vadd.f32 %v636, %v3420
      %v3422 = vpop.f32.mrf.mxu0
      %v3423 = vpop.f32.mrf.mxu0
      %v3424 = vadd.f32 %v636, %v3423
      %v3425 = vpop.f32.mrf.mxu0
      %3426 = vmatprep.mubr.bf16.mxu0 %v897
      %3427 = vmatmul.mubr.bf16.gmra.mxu0 %v896
      %v3428 = vpop.f32.mrf.mxu0
      %v3429 = vadd.f32 %v636, %v3428
      %v3430 = vpop.f32.mrf.mxu0
      %v3431 = vpop.f32.mrf.mxu0
      %v3432 = vadd.f32 %v636, %v3431
      %v3433 = vpop.f32.mrf.mxu0
      %3434 = vdwg.mxu0
      %3435 = vmatprep.subr.bf16.mxu0 0
      %3436 = vmatpush1.bf16.msra.mxu0 %v1835
      %3437 = vmatprep.subr.bf16.mxu0 0
      %3438 = vmatpush1.bf16.msra.mxu0 %v1828
      %3439 = vmatprep.subr.bf16.mxu0 0
      %3440 = vmatpush1.bf16.msra.mxu0 %v1821
      %3441 = vmatprep.subr.bf16.mxu0 0
      %3442 = vmatpush1.bf16.msra.mxu0 %v1814
      %3443 = vmatprep.subr.bf16.mxu0 0
      %3444 = vmatpush1.bf16.msra.mxu0 %v1807
      %3445 = vmatprep.subr.bf16.mxu0 0
      %3446 = vmatpush1.bf16.msra.mxu0 %v1800
      %3447 = vmatprep.subr.bf16.mxu0 0
      %3448 = vmatpush1.bf16.msra.mxu0 %v1793
      %3449 = vmatprep.subr.bf16.mxu0 0
      %3450 = vmatpush1.bf16.msra.mxu0 %v1786
      %3451 = vmatprep.subr.bf16.mxu0 0
      %3452 = vmatpush2.bf16.msra.mxu0 %v1891
      %3453 = vmatprep.subr.bf16.mxu0 0
      %3454 = vmatpush2.bf16.msra.mxu0 %v1884
      %3455 = vmatprep.subr.bf16.mxu0 0
      %3456 = vmatpush2.bf16.msra.mxu0 %v1877
      %3457 = vmatprep.subr.bf16.mxu0 0
      %3458 = vmatpush2.bf16.msra.mxu0 %v1870
      %3459 = vmatprep.subr.bf16.mxu0 0
      %3460 = vmatpush2.bf16.msra.mxu0 %v1863
      %3461 = vmatprep.subr.bf16.mxu0 0
      %3462 = vmatpush2.bf16.msra.mxu0 %v1856
      %3463 = vmatprep.subr.bf16.mxu0 0
      %3464 = vmatpush2.bf16.msra.mxu0 %v1849
      %3465 = vmatprep.subr.bf16.mxu0 0
      %3466 = vmatpush2.bf16.msra.mxu0 %v1842
      %3467 = vmatprep.mubr.bf16.mxu0 %v839
      %3468 = vmatmul.mubr.bf16.gmra.mxu0 %v838
      %v3469 = vpop.f32.mrf.mxu0
      %v3470 = vadd.f32 %v3309, %v3469
      %v3471 = vpop.f32.mrf.mxu0
      %v3472 = vpop.f32.mrf.mxu0
      %v3473 = vadd.f32 %v3312, %v3472
      %v3474 = vpop.f32.mrf.mxu0
      %3475 = vmatprep.mubr.bf16.mxu0 %v843
      %3476 = vmatmul.mubr.bf16.gmra.mxu0 %v842
      %v3477 = vpop.f32.mrf.mxu0
      %v3478 = vadd.f32 %v3317, %v3477
      %v3479 = vpop.f32.mrf.mxu0
      %v3480 = vpop.f32.mrf.mxu0
      %v3481 = vadd.f32 %v3320, %v3480
      %v3482 = vpop.f32.mrf.mxu0
      %3483 = vmatprep.mubr.bf16.mxu0 %v847
      %3484 = vmatmul.mubr.bf16.gmra.mxu0 %v846
      %v3485 = vpop.f32.mrf.mxu0
      %v3486 = vadd.f32 %v3325, %v3485
      %v3487 = vpop.f32.mrf.mxu0
      %v3488 = vpop.f32.mrf.mxu0
      %v3489 = vadd.f32 %v3328, %v3488
      %v3490 = vpop.f32.mrf.mxu0
      %3491 = vmatprep.mubr.bf16.mxu0 %v851
      %3492 = vmatmul.mubr.bf16.gmra.mxu0 %v850
      %v3493 = vpop.f32.mrf.mxu0
      %v3494 = vadd.f32 %v3333, %v3493
      %v3495 = vpop.f32.mrf.mxu0
      %v3496 = vpop.f32.mrf.mxu0
      %v3497 = vadd.f32 %v3336, %v3496
      %v3498 = vpop.f32.mrf.mxu0
      %3499 = vmatprep.mubr.bf16.mxu0 %v855
      %3500 = vmatmul.mubr.bf16.gmra.mxu0 %v854
      %v3501 = vpop.f32.mrf.mxu0
      %v3502 = vadd.f32 %v3341, %v3501
      %v3503 = vpop.f32.mrf.mxu0
      %v3504 = vpop.f32.mrf.mxu0
      %v3505 = vadd.f32 %v3344, %v3504
      %v3506 = vpop.f32.mrf.mxu0
      %3507 = vmatprep.mubr.bf16.mxu0 %v859
      %3508 = vmatmul.mubr.bf16.gmra.mxu0 %v858
      %v3509 = vpop.f32.mrf.mxu0
      %v3510 = vadd.f32 %v3349, %v3509
      %v3511 = vpop.f32.mrf.mxu0
      %v3512 = vpop.f32.mrf.mxu0
      %v3513 = vadd.f32 %v3352, %v3512
      %v3514 = vpop.f32.mrf.mxu0
      %3515 = vmatprep.mubr.bf16.mxu0 %v863
      %3516 = vmatmul.mubr.bf16.gmra.mxu0 %v862
      %v3517 = vpop.f32.mrf.mxu0
      %v3518 = vadd.f32 %v3357, %v3517
      %v3519 = vpop.f32.mrf.mxu0
      %v3520 = vpop.f32.mrf.mxu0
      %v3521 = vadd.f32 %v3360, %v3520
      %v3522 = vpop.f32.mrf.mxu0
      %3523 = vmatprep.mubr.bf16.mxu0 %v867
      %3524 = vmatmul.mubr.bf16.gmra.mxu0 %v866
      %v3525 = vpop.f32.mrf.mxu0
      %v3526 = vadd.f32 %v3365, %v3525
      %v3527 = vpop.f32.mrf.mxu0
      %v3528 = vpop.f32.mrf.mxu0
      %v3529 = vadd.f32 %v3368, %v3528
      %v3530 = vpop.f32.mrf.mxu0
      %3531 = vmatprep.mubr.bf16.mxu0 %v871
      %3532 = vmatmul.mubr.bf16.gmra.mxu0 %v870
      %v3533 = vpop.f32.mrf.mxu0
      %v3534 = vadd.f32 %v3373, %v3533
      %v3535 = vpop.f32.mrf.mxu0
      %v3536 = vpop.f32.mrf.mxu0
      %v3537 = vadd.f32 %v3376, %v3536
      %v3538 = vpop.f32.mrf.mxu0
      %3539 = vmatprep.mubr.bf16.mxu0 %v875
      %3540 = vmatmul.mubr.bf16.gmra.mxu0 %v874
      %v3541 = vpop.f32.mrf.mxu0
      %v3542 = vadd.f32 %v3381, %v3541
      %v3543 = vpop.f32.mrf.mxu0
      %v3544 = vpop.f32.mrf.mxu0
      %v3545 = vadd.f32 %v3384, %v3544
      %v3546 = vpop.f32.mrf.mxu0
      %3547 = vmatprep.mubr.bf16.mxu0 %v879
      %3548 = vmatmul.mubr.bf16.gmra.mxu0 %v878
      %v3549 = vpop.f32.mrf.mxu0
      %v3550 = vadd.f32 %v3389, %v3549
      %v3551 = vpop.f32.mrf.mxu0
      %v3552 = vpop.f32.mrf.mxu0
      %v3553 = vadd.f32 %v3392, %v3552
      %v3554 = vpop.f32.mrf.mxu0
      %3555 = vmatprep.mubr.bf16.mxu0 %v883
      %3556 = vmatmul.mubr.bf16.gmra.mxu0 %v882
      %v3557 = vpop.f32.mrf.mxu0
      %v3558 = vadd.f32 %v3397, %v3557
      %v3559 = vpop.f32.mrf.mxu0
      %v3560 = vpop.f32.mrf.mxu0
      %v3561 = vadd.f32 %v3400, %v3560
      %v3562 = vpop.f32.mrf.mxu0
      %3563 = vmatprep.mubr.bf16.mxu0 %v887
      %3564 = vmatmul.mubr.bf16.gmra.mxu0 %v886
      %v3565 = vpop.f32.mrf.mxu0
      %v3566 = vadd.f32 %v3405, %v3565
      %v3567 = vpop.f32.mrf.mxu0
      %v3568 = vpop.f32.mrf.mxu0
      %v3569 = vadd.f32 %v3408, %v3568
      %v3570 = vpop.f32.mrf.mxu0
      %3571 = vmatprep.mubr.bf16.mxu0 %v891
      %3572 = vmatmul.mubr.bf16.gmra.mxu0 %v890
      %v3573 = vpop.f32.mrf.mxu0
      %v3574 = vadd.f32 %v3413, %v3573
      %v3575 = vpop.f32.mrf.mxu0
      %v3576 = vpop.f32.mrf.mxu0
      %v3577 = vadd.f32 %v3416, %v3576
      %v3578 = vpop.f32.mrf.mxu0
      %3579 = vmatprep.mubr.bf16.mxu0 %v895
      %3580 = vmatmul.mubr.bf16.gmra.mxu0 %v894
      %v3581 = vpop.f32.mrf.mxu0
      %v3582 = vadd.f32 %v3421, %v3581
      %v3583 = vpop.f32.mrf.mxu0
      %v3584 = vpop.f32.mrf.mxu0
      %v3585 = vadd.f32 %v3424, %v3584
      %v3586 = vpop.f32.mrf.mxu0
      %3587 = vmatprep.mubr.bf16.mxu0 %v899
      %3588 = vmatmul.mubr.bf16.gmra.mxu0 %v898
      %v3589 = vpop.f32.mrf.mxu0
      %v3590 = vadd.f32 %v3429, %v3589
      %v3591 = vpop.f32.mrf.mxu0
      %v3592 = vpop.f32.mrf.mxu0
      %v3593 = vadd.f32 %v3432, %v3592
      %v3594 = vpop.f32.mrf.mxu0
      %3595 = vdwg.mxu0
      %v3596 = vtanh.pop %v2344
      %v3597 = vtanh.pop %v2346
      %v3598 = vtanh.pop %v2730
      %v3599 = vtanh.pop %v2732
      %v3600 = vtanh.pop %v3116
      %v3601 = vtanh.pop %v3118
      %v3602 = vtanh.pop %v3470
      %v3603 = vtanh.pop %v2348
      %v3604 = vtanh.pop %v2350
      %v3605 = vtanh.pop %v2734
      %v3606 = vtanh.pop %v2736
      %v3607 = vtanh.pop %v3120
      %v3608 = vtanh.pop %v3122
      %v3609 = vtanh.pop %v3473
      %v3610 = vtanh.pop %v2354
      %v3611 = vtanh.pop %v2356
      %v3612 = vtanh.pop %v2740
      %v3613 = vtanh.pop %v2742
      %v3614 = vtanh.pop %v3126
      %v3615 = vtanh.pop %v3128
      %v3616 = vtanh.pop %v3478
      %v3617 = vtanh.pop %v2358
      %v3618 = vtanh.pop %v2360
      %v3619 = vtanh.pop %v2744
      %v3620 = vtanh.pop %v2746
      %v3621 = vtanh.pop %v3130
      %v3622 = vtanh.pop %v3132
      %v3623 = vtanh.pop %v3481
      %v3624 = vtanh.pop %v2364
      %v3625 = vtanh.pop %v2366
      %v3626 = vtanh.pop %v2750
      %v3627 = vtanh.pop %v2752
      %v3628 = vtanh.pop %v3136
      %v3629 = vtanh.pop %v3138
      %v3630 = vtanh.pop %v3486
      %v3631 = vtanh.pop %v2368
      %v3632 = vtanh.pop %v2370
      %v3633 = vtanh.pop %v2754
      %v3634 = vtanh.pop %v2756
      %v3635 = vtanh.pop %v3140
      %v3636 = vtanh.pop %v3142
      %v3637 = vtanh.pop %v3489
      %v3638 = vtanh.pop %v2374
      %v3639 = vtanh.pop %v2376
      %v3640 = vtanh.pop %v2760
      %v3641 = vtanh.pop %v2762
      %v3642 = vtanh.pop %v3146
      %v3643 = vtanh.pop %v3148
      %v3644 = vtanh.pop %v3494
      %v3645 = vtanh.pop %v2378
      %v3646 = vtanh.pop %v2380
      %v3647 = vtanh.pop %v2764
      %v3648 = vtanh.pop %v2766
      %v3649 = vtanh.pop %v3150
      %v3650 = vtanh.pop %v3152
      %v3651 = vtanh.pop %v3497
      %v3652 = vtanh.pop %v2384
      %v3653 = vtanh.pop %v2386
      %v3654 = vtanh.pop %v2770
      %v3655 = vtanh.pop %v2772
      %v3656 = vtanh.pop %v3156
      %v3657 = vtanh.pop %v3158
      %v3658 = vtanh.pop %v3502
      %v3659 = vtanh.pop %v2388
      %v3660 = vtanh.pop %v2390
      %v3661 = vtanh.pop %v2774
      %v3662 = vtanh.pop %v2776
      %v3663 = vtanh.pop %v3160
      %v3664 = vtanh.pop %v3162
      %v3665 = vtanh.pop %v3505
      %v3666 = vtanh.pop %v2394
      %v3667 = vtanh.pop %v2396
      %v3668 = vtanh.pop %v2780
      %v3669 = vtanh.pop %v2782
      %v3670 = vtanh.pop %v3166
      %v3671 = vtanh.pop %v3168
      %v3672 = vtanh.pop %v3510
      %v3673 = vtanh.pop %v2398
      %v3674 = vtanh.pop %v2400
      %v3675 = vtanh.pop %v2784
      %v3676 = vtanh.pop %v2786
      %v3677 = vtanh.pop %v3170
      %v3678 = vtanh.pop %v3172
      %v3679 = vtanh.pop %v3513
      %v3680 = vtanh.pop %v2404
      %v3681 = vtanh.pop %v2406
      %v3682 = vtanh.pop %v2790
      %v3683 = vtanh.pop %v2792
      %v3684 = vtanh.pop %v3176
      %v3685 = vtanh.pop %v3178
      %v3686 = vtanh.pop %v3518
      %v3687 = vtanh.pop %v2408
      %v3688 = vtanh.pop %v2410
      %v3689 = vtanh.pop %v2794
      %v3690 = vtanh.pop %v2796
      %v3691 = vtanh.pop %v3180
      %v3692 = vtanh.pop %v3182
      %v3693 = vtanh.pop %v3521
      %v3694 = vtanh.pop %v2414
      %v3695 = vtanh.pop %v2416
      %v3696 = vtanh.pop %v2800
      %v3697 = vtanh.pop %v2802
      %v3698 = vtanh.pop %v3186
      %v3699 = vtanh.pop %v3188
      %v3700 = vtanh.pop %v3526
      %v3701 = vtanh.pop %v2418
      %v3702 = vtanh.pop %v2420
      %v3703 = vtanh.pop %v2804
      %v3704 = vtanh.pop %v2806
      %v3705 = vtanh.pop %v3190
      %v3706 = vtanh.pop %v3192
      %v3707 = vtanh.pop %v3529
      %v3708 = vtanh.pop %v2424
      %v3709 = vtanh.pop %v2426
      %v3710 = vtanh.pop %v2810
      %v3711 = vtanh.pop %v2812
      %v3712 = vtanh.pop %v3196
      %v3713 = vtanh.pop %v3198
      %v3714 = vtanh.pop %v3534
      %v3715 = vtanh.pop %v2428
      %v3716 = vtanh.pop %v2430
      %v3717 = vtanh.pop %v2814
      %v3718 = vtanh.pop %v2816
      %v3719 = vtanh.pop %v3200
      %v3720 = vtanh.pop %v3202
      %v3721 = vtanh.pop %v3537
      %v3722 = vtanh.pop %v2434
      %v3723 = vtanh.pop %v2436
      %v3724 = vtanh.pop %v2820
      %v3725 = vtanh.pop %v2822
      %v3726 = vtanh.pop %v3206
      %v3727 = vtanh.pop %v3208
      %v3728 = vtanh.pop %v3542
      %v3729 = vtanh.pop %v2438
      %v3730 = vtanh.pop %v2440
      %v3731 = vtanh.pop %v2824
      %v3732 = vtanh.pop %v2826
      %v3733 = vtanh.pop %v3210
      %v3734 = vtanh.pop %v3212
      %v3735 = vtanh.pop %v3545
      %v3736 = vtanh.pop %v2444
      %v3737 = vtanh.pop %v2446
      %v3738 = vtanh.pop %v2830
      %v3739 = vtanh.pop %v2832
      %v3740 = vtanh.pop %v3216
      %v3741 = vtanh.pop %v3218
      %v3742 = vtanh.pop %v3550
      %v3743 = vtanh.pop %v2448
      %v3744 = vtanh.pop %v2450
      %v3745 = vtanh.pop %v2834
      %v3746 = vtanh.pop %v2836
      %v3747 = vtanh.pop %v3220
      %v3748 = vtanh.pop %v3222
      %v3749 = vtanh.pop %v3553
      %v3750 = vtanh.pop %v2454
      %v3751 = vtanh.pop %v2456
      %v3752 = vtanh.pop %v2840
      %v3753 = vtanh.pop %v2842
      %v3754 = vtanh.pop %v3226
      %v3755 = vtanh.pop %v3228
      %v3756 = vtanh.pop %v3558
      %v3757 = vtanh.pop %v2458
      %v3758 = vtanh.pop %v2460
      %v3759 = vtanh.pop %v2844
      %v3760 = vtanh.pop %v2846
      %v3761 = vtanh.pop %v3230
      %v3762 = vtanh.pop %v3232
      %v3763 = vtanh.pop %v3561
      %v3764 = vtanh.pop %v2464
      %v3765 = vtanh.pop %v2466
      %v3766 = vtanh.pop %v2850
      %v3767 = vtanh.pop %v2852
      %v3768 = vtanh.pop %v3236
      %v3769 = vtanh.pop %v3238
      %v3770 = vtanh.pop %v3566
      %v3771 = vtanh.pop %v2468
      %v3772 = vtanh.pop %v2470
      %v3773 = vtanh.pop %v2854
      %v3774 = vtanh.pop %v2856
      %v3775 = vtanh.pop %v3240
      %v3776 = vtanh.pop %v3242
      %v3777 = vtanh.pop %v3569
      %v3778 = vtanh.pop %v2474
      %v3779 = vtanh.pop %v2476
      %v3780 = vtanh.pop %v2860
      %v3781 = vtanh.pop %v2862
      %v3782 = vtanh.pop %v3246
      %v3783 = vtanh.pop %v3248
      %v3784 = vtanh.pop %v3574
      %v3785 = vtanh.pop %v2478
      %v3786 = vtanh.pop %v2480
      %v3787 = vtanh.pop %v2864
      %v3788 = vtanh.pop %v2866
      %v3789 = vtanh.pop %v3250
      %v3790 = vtanh.pop %v3252
      %v3791 = vtanh.pop %v3577
      %v3792 = vtanh.pop %v2484
      %v3793 = vtanh.pop %v2486
      %v3794 = vtanh.pop %v2870
      %v3795 = vtanh.pop %v2872
      %v3796 = vtanh.pop %v3256
      %v3797 = vtanh.pop %v3258
      %v3798 = vtanh.pop %v3582
      %v3799 = vtanh.pop %v2488
      %v3800 = vtanh.pop %v2490
      %v3801 = vtanh.pop %v2874
      %v3802 = vtanh.pop %v2876
      %v3803 = vtanh.pop %v3260
      %v3804 = vtanh.pop %v3262
      %v3805 = vtanh.pop %v3585
      %v3806 = vtanh.pop %v2494
      %v3807 = vtanh.pop %v2496
      %v3808 = vtanh.pop %v2880
      %v3809 = vtanh.pop %v2882
      %v3810 = vtanh.pop %v3266
      %v3811 = vtanh.pop %v3268
      %v3812 = vtanh.pop %v3590
      %v3813 = vtanh.pop %v2498
      %v3814 = vtanh.pop %v2500
      %v3815 = vtanh.pop %v2884
      %v3816 = vtanh.pop %v2886
      %v3817 = vtanh.pop %v3270
      %v3818 = vtanh.pop %v3272
      %v3819 = vtanh.pop %v3593
      %v3820 = vpack.c.bf16 %v3603, %v3596
      %v3821 = vpack.c.bf16 %v3604, %v3597
      %v3822 = vpack.c.bf16 %v3605, %v3598
      %v3823 = vpack.c.bf16 %v3606, %v3599
      %v3824 = vpack.c.bf16 %v3607, %v3600
      %v3825 = vpack.c.bf16 %v3608, %v3601
      %v3826 = vpack.c.bf16 %v3609, %v3602
      %v3827 = vpack.c.bf16 %v3617, %v3610
      %v3828 = vpack.c.bf16 %v3618, %v3611
      %v3829 = vpack.c.bf16 %v3619, %v3612
      %v3830 = vpack.c.bf16 %v3620, %v3613
      %v3831 = vpack.c.bf16 %v3621, %v3614
      %v3832 = vpack.c.bf16 %v3622, %v3615
      %v3833 = vpack.c.bf16 %v3623, %v3616
      %v3834 = vpack.c.bf16 %v3631, %v3624
      %v3835 = vpack.c.bf16 %v3632, %v3625
      %v3836 = vpack.c.bf16 %v3633, %v3626
      %v3837 = vpack.c.bf16 %v3634, %v3627
      %v3838 = vpack.c.bf16 %v3635, %v3628
      %v3839 = vpack.c.bf16 %v3636, %v3629
      %v3840 = vpack.c.bf16 %v3637, %v3630
      %v3841 = vpack.c.bf16 %v3645, %v3638
      %v3842 = vpack.c.bf16 %v3646, %v3639
      %v3843 = vpack.c.bf16 %v3647, %v3640
      %v3844 = vpack.c.bf16 %v3648, %v3641
      %v3845 = vpack.c.bf16 %v3649, %v3642
      %v3846 = vpack.c.bf16 %v3650, %v3643
      %v3847 = vpack.c.bf16 %v3651, %v3644
      %v3848 = vpack.c.bf16 %v3659, %v3652
      %v3849 = vpack.c.bf16 %v3660, %v3653
      %v3850 = vpack.c.bf16 %v3661, %v3654
      %v3851 = vpack.c.bf16 %v3662, %v3655
      %v3852 = vpack.c.bf16 %v3663, %v3656
      %v3853 = vpack.c.bf16 %v3664, %v3657
      %v3854 = vpack.c.bf16 %v3665, %v3658
      %v3855 = vpack.c.bf16 %v3673, %v3666
      %v3856 = vpack.c.bf16 %v3674, %v3667
      %v3857 = vpack.c.bf16 %v3675, %v3668
      %v3858 = vpack.c.bf16 %v3676, %v3669
      %v3859 = vpack.c.bf16 %v3677, %v3670
      %v3860 = vpack.c.bf16 %v3678, %v3671
      %v3861 = vpack.c.bf16 %v3679, %v3672
      %v3862 = vpack.c.bf16 %v3687, %v3680
      %v3863 = vpack.c.bf16 %v3688, %v3681
      %v3864 = vpack.c.bf16 %v3689, %v3682
      %v3865 = vpack.c.bf16 %v3690, %v3683
      %v3866 = vpack.c.bf16 %v3691, %v3684
      %v3867 = vpack.c.bf16 %v3692, %v3685
      %v3868 = vpack.c.bf16 %v3693, %v3686
      %v3869 = vpack.c.bf16 %v3701, %v3694
      %v3870 = vpack.c.bf16 %v3702, %v3695
      %v3871 = vpack.c.bf16 %v3703, %v3696
      %v3872 = vpack.c.bf16 %v3704, %v3697
      %v3873 = vpack.c.bf16 %v3705, %v3698
      %v3874 = vpack.c.bf16 %v3706, %v3699
      %v3875 = vpack.c.bf16 %v3707, %v3700
      %v3876 = vpack.c.bf16 %v3715, %v3708
      %v3877 = vpack.c.bf16 %v3716, %v3709
      %v3878 = vpack.c.bf16 %v3717, %v3710
      %v3879 = vpack.c.bf16 %v3718, %v3711
      %v3880 = vpack.c.bf16 %v3719, %v3712
      %v3881 = vpack.c.bf16 %v3720, %v3713
      %v3882 = vpack.c.bf16 %v3721, %v3714
      %v3883 = vpack.c.bf16 %v3729, %v3722
      %v3884 = vpack.c.bf16 %v3730, %v3723
      %v3885 = vpack.c.bf16 %v3731, %v3724
      %v3886 = vpack.c.bf16 %v3732, %v3725
      %v3887 = vpack.c.bf16 %v3733, %v3726
      %v3888 = vpack.c.bf16 %v3734, %v3727
      %v3889 = vpack.c.bf16 %v3735, %v3728
      %v3890 = vpack.c.bf16 %v3743, %v3736
      %v3891 = vpack.c.bf16 %v3744, %v3737
      %v3892 = vpack.c.bf16 %v3745, %v3738
      %v3893 = vpack.c.bf16 %v3746, %v3739
      %v3894 = vpack.c.bf16 %v3747, %v3740
      %v3895 = vpack.c.bf16 %v3748, %v3741
      %v3896 = vpack.c.bf16 %v3749, %v3742
      %v3897 = vpack.c.bf16 %v3757, %v3750
      %v3898 = vpack.c.bf16 %v3758, %v3751
      %v3899 = vpack.c.bf16 %v3759, %v3752
      %v3900 = vpack.c.bf16 %v3760, %v3753
      %v3901 = vpack.c.bf16 %v3761, %v3754
      %v3902 = vpack.c.bf16 %v3762, %v3755
      %v3903 = vpack.c.bf16 %v3763, %v3756
      %v3904 = vpack.c.bf16 %v3771, %v3764
      %v3905 = vpack.c.bf16 %v3772, %v3765
      %v3906 = vpack.c.bf16 %v3773, %v3766
      %v3907 = vpack.c.bf16 %v3774, %v3767
      %v3908 = vpack.c.bf16 %v3775, %v3768
      %v3909 = vpack.c.bf16 %v3776, %v3769
      %v3910 = vpack.c.bf16 %v3777, %v3770
      %v3911 = vpack.c.bf16 %v3785, %v3778
      %v3912 = vpack.c.bf16 %v3786, %v3779
      %v3913 = vpack.c.bf16 %v3787, %v3780
      %v3914 = vpack.c.bf16 %v3788, %v3781
      %v3915 = vpack.c.bf16 %v3789, %v3782
      %v3916 = vpack.c.bf16 %v3790, %v3783
      %v3917 = vpack.c.bf16 %v3791, %v3784
      %v3918 = vpack.c.bf16 %v3799, %v3792
      %v3919 = vpack.c.bf16 %v3800, %v3793
      %v3920 = vpack.c.bf16 %v3801, %v3794
      %v3921 = vpack.c.bf16 %v3802, %v3795
      %v3922 = vpack.c.bf16 %v3803, %v3796
      %v3923 = vpack.c.bf16 %v3804, %v3797
      %v3924 = vpack.c.bf16 %v3805, %v3798
      %v3925 = vpack.c.bf16 %v3813, %v3806
      %v3926 = vpack.c.bf16 %v3814, %v3807
      %v3927 = vpack.c.bf16 %v3815, %v3808
      %v3928 = vpack.c.bf16 %v3816, %v3809
      %v3929 = vpack.c.bf16 %v3817, %v3810
      %v3930 = vpack.c.bf16 %v3818, %v3811
      %v3931 = vpack.c.bf16 %v3819, %v3812
      %v3932 = vld [vmem:[%s3] sm:$0xff]
      %v3933 = vld [vmem:[%s3 + $0x8] sm:$0xff]
      %v3934 = vld [vmem:[%s3 + $0x10] sm:$0xff]
      %v3935 = vld [vmem:[%s3 + $0x18] sm:$0xff]
      %v3936 = vld [vmem:[%s3 + $0x20] sm:$0xff]
      %v3937 = vld [vmem:[%s3 + $0x28] sm:$0xff]
      %v3938 = vld [vmem:[%s3 + $0x30] sm:$0xff]
      %v3939 = vld [vmem:[%s3 + $0x38] sm:$0xff]
      %v3940 = vld [vmem:[%s3 + $0x40] sm:$0xff]
      %v3941 = vld [vmem:[%s3 + $0x48] sm:$0xff]
      %v3942 = vld [vmem:[%s3 + $0x50] sm:$0xff]
      %v3943 = vld [vmem:[%s3 + $0x58] sm:$0xff]
      %v3944 = vld [vmem:[%s3 + $0x60] sm:$0xff]
      %v3945 = vld [vmem:[%s3 + $0x68] sm:$0xff]
      %v3946 = vld [vmem:[%s3 + $0x70] sm:$0xff]
      %v3947 = vld [vmem:[%s3 + $0x78] sm:$0xff]
      %v3948 = vld [vmem:[%s3 + $0x80] sm:$0xff]
      %v3949 = vld [vmem:[%s3 + $0x88] sm:$0xff]
      %v3950 = vld [vmem:[%s3 + $0x90] sm:$0xff]
      %v3951 = vld [vmem:[%s3 + $0x98] sm:$0xff]
      %v3952 = vld [vmem:[%s3 + $0xa0] sm:$0xff]
      %v3953 = vld [vmem:[%s3 + $0xa8] sm:$0xff]
      %v3954 = vld [vmem:[%s3 + $0xb0] sm:$0xff]
      %v3955 = vld [vmem:[%s3 + $0xb8] sm:$0xff]
      %v3956 = vld [vmem:[%s3 + $0xc0] sm:$0xff]
      %v3957 = vld [vmem:[%s3 + $0xc8] sm:$0xff]
      %v3958 = vld [vmem:[%s3 + $0xd0] sm:$0xff]
      %v3959 = vld [vmem:[%s3 + $0xd8] sm:$0xff]
      %v3960 = vld [vmem:[%s3 + $0xe0] sm:$0xff]
      %v3961 = vld [vmem:[%s3 + $0xe8] sm:$0xff]
      %v3962 = vld [vmem:[%s3 + $0xf0] sm:$0xff]
      %v3963 = vld [vmem:[%s3 + $0xf8] sm:$0xff]
      %v3964 = vld [vmem:[%s3 + $0x100] sm:$0xff]
      %v3965 = vld [vmem:[%s3 + $0x108] sm:$0xff]
      %v3966 = vld [vmem:[%s3 + $0x110] sm:$0xff]
      %v3967 = vld [vmem:[%s3 + $0x118] sm:$0xff]
      %v3968 = vld [vmem:[%s3 + $0x120] sm:$0xff]
      %v3969 = vld [vmem:[%s3 + $0x128] sm:$0xff]
      %v3970 = vld [vmem:[%s3 + $0x130] sm:$0xff]
      %v3971 = vld [vmem:[%s3 + $0x138] sm:$0xff]
      %v3972 = vld [vmem:[%s3 + $0x140] sm:$0xff]
      %v3973 = vld [vmem:[%s3 + $0x148] sm:$0xff]
      %v3974 = vld [vmem:[%s3 + $0x150] sm:$0xff]
      %v3975 = vld [vmem:[%s3 + $0x158] sm:$0xff]
      %v3976 = vld [vmem:[%s3 + $0x160] sm:$0xff]
      %v3977 = vld [vmem:[%s3 + $0x168] sm:$0xff]
      %v3978 = vld [vmem:[%s3 + $0x170] sm:$0xff]
      %v3979 = vld [vmem:[%s3 + $0x178] sm:$0xff]
      %v3980 = vld [vmem:[%s3 + $0x180] sm:$0xff]
      %v3981 = vld [vmem:[%s3 + $0x188] sm:$0xff]
      %v3982 = vld [vmem:[%s3 + $0x190] sm:$0xff]
      %v3983 = vld [vmem:[%s3 + $0x198] sm:$0xff]
      %v3984 = vld [vmem:[%s3 + $0x1a0] sm:$0xff]
      %v3985 = vld [vmem:[%s3 + $0x1a8] sm:$0xff]
      %v3986 = vld [vmem:[%s3 + $0x1b0] sm:$0xff]
      %v3987 = vld [vmem:[%s3 + $0x1b8] sm:$0xff]
      %v3988 = vld [vmem:[%s3 + $0x1c0] sm:$0xff]
      %v3989 = vld [vmem:[%s3 + $0x1c8] sm:$0xff]
      %v3990 = vld [vmem:[%s3 + $0x1d0] sm:$0xff]
      %v3991 = vld [vmem:[%s3 + $0x1d8] sm:$0xff]
      %v3992 = vld [vmem:[%s3 + $0x1e0] sm:$0xff]
      %v3993 = vld [vmem:[%s3 + $0x1e8] sm:$0xff]
      %v3994 = vld [vmem:[%s3 + $0x1f0] sm:$0xff]
      %v3995 = vld [vmem:[%s3 + $0x1f8] sm:$0xff]
      %v3996 = vld [vmem:[%s3 + $0x200] sm:$0xff]
      %v3997 = vld [vmem:[%s3 + $0x208] sm:$0xff]
      %v3998 = vld [vmem:[%s3 + $0x210] sm:$0xff]
      %v3999 = vld [vmem:[%s3 + $0x218] sm:$0xff]
      %v4000 = vld [vmem:[%s3 + $0x220] sm:$0xff]
      %v4001 = vld [vmem:[%s3 + $0x228] sm:$0xff]
      %v4002 = vld [vmem:[%s3 + $0x230] sm:$0xff]
      %v4003 = vld [vmem:[%s3 + $0x238] sm:$0xff]
      %v4004 = vld [vmem:[%s3 + $0x240] sm:$0xff]
      %v4005 = vld [vmem:[%s3 + $0x248] sm:$0xff]
      %v4006 = vld [vmem:[%s3 + $0x250] sm:$0xff]
      %v4007 = vld [vmem:[%s3 + $0x258] sm:$0xff]
      %v4008 = vld [vmem:[%s3 + $0x260] sm:$0xff]
      %v4009 = vld [vmem:[%s3 + $0x268] sm:$0xff]
      %v4010 = vld [vmem:[%s3 + $0x270] sm:$0xff]
      %v4011 = vld [vmem:[%s3 + $0x278] sm:$0xff]
      %v4012 = vld [vmem:[%s3 + $0x280] sm:$0xff]
      %v4013 = vld [vmem:[%s3 + $0x288] sm:$0xff]
      %v4014 = vld [vmem:[%s3 + $0x290] sm:$0xff]
      %v4015 = vld [vmem:[%s3 + $0x298] sm:$0xff]
      %v4016 = vld [vmem:[%s3 + $0x2a0] sm:$0xff]
      %v4017 = vld [vmem:[%s3 + $0x2a8] sm:$0xff]
      %v4018 = vld [vmem:[%s3 + $0x2b0] sm:$0xff]
      %v4019 = vld [vmem:[%s3 + $0x2b8] sm:$0xff]
      %v4020 = vld [vmem:[%s3 + $0x2c0] sm:$0xff]
      %v4021 = vld [vmem:[%s3 + $0x2c8] sm:$0xff]
      %v4022 = vld [vmem:[%s3 + $0x2d0] sm:$0xff]
      %v4023 = vld [vmem:[%s3 + $0x2d8] sm:$0xff]
      %v4024 = vld [vmem:[%s3 + $0x2e0] sm:$0xff]
      %v4025 = vld [vmem:[%s3 + $0x2e8] sm:$0xff]
      %v4026 = vld [vmem:[%s3 + $0x2f0] sm:$0xff]
      %v4027 = vld [vmem:[%s3 + $0x2f8] sm:$0xff]
      %v4028 = vld [vmem:[%s3 + $0x300] sm:$0xff]
      %v4029 = vld [vmem:[%s3 + $0x308] sm:$0xff]
      %v4030 = vld [vmem:[%s3 + $0x310] sm:$0xff]
      %v4031 = vld [vmem:[%s3 + $0x318] sm:$0xff]
      %v4032 = vld [vmem:[%s3 + $0x320] sm:$0xff]
      %v4033 = vld [vmem:[%s3 + $0x328] sm:$0xff]
      %v4034 = vld [vmem:[%s3 + $0x330] sm:$0xff]
      %v4035 = vld [vmem:[%s3 + $0x338] sm:$0xff]
      %v4036 = vld [vmem:[%s3 + $0x340] sm:$0xff]
      %v4037 = vld [vmem:[%s3 + $0x348] sm:$0xff]
      %v4038 = vld [vmem:[%s3 + $0x350] sm:$0xff]
      %v4039 = vld [vmem:[%s3 + $0x358] sm:$0xff]
      %v4040 = vld [vmem:[%s3 + $0x360] sm:$0xff]
      %v4041 = vld [vmem:[%s3 + $0x368] sm:$0xff]
      %v4042 = vld [vmem:[%s3 + $0x370] sm:$0xff]
      %v4043 = vld [vmem:[%s3 + $0x378] sm:$0xff]
      %v4044 = vld [vmem:[%s4] sm:$0x3]
      %v4046 = vlaneseq
      %v4047 = vshrl.u32 %v4046, 7
      %v4048 = vsub.s32 0, %v4047
      %v4049 = vrot.slane %v4044, %v4048
      %v4050 = vlaneseq
      %v4051 = vshrl.u32 %v4050, 7
      %v4052 = vsub.s32 1, %v4051
      %v4053 = vrot.slane %v4044, %v4052
      %v4168 = vunpack.c.l.b16 %v3932
      %v4169 = vunpack.c.h.b16 %v3932
      %v4170 = vunpack.c.l.b16 %v3933
      %v4171 = vunpack.c.h.b16 %v3933
      %v4172 = vunpack.c.l.b16 %v3934
      %v4173 = vunpack.c.h.b16 %v3934
      %v4174 = vunpack.c.l.b16 %v3935
      %v4175 = vunpack.c.h.b16 %v3935
      %v4176 = vunpack.c.l.b16 %v3936
      %v4177 = vunpack.c.h.b16 %v3936
      %v4178 = vunpack.c.l.b16 %v3937
      %v4179 = vunpack.c.h.b16 %v3937
      %v4180 = vunpack.c.l.b16 %v3938
      %v4181 = vunpack.c.h.b16 %v3938
      %v4182 = vunpack.c.l.b16 %v3939
      %v4183 = vunpack.c.h.b16 %v3939
      %v4184 = vunpack.c.l.b16 %v3940
      %v4185 = vunpack.c.h.b16 %v3940
      %v4186 = vunpack.c.l.b16 %v3941
      %v4187 = vunpack.c.h.b16 %v3941
      %v4188 = vunpack.c.l.b16 %v3942
      %v4189 = vunpack.c.h.b16 %v3942
      %v4190 = vunpack.c.l.b16 %v3943
      %v4191 = vunpack.c.h.b16 %v3943
      %v4192 = vunpack.c.l.b16 %v3944
      %v4193 = vunpack.c.h.b16 %v3944
      %v4194 = vunpack.c.l.b16 %v3945
      %v4195 = vunpack.c.h.b16 %v3945
      %v4196 = vunpack.c.l.b16 %v3946
      %v4197 = vunpack.c.h.b16 %v3946
      %v4198 = vunpack.c.l.b16 %v3947
      %v4199 = vunpack.c.h.b16 %v3947
      %v4200 = vunpack.c.l.b16 %v3948
      %v4201 = vunpack.c.h.b16 %v3948
      %v4202 = vunpack.c.l.b16 %v3949
      %v4203 = vunpack.c.h.b16 %v3949
      %v4204 = vunpack.c.l.b16 %v3950
      %v4205 = vunpack.c.h.b16 %v3950
      %v4206 = vunpack.c.l.b16 %v3951
      %v4207 = vunpack.c.h.b16 %v3951
      %v4208 = vunpack.c.l.b16 %v3952
      %v4209 = vunpack.c.h.b16 %v3952
      %v4210 = vunpack.c.l.b16 %v3953
      %v4211 = vunpack.c.h.b16 %v3953
      %v4212 = vunpack.c.l.b16 %v3954
      %v4213 = vunpack.c.h.b16 %v3954
      %v4214 = vunpack.c.l.b16 %v3955
      %v4215 = vunpack.c.h.b16 %v3955
      %v4216 = vunpack.c.l.b16 %v3956
      %v4217 = vunpack.c.h.b16 %v3956
      %v4218 = vunpack.c.l.b16 %v3957
      %v4219 = vunpack.c.h.b16 %v3957
      %v4220 = vunpack.c.l.b16 %v3958
      %v4221 = vunpack.c.h.b16 %v3958
      %v4222 = vunpack.c.l.b16 %v3959
      %v4223 = vunpack.c.h.b16 %v3959
      %v4224 = vunpack.c.l.b16 %v3960
      %v4225 = vunpack.c.h.b16 %v3960
      %v4226 = vunpack.c.l.b16 %v3961
      %v4227 = vunpack.c.h.b16 %v3961
      %v4228 = vunpack.c.l.b16 %v3962
      %v4229 = vunpack.c.h.b16 %v3962
      %v4230 = vunpack.c.l.b16 %v3963
      %v4231 = vunpack.c.h.b16 %v3963
      %v4232 = vunpack.c.l.b16 %v3964
      %v4233 = vunpack.c.h.b16 %v3964
      %v4234 = vunpack.c.l.b16 %v3965
      %v4235 = vunpack.c.h.b16 %v3965
      %v4236 = vunpack.c.l.b16 %v3966
      %v4237 = vunpack.c.h.b16 %v3966
      %v4238 = vunpack.c.l.b16 %v3967
      %v4239 = vunpack.c.h.b16 %v3967
      %v4240 = vunpack.c.l.b16 %v3968
      %v4241 = vunpack.c.h.b16 %v3968
      %v4242 = vunpack.c.l.b16 %v3969
      %v4243 = vunpack.c.h.b16 %v3969
      %v4244 = vunpack.c.l.b16 %v3970
      %v4245 = vunpack.c.h.b16 %v3970
      %v4246 = vunpack.c.l.b16 %v3971
      %v4247 = vunpack.c.h.b16 %v3971
      %v4248 = vunpack.c.l.b16 %v3972
      %v4249 = vunpack.c.h.b16 %v3972
      %v4250 = vunpack.c.l.b16 %v3973
      %v4251 = vunpack.c.h.b16 %v3973
      %v4252 = vunpack.c.l.b16 %v3974
      %v4253 = vunpack.c.h.b16 %v3974
      %v4254 = vunpack.c.l.b16 %v3975
      %v4255 = vunpack.c.h.b16 %v3975
      %v4256 = vunpack.c.l.b16 %v3976
      %v4257 = vunpack.c.h.b16 %v3976
      %v4258 = vunpack.c.l.b16 %v3977
      %v4259 = vunpack.c.h.b16 %v3977
      %v4260 = vunpack.c.l.b16 %v3978
      %v4261 = vunpack.c.h.b16 %v3978
      %v4262 = vunpack.c.l.b16 %v3979
      %v4263 = vunpack.c.h.b16 %v3979
      %v4264 = vunpack.c.l.b16 %v3980
      %v4265 = vunpack.c.h.b16 %v3980
      %v4266 = vunpack.c.l.b16 %v3981
      %v4267 = vunpack.c.h.b16 %v3981
      %v4268 = vunpack.c.l.b16 %v3982
      %v4269 = vunpack.c.h.b16 %v3982
      %v4270 = vunpack.c.l.b16 %v3983
      %v4271 = vunpack.c.h.b16 %v3983
      %v4272 = vunpack.c.l.b16 %v3984
      %v4273 = vunpack.c.h.b16 %v3984
      %v4274 = vunpack.c.l.b16 %v3985
      %v4275 = vunpack.c.h.b16 %v3985
      %v4276 = vunpack.c.l.b16 %v3986
      %v4277 = vunpack.c.h.b16 %v3986
      %v4278 = vunpack.c.l.b16 %v3987
      %v4279 = vunpack.c.h.b16 %v3987
      %v4280 = vunpack.c.l.b16 %v3988
      %v4281 = vunpack.c.h.b16 %v3988
      %v4282 = vunpack.c.l.b16 %v3989
      %v4283 = vunpack.c.h.b16 %v3989
      %v4284 = vunpack.c.l.b16 %v3990
      %v4285 = vunpack.c.h.b16 %v3990
      %v4286 = vunpack.c.l.b16 %v3991
      %v4287 = vunpack.c.h.b16 %v3991
      %v4288 = vunpack.c.l.b16 %v3992
      %v4289 = vunpack.c.h.b16 %v3992
      %v4290 = vunpack.c.l.b16 %v3993
      %v4291 = vunpack.c.h.b16 %v3993
      %v4292 = vunpack.c.l.b16 %v3994
      %v4293 = vunpack.c.h.b16 %v3994
      %v4294 = vunpack.c.l.b16 %v3995
      %v4295 = vunpack.c.h.b16 %v3995
      %v4296 = vunpack.c.l.b16 %v3996
      %v4297 = vunpack.c.h.b16 %v3996
      %v4298 = vunpack.c.l.b16 %v3997
      %v4299 = vunpack.c.h.b16 %v3997
      %v4300 = vunpack.c.l.b16 %v3998
      %v4301 = vunpack.c.h.b16 %v3998
      %v4302 = vunpack.c.l.b16 %v3999
      %v4303 = vunpack.c.h.b16 %v3999
      %v4304 = vunpack.c.l.b16 %v4000
      %v4305 = vunpack.c.h.b16 %v4000
      %v4306 = vunpack.c.l.b16 %v4001
      %v4307 = vunpack.c.h.b16 %v4001
      %v4308 = vunpack.c.l.b16 %v4002
      %v4309 = vunpack.c.h.b16 %v4002
      %v4310 = vunpack.c.l.b16 %v4003
      %v4311 = vunpack.c.h.b16 %v4003
      %v4312 = vunpack.c.l.b16 %v4004
      %v4313 = vunpack.c.h.b16 %v4004
      %v4314 = vunpack.c.l.b16 %v4005
      %v4315 = vunpack.c.h.b16 %v4005
      %v4316 = vunpack.c.l.b16 %v4006
      %v4317 = vunpack.c.h.b16 %v4006
      %v4318 = vunpack.c.l.b16 %v4007
      %v4319 = vunpack.c.h.b16 %v4007
      %v4320 = vunpack.c.l.b16 %v4008
      %v4321 = vunpack.c.h.b16 %v4008
      %v4322 = vunpack.c.l.b16 %v4009
      %v4323 = vunpack.c.h.b16 %v4009
      %v4324 = vunpack.c.l.b16 %v4010
      %v4325 = vunpack.c.h.b16 %v4010
      %v4326 = vunpack.c.l.b16 %v4011
      %v4327 = vunpack.c.h.b16 %v4011
      %v4328 = vunpack.c.l.b16 %v4012
      %v4329 = vunpack.c.h.b16 %v4012
      %v4330 = vunpack.c.l.b16 %v4013
      %v4331 = vunpack.c.h.b16 %v4013
      %v4332 = vunpack.c.l.b16 %v4014
      %v4333 = vunpack.c.h.b16 %v4014
      %v4334 = vunpack.c.l.b16 %v4015
      %v4335 = vunpack.c.h.b16 %v4015
      %v4336 = vunpack.c.l.b16 %v4016
      %v4337 = vunpack.c.h.b16 %v4016
      %v4338 = vunpack.c.l.b16 %v4017
      %v4339 = vunpack.c.h.b16 %v4017
      %v4340 = vunpack.c.l.b16 %v4018
      %v4341 = vunpack.c.h.b16 %v4018
      %v4342 = vunpack.c.l.b16 %v4019
      %v4343 = vunpack.c.h.b16 %v4019
      %v4344 = vunpack.c.l.b16 %v4020
      %v4345 = vunpack.c.h.b16 %v4020
      %v4346 = vunpack.c.l.b16 %v4021
      %v4347 = vunpack.c.h.b16 %v4021
      %v4348 = vunpack.c.l.b16 %v4022
      %v4349 = vunpack.c.h.b16 %v4022
      %v4350 = vunpack.c.l.b16 %v4023
      %v4351 = vunpack.c.h.b16 %v4023
      %v4352 = vunpack.c.l.b16 %v4024
      %v4353 = vunpack.c.h.b16 %v4024
      %v4354 = vunpack.c.l.b16 %v4025
      %v4355 = vunpack.c.h.b16 %v4025
      %v4356 = vunpack.c.l.b16 %v4026
      %v4357 = vunpack.c.h.b16 %v4026
      %v4358 = vunpack.c.l.b16 %v4027
      %v4359 = vunpack.c.h.b16 %v4027
      %v4360 = vunpack.c.l.b16 %v4028
      %v4361 = vunpack.c.h.b16 %v4028
      %v4362 = vunpack.c.l.b16 %v4029
      %v4363 = vunpack.c.h.b16 %v4029
      %v4364 = vunpack.c.l.b16 %v4030
      %v4365 = vunpack.c.h.b16 %v4030
      %v4366 = vunpack.c.l.b16 %v4031
      %v4367 = vunpack.c.h.b16 %v4031
      %v4368 = vunpack.c.l.b16 %v4032
      %v4369 = vunpack.c.h.b16 %v4032
      %v4370 = vunpack.c.l.b16 %v4033
      %v4371 = vunpack.c.h.b16 %v4033
      %v4372 = vunpack.c.l.b16 %v4034
      %v4373 = vunpack.c.h.b16 %v4034
      %v4374 = vunpack.c.l.b16 %v4035
      %v4375 = vunpack.c.h.b16 %v4035
      %v4376 = vunpack.c.l.b16 %v4036
      %v4377 = vunpack.c.h.b16 %v4036
      %v4378 = vunpack.c.l.b16 %v4037
      %v4379 = vunpack.c.h.b16 %v4037
      %v4380 = vunpack.c.l.b16 %v4038
      %v4381 = vunpack.c.h.b16 %v4038
      %v4382 = vunpack.c.l.b16 %v4039
      %v4383 = vunpack.c.h.b16 %v4039
      %v4384 = vunpack.c.l.b16 %v4040
      %v4385 = vunpack.c.h.b16 %v4040
      %v4386 = vunpack.c.l.b16 %v4041
      %v4387 = vunpack.c.h.b16 %v4041
      %v4388 = vunpack.c.l.b16 %v4042
      %v4389 = vunpack.c.h.b16 %v4042
      %v4390 = vunpack.c.l.b16 %v4043
      %v4391 = vunpack.c.h.b16 %v4043
      %v4392 = vpack.c.b16 %v4170, %v4168
      %v4393 = vpack.c.b16 %v4171, %v4169
      %v4394 = vpack.c.b16 %v4174, %v4172
      %v4395 = vpack.c.b16 %v4175, %v4173
      %v4396 = vpack.c.b16 %v4178, %v4176
      %v4397 = vpack.c.b16 %v4179, %v4177
      %v4398 = vpack.c.b16 %v4182, %v4180
      %v4399 = vpack.c.b16 %v4183, %v4181
      %v4400 = vpack.c.b16 %v4186, %v4184
      %v4401 = vpack.c.b16 %v4187, %v4185
      %v4402 = vpack.c.b16 %v4190, %v4188
      %v4403 = vpack.c.b16 %v4191, %v4189
      %v4404 = vpack.c.b16 %v4194, %v4192
      %v4405 = vpack.c.b16 %v4195, %v4193
      %v4406 = vpack.c.b16 %v4198, %v4196
      %v4407 = vpack.c.b16 %v4199, %v4197
      %v4408 = vpack.c.b16 %v4202, %v4200
      %v4409 = vpack.c.b16 %v4203, %v4201
      %v4410 = vpack.c.b16 %v4206, %v4204
      %v4411 = vpack.c.b16 %v4207, %v4205
      %v4412 = vpack.c.b16 %v4210, %v4208
      %v4413 = vpack.c.b16 %v4211, %v4209
      %v4414 = vpack.c.b16 %v4214, %v4212
      %v4415 = vpack.c.b16 %v4215, %v4213
      %v4416 = vpack.c.b16 %v4218, %v4216
      %v4417 = vpack.c.b16 %v4219, %v4217
      %v4418 = vpack.c.b16 %v4222, %v4220
      %v4419 = vpack.c.b16 %v4223, %v4221
      %v4420 = vpack.c.b16 %v4226, %v4224
      %v4421 = vpack.c.b16 %v4227, %v4225
      %v4422 = vpack.c.b16 %v4230, %v4228
      %v4423 = vpack.c.b16 %v4231, %v4229
      %v4424 = vpack.c.b16 %v4234, %v4232
      %v4425 = vpack.c.b16 %v4235, %v4233
      %v4426 = vpack.c.b16 %v4238, %v4236
      %v4427 = vpack.c.b16 %v4239, %v4237
      %v4428 = vpack.c.b16 %v4242, %v4240
      %v4429 = vpack.c.b16 %v4243, %v4241
      %v4430 = vpack.c.b16 %v4246, %v4244
      %v4431 = vpack.c.b16 %v4247, %v4245
      %v4432 = vpack.c.b16 %v4250, %v4248
      %v4433 = vpack.c.b16 %v4251, %v4249
      %v4434 = vpack.c.b16 %v4254, %v4252
      %v4435 = vpack.c.b16 %v4255, %v4253
      %v4436 = vpack.c.b16 %v4258, %v4256
      %v4437 = vpack.c.b16 %v4259, %v4257
      %v4438 = vpack.c.b16 %v4262, %v4260
      %v4439 = vpack.c.b16 %v4263, %v4261
      %v4440 = vpack.c.b16 %v4266, %v4264
      %v4441 = vpack.c.b16 %v4267, %v4265
      %v4442 = vpack.c.b16 %v4270, %v4268
      %v4443 = vpack.c.b16 %v4271, %v4269
      %v4444 = vpack.c.b16 %v4274, %v4272
      %v4445 = vpack.c.b16 %v4275, %v4273
      %v4446 = vpack.c.b16 %v4278, %v4276
      %v4447 = vpack.c.b16 %v4279, %v4277
      %v4448 = vpack.c.b16 %v4282, %v4280
      %v4449 = vpack.c.b16 %v4283, %v4281
      %v4450 = vpack.c.b16 %v4286, %v4284
      %v4451 = vpack.c.b16 %v4287, %v4285
      %v4452 = vpack.c.b16 %v4290, %v4288
      %v4453 = vpack.c.b16 %v4291, %v4289
      %v4454 = vpack.c.b16 %v4294, %v4292
      %v4455 = vpack.c.b16 %v4295, %v4293
      %v4456 = vpack.c.b16 %v4298, %v4296
      %v4457 = vpack.c.b16 %v4299, %v4297
      %v4458 = vpack.c.b16 %v4302, %v4300
      %v4459 = vpack.c.b16 %v4303, %v4301
      %v4460 = vpack.c.b16 %v4306, %v4304
      %v4461 = vpack.c.b16 %v4307, %v4305
      %v4462 = vpack.c.b16 %v4310, %v4308
      %v4463 = vpack.c.b16 %v4311, %v4309
      %v4464 = vpack.c.b16 %v4314, %v4312
      %v4465 = vpack.c.b16 %v4315, %v4313
      %v4466 = vpack.c.b16 %v4318, %v4316
      %v4467 = vpack.c.b16 %v4319, %v4317
      %v4468 = vpack.c.b16 %v4322, %v4320
      %v4469 = vpack.c.b16 %v4323, %v4321
      %v4470 = vpack.c.b16 %v4326, %v4324
      %v4471 = vpack.c.b16 %v4327, %v4325
      %v4472 = vpack.c.b16 %v4330, %v4328
      %v4473 = vpack.c.b16 %v4331, %v4329
      %v4474 = vpack.c.b16 %v4334, %v4332
      %v4475 = vpack.c.b16 %v4335, %v4333
      %v4476 = vpack.c.b16 %v4338, %v4336
      %v4477 = vpack.c.b16 %v4339, %v4337
      %v4478 = vpack.c.b16 %v4342, %v4340
      %v4479 = vpack.c.b16 %v4343, %v4341
      %v4480 = vpack.c.b16 %v4346, %v4344
      %v4481 = vpack.c.b16 %v4347, %v4345
      %v4482 = vpack.c.b16 %v4350, %v4348
      %v4483 = vpack.c.b16 %v4351, %v4349
      %v4484 = vpack.c.b16 %v4354, %v4352
      %v4485 = vpack.c.b16 %v4355, %v4353
      %v4486 = vpack.c.b16 %v4358, %v4356
      %v4487 = vpack.c.b16 %v4359, %v4357
      %v4488 = vpack.c.b16 %v4362, %v4360
      %v4489 = vpack.c.b16 %v4363, %v4361
      %v4490 = vpack.c.b16 %v4366, %v4364
      %v4491 = vpack.c.b16 %v4367, %v4365
      %v4492 = vpack.c.b16 %v4370, %v4368
      %v4493 = vpack.c.b16 %v4371, %v4369
      %v4494 = vpack.c.b16 %v4374, %v4372
      %v4495 = vpack.c.b16 %v4375, %v4373
      %v4496 = vpack.c.b16 %v4378, %v4376
      %v4497 = vpack.c.b16 %v4379, %v4377
      %v4498 = vpack.c.b16 %v4382, %v4380
      %v4499 = vpack.c.b16 %v4383, %v4381
      %v4500 = vpack.c.b16 %v4386, %v4384
      %v4501 = vpack.c.b16 %v4387, %v4385
      %v4502 = vpack.c.b16 %v4390, %v4388
      %v4503 = vpack.c.b16 %v4391, %v4389
      %4616 = vmatprep.subr.bf16.mxu0 %v4407
      %4617 = vmatpush1.bf16.msra.mxu0 %v4406
      %4618 = vmatprep.subr.bf16.mxu0 %v4405
      %4619 = vmatpush1.bf16.msra.mxu0 %v4404
      %4620 = vmatprep.subr.bf16.mxu0 %v4403
      %4621 = vmatpush1.bf16.msra.mxu0 %v4402
      %4622 = vmatprep.subr.bf16.mxu0 %v4401
      %4623 = vmatpush1.bf16.msra.mxu0 %v4400
      %4624 = vmatprep.subr.bf16.mxu0 %v4399
      %4625 = vmatpush1.bf16.msra.mxu0 %v4398
      %4626 = vmatprep.subr.bf16.mxu0 %v4397
      %4627 = vmatpush1.bf16.msra.mxu0 %v4396
      %4628 = vmatprep.subr.bf16.mxu0 %v4395
      %4629 = vmatpush1.bf16.msra.mxu0 %v4394
      %4630 = vmatprep.subr.bf16.mxu0 %v4393
      %4631 = vmatpush1.bf16.msra.mxu0 %v4392
      %4632 = vmatprep.subr.bf16.mxu0 %v4423
      %4633 = vmatpush2.bf16.msra.mxu0 %v4422
      %4634 = vmatprep.subr.bf16.mxu0 %v4421
      %4635 = vmatpush2.bf16.msra.mxu0 %v4420
      %4636 = vmatprep.subr.bf16.mxu0 %v4419
      %4637 = vmatpush2.bf16.msra.mxu0 %v4418
      %4638 = vmatprep.subr.bf16.mxu0 %v4417
      %4639 = vmatpush2.bf16.msra.mxu0 %v4416
      %4640 = vmatprep.subr.bf16.mxu0 %v4415
      %4641 = vmatpush2.bf16.msra.mxu0 %v4414
      %4642 = vmatprep.subr.bf16.mxu0 %v4413
      %4643 = vmatpush2.bf16.msra.mxu0 %v4412
      %4644 = vmatprep.subr.bf16.mxu0 %v4411
      %4645 = vmatpush2.bf16.msra.mxu0 %v4410
      %4646 = vmatprep.subr.bf16.mxu0 %v4409
      %4647 = vmatpush2.bf16.msra.mxu0 %v4408
      %4648 = vmatprep.mubr.bf16.mxu0 %v3821
      %4649 = vmatmul.mubr.bf16.gmra.mxu0 %v3820
      %v4650 = vpop.f32.mrf.mxu0
      %v4651 = vadd.f32 %v4049, %v4650
      %v4652 = vpop.f32.mrf.mxu0
      %v4653 = vadd.f32 %v4053, %v4652
      %v4654 = vpop.f32.mrf.mxu0
      %v4655 = vadd.f32 %v4049, %v4654
      %v4656 = vpop.f32.mrf.mxu0
      %v4657 = vadd.f32 %v4053, %v4656
      %4658 = vmatprep.mubr.bf16.mxu0 %v3828
      %4659 = vmatmul.mubr.bf16.gmra.mxu0 %v3827
      %v4660 = vpop.f32.mrf.mxu0
      %v4661 = vadd.f32 %v4049, %v4660
      %v4662 = vpop.f32.mrf.mxu0
      %v4663 = vadd.f32 %v4053, %v4662
      %v4664 = vpop.f32.mrf.mxu0
      %v4665 = vadd.f32 %v4049, %v4664
      %v4666 = vpop.f32.mrf.mxu0
      %v4667 = vadd.f32 %v4053, %v4666
      %4668 = vmatprep.mubr.bf16.mxu0 %v3835
      %4669 = vmatmul.mubr.bf16.gmra.mxu0 %v3834
      %v4670 = vpop.f32.mrf.mxu0
      %v4671 = vadd.f32 %v4049, %v4670
      %v4672 = vpop.f32.mrf.mxu0
      %v4673 = vadd.f32 %v4053, %v4672
      %v4674 = vpop.f32.mrf.mxu0
      %v4675 = vadd.f32 %v4049, %v4674
      %v4676 = vpop.f32.mrf.mxu0
      %v4677 = vadd.f32 %v4053, %v4676
      %4678 = vmatprep.mubr.bf16.mxu0 %v3842
      %4679 = vmatmul.mubr.bf16.gmra.mxu0 %v3841
      %v4680 = vpop.f32.mrf.mxu0
      %v4681 = vadd.f32 %v4049, %v4680
      %v4682 = vpop.f32.mrf.mxu0
      %v4683 = vadd.f32 %v4053, %v4682
      %v4684 = vpop.f32.mrf.mxu0
      %v4685 = vadd.f32 %v4049, %v4684
      %v4686 = vpop.f32.mrf.mxu0
      %v4687 = vadd.f32 %v4053, %v4686
      %4688 = vmatprep.mubr.bf16.mxu0 %v3849
      %4689 = vmatmul.mubr.bf16.gmra.mxu0 %v3848
      %v4690 = vpop.f32.mrf.mxu0
      %v4691 = vadd.f32 %v4049, %v4690
      %v4692 = vpop.f32.mrf.mxu0
      %v4693 = vadd.f32 %v4053, %v4692
      %v4694 = vpop.f32.mrf.mxu0
      %v4695 = vadd.f32 %v4049, %v4694
      %v4696 = vpop.f32.mrf.mxu0
      %v4697 = vadd.f32 %v4053, %v4696
      %4698 = vmatprep.mubr.bf16.mxu0 %v3856
      %4699 = vmatmul.mubr.bf16.gmra.mxu0 %v3855
      %v4700 = vpop.f32.mrf.mxu0
      %v4701 = vadd.f32 %v4049, %v4700
      %v4702 = vpop.f32.mrf.mxu0
      %v4703 = vadd.f32 %v4053, %v4702
      %v4704 = vpop.f32.mrf.mxu0
      %v4705 = vadd.f32 %v4049, %v4704
      %v4706 = vpop.f32.mrf.mxu0
      %v4707 = vadd.f32 %v4053, %v4706
      %4708 = vmatprep.mubr.bf16.mxu0 %v3863
      %4709 = vmatmul.mubr.bf16.gmra.mxu0 %v3862
      %v4710 = vpop.f32.mrf.mxu0
      %v4711 = vadd.f32 %v4049, %v4710
      %v4712 = vpop.f32.mrf.mxu0
      %v4713 = vadd.f32 %v4053, %v4712
      %v4714 = vpop.f32.mrf.mxu0
      %v4715 = vadd.f32 %v4049, %v4714
      %v4716 = vpop.f32.mrf.mxu0
      %v4717 = vadd.f32 %v4053, %v4716
      %4718 = vmatprep.mubr.bf16.mxu0 %v3870
      %4719 = vmatmul.mubr.bf16.gmra.mxu0 %v3869
      %v4720 = vpop.f32.mrf.mxu0
      %v4721 = vadd.f32 %v4049, %v4720
      %v4722 = vpop.f32.mrf.mxu0
      %v4723 = vadd.f32 %v4053, %v4722
      %v4724 = vpop.f32.mrf.mxu0
      %v4725 = vadd.f32 %v4049, %v4724
      %v4726 = vpop.f32.mrf.mxu0
      %v4727 = vadd.f32 %v4053, %v4726
      %4728 = vmatprep.mubr.bf16.mxu0 %v3877
      %4729 = vmatmul.mubr.bf16.gmra.mxu0 %v3876
      %v4730 = vpop.f32.mrf.mxu0
      %v4731 = vadd.f32 %v4049, %v4730
      %v4732 = vpop.f32.mrf.mxu0
      %v4733 = vadd.f32 %v4053, %v4732
      %v4734 = vpop.f32.mrf.mxu0
      %v4735 = vadd.f32 %v4049, %v4734
      %v4736 = vpop.f32.mrf.mxu0
      %v4737 = vadd.f32 %v4053, %v4736
      %4738 = vmatprep.mubr.bf16.mxu0 %v3884
      %4739 = vmatmul.mubr.bf16.gmra.mxu0 %v3883
      %v4740 = vpop.f32.mrf.mxu0
      %v4741 = vadd.f32 %v4049, %v4740
      %v4742 = vpop.f32.mrf.mxu0
      %v4743 = vadd.f32 %v4053, %v4742
      %v4744 = vpop.f32.mrf.mxu0
      %v4745 = vadd.f32 %v4049, %v4744
      %v4746 = vpop.f32.mrf.mxu0
      %v4747 = vadd.f32 %v4053, %v4746
      %4748 = vmatprep.mubr.bf16.mxu0 %v3891
      %4749 = vmatmul.mubr.bf16.gmra.mxu0 %v3890
      %v4750 = vpop.f32.mrf.mxu0
      %v4751 = vadd.f32 %v4049, %v4750
      %v4752 = vpop.f32.mrf.mxu0
      %v4753 = vadd.f32 %v4053, %v4752
      %v4754 = vpop.f32.mrf.mxu0
      %v4755 = vadd.f32 %v4049, %v4754
      %v4756 = vpop.f32.mrf.mxu0
      %v4757 = vadd.f32 %v4053, %v4756
      %4758 = vmatprep.mubr.bf16.mxu0 %v3898
      %4759 = vmatmul.mubr.bf16.gmra.mxu0 %v3897
      %v4760 = vpop.f32.mrf.mxu0
      %v4761 = vadd.f32 %v4049, %v4760
      %v4762 = vpop.f32.mrf.mxu0
      %v4763 = vadd.f32 %v4053, %v4762
      %v4764 = vpop.f32.mrf.mxu0
      %v4765 = vadd.f32 %v4049, %v4764
      %v4766 = vpop.f32.mrf.mxu0
      %v4767 = vadd.f32 %v4053, %v4766
      %4768 = vmatprep.mubr.bf16.mxu0 %v3905
      %4769 = vmatmul.mubr.bf16.gmra.mxu0 %v3904
      %v4770 = vpop.f32.mrf.mxu0
      %v4771 = vadd.f32 %v4049, %v4770
      %v4772 = vpop.f32.mrf.mxu0
      %v4773 = vadd.f32 %v4053, %v4772
      %v4774 = vpop.f32.mrf.mxu0
      %v4775 = vadd.f32 %v4049, %v4774
      %v4776 = vpop.f32.mrf.mxu0
      %v4777 = vadd.f32 %v4053, %v4776
      %4778 = vmatprep.mubr.bf16.mxu0 %v3912
      %4779 = vmatmul.mubr.bf16.gmra.mxu0 %v3911
      %v4780 = vpop.f32.mrf.mxu0
      %v4781 = vadd.f32 %v4049, %v4780
      %v4782 = vpop.f32.mrf.mxu0
      %v4783 = vadd.f32 %v4053, %v4782
      %v4784 = vpop.f32.mrf.mxu0
      %v4785 = vadd.f32 %v4049, %v4784
      %v4786 = vpop.f32.mrf.mxu0
      %v4787 = vadd.f32 %v4053, %v4786
      %4788 = vmatprep.mubr.bf16.mxu0 %v3919
      %4789 = vmatmul.mubr.bf16.gmra.mxu0 %v3918
      %v4790 = vpop.f32.mrf.mxu0
      %v4791 = vadd.f32 %v4049, %v4790
      %v4792 = vpop.f32.mrf.mxu0
      %v4793 = vadd.f32 %v4053, %v4792
      %v4794 = vpop.f32.mrf.mxu0
      %v4795 = vadd.f32 %v4049, %v4794
      %v4796 = vpop.f32.mrf.mxu0
      %v4797 = vadd.f32 %v4053, %v4796
      %4798 = vmatprep.mubr.bf16.mxu0 %v3926
      %4799 = vmatmul.mubr.bf16.gmra.mxu0 %v3925
      %v4800 = vpop.f32.mrf.mxu0
      %v4801 = vadd.f32 %v4049, %v4800
      %v4802 = vpop.f32.mrf.mxu0
      %v4803 = vadd.f32 %v4053, %v4802
      %v4804 = vpop.f32.mrf.mxu0
      %v4805 = vadd.f32 %v4049, %v4804
      %v4806 = vpop.f32.mrf.mxu0
      %v4807 = vadd.f32 %v4053, %v4806
      %4808 = vdwg.mxu0
      %4809 = vmatprep.subr.bf16.mxu0 %v4439
      %4810 = vmatpush1.bf16.msra.mxu0 %v4438
      %4811 = vmatprep.subr.bf16.mxu0 %v4437
      %4812 = vmatpush1.bf16.msra.mxu0 %v4436
      %4813 = vmatprep.subr.bf16.mxu0 %v4435
      %4814 = vmatpush1.bf16.msra.mxu0 %v4434
      %4815 = vmatprep.subr.bf16.mxu0 %v4433
      %4816 = vmatpush1.bf16.msra.mxu0 %v4432
      %4817 = vmatprep.subr.bf16.mxu0 %v4431
      %4818 = vmatpush1.bf16.msra.mxu0 %v4430
      %4819 = vmatprep.subr.bf16.mxu0 %v4429
      %4820 = vmatpush1.bf16.msra.mxu0 %v4428
      %4821 = vmatprep.subr.bf16.mxu0 %v4427
      %4822 = vmatpush1.bf16.msra.mxu0 %v4426
      %4823 = vmatprep.subr.bf16.mxu0 %v4425
      %4824 = vmatpush1.bf16.msra.mxu0 %v4424
      %4825 = vmatprep.subr.bf16.mxu0 %v4455
      %4826 = vmatpush2.bf16.msra.mxu0 %v4454
      %4827 = vmatprep.subr.bf16.mxu0 %v4453
      %4828 = vmatpush2.bf16.msra.mxu0 %v4452
      %4829 = vmatprep.subr.bf16.mxu0 %v4451
      %4830 = vmatpush2.bf16.msra.mxu0 %v4450
      %4831 = vmatprep.subr.bf16.mxu0 %v4449
      %4832 = vmatpush2.bf16.msra.mxu0 %v4448
      %4833 = vmatprep.subr.bf16.mxu0 %v4447
      %4834 = vmatpush2.bf16.msra.mxu0 %v4446
      %4835 = vmatprep.subr.bf16.mxu0 %v4445
      %4836 = vmatpush2.bf16.msra.mxu0 %v4444
      %4837 = vmatprep.subr.bf16.mxu0 %v4443
      %4838 = vmatpush2.bf16.msra.mxu0 %v4442
      %4839 = vmatprep.subr.bf16.mxu0 %v4441
      %4840 = vmatpush2.bf16.msra.mxu0 %v4440
      %4841 = vmatprep.mubr.bf16.mxu0 %v3823
      %4842 = vmatmul.mubr.bf16.gmra.mxu0 %v3822
      %v4843 = vpop.f32.mrf.mxu0
      %v4844 = vadd.f32 %v4651, %v4843
      %v4845 = vpop.f32.mrf.mxu0
      %v4846 = vadd.f32 %v4653, %v4845
      %v4847 = vpop.f32.mrf.mxu0
      %v4848 = vadd.f32 %v4655, %v4847
      %v4849 = vpop.f32.mrf.mxu0
      %v4850 = vadd.f32 %v4657, %v4849
      %4851 = vmatprep.mubr.bf16.mxu0 %v3830
      %4852 = vmatmul.mubr.bf16.gmra.mxu0 %v3829
      %v4853 = vpop.f32.mrf.mxu0
      %v4854 = vadd.f32 %v4661, %v4853
      %v4855 = vpop.f32.mrf.mxu0
      %v4856 = vadd.f32 %v4663, %v4855
      %v4857 = vpop.f32.mrf.mxu0
      %v4858 = vadd.f32 %v4665, %v4857
      %v4859 = vpop.f32.mrf.mxu0
      %v4860 = vadd.f32 %v4667, %v4859
      %4861 = vmatprep.mubr.bf16.mxu0 %v3837
      %4862 = vmatmul.mubr.bf16.gmra.mxu0 %v3836
      %v4863 = vpop.f32.mrf.mxu0
      %v4864 = vadd.f32 %v4671, %v4863
      %v4865 = vpop.f32.mrf.mxu0
      %v4866 = vadd.f32 %v4673, %v4865
      %v4867 = vpop.f32.mrf.mxu0
      %v4868 = vadd.f32 %v4675, %v4867
      %v4869 = vpop.f32.mrf.mxu0
      %v4870 = vadd.f32 %v4677, %v4869
      %4871 = vmatprep.mubr.bf16.mxu0 %v3844
      %4872 = vmatmul.mubr.bf16.gmra.mxu0 %v3843
      %v4873 = vpop.f32.mrf.mxu0
      %v4874 = vadd.f32 %v4681, %v4873
      %v4875 = vpop.f32.mrf.mxu0
      %v4876 = vadd.f32 %v4683, %v4875
      %v4877 = vpop.f32.mrf.mxu0
      %v4878 = vadd.f32 %v4685, %v4877
      %v4879 = vpop.f32.mrf.mxu0
      %v4880 = vadd.f32 %v4687, %v4879
      %4881 = vmatprep.mubr.bf16.mxu0 %v3851
      %4882 = vmatmul.mubr.bf16.gmra.mxu0 %v3850
      %v4883 = vpop.f32.mrf.mxu0
      %v4884 = vadd.f32 %v4691, %v4883
      %v4885 = vpop.f32.mrf.mxu0
      %v4886 = vadd.f32 %v4693, %v4885
      %v4887 = vpop.f32.mrf.mxu0
      %v4888 = vadd.f32 %v4695, %v4887
      %v4889 = vpop.f32.mrf.mxu0
      %v4890 = vadd.f32 %v4697, %v4889
      %4891 = vmatprep.mubr.bf16.mxu0 %v3858
      %4892 = vmatmul.mubr.bf16.gmra.mxu0 %v3857
      %v4893 = vpop.f32.mrf.mxu0
      %v4894 = vadd.f32 %v4701, %v4893
      %v4895 = vpop.f32.mrf.mxu0
      %v4896 = vadd.f32 %v4703, %v4895
      %v4897 = vpop.f32.mrf.mxu0
      %v4898 = vadd.f32 %v4705, %v4897
      %v4899 = vpop.f32.mrf.mxu0
      %v4900 = vadd.f32 %v4707, %v4899
      %4901 = vmatprep.mubr.bf16.mxu0 %v3865
      %4902 = vmatmul.mubr.bf16.gmra.mxu0 %v3864
      %v4903 = vpop.f32.mrf.mxu0
      %v4904 = vadd.f32 %v4711, %v4903
      %v4905 = vpop.f32.mrf.mxu0
      %v4906 = vadd.f32 %v4713, %v4905
      %v4907 = vpop.f32.mrf.mxu0
      %v4908 = vadd.f32 %v4715, %v4907
      %v4909 = vpop.f32.mrf.mxu0
      %v4910 = vadd.f32 %v4717, %v4909
      %4911 = vmatprep.mubr.bf16.mxu0 %v3872
      %4912 = vmatmul.mubr.bf16.gmra.mxu0 %v3871
      %v4913 = vpop.f32.mrf.mxu0
      %v4914 = vadd.f32 %v4721, %v4913
      %v4915 = vpop.f32.mrf.mxu0
      %v4916 = vadd.f32 %v4723, %v4915
      %v4917 = vpop.f32.mrf.mxu0
      %v4918 = vadd.f32 %v4725, %v4917
      %v4919 = vpop.f32.mrf.mxu0
      %v4920 = vadd.f32 %v4727, %v4919
      %4921 = vmatprep.mubr.bf16.mxu0 %v3879
      %4922 = vmatmul.mubr.bf16.gmra.mxu0 %v3878
      %v4923 = vpop.f32.mrf.mxu0
      %v4924 = vadd.f32 %v4731, %v4923
      %v4925 = vpop.f32.mrf.mxu0
      %v4926 = vadd.f32 %v4733, %v4925
      %v4927 = vpop.f32.mrf.mxu0
      %v4928 = vadd.f32 %v4735, %v4927
      %v4929 = vpop.f32.mrf.mxu0
      %v4930 = vadd.f32 %v4737, %v4929
      %4931 = vmatprep.mubr.bf16.mxu0 %v3886
      %4932 = vmatmul.mubr.bf16.gmra.mxu0 %v3885
      %v4933 = vpop.f32.mrf.mxu0
      %v4934 = vadd.f32 %v4741, %v4933
      %v4935 = vpop.f32.mrf.mxu0
      %v4936 = vadd.f32 %v4743, %v4935
      %v4937 = vpop.f32.mrf.mxu0
      %v4938 = vadd.f32 %v4745, %v4937
      %v4939 = vpop.f32.mrf.mxu0
      %v4940 = vadd.f32 %v4747, %v4939
      %4941 = vmatprep.mubr.bf16.mxu0 %v3893
      %4942 = vmatmul.mubr.bf16.gmra.mxu0 %v3892
      %v4943 = vpop.f32.mrf.mxu0
      %v4944 = vadd.f32 %v4751, %v4943
      %v4945 = vpop.f32.mrf.mxu0
      %v4946 = vadd.f32 %v4753, %v4945
      %v4947 = vpop.f32.mrf.mxu0
      %v4948 = vadd.f32 %v4755, %v4947
      %v4949 = vpop.f32.mrf.mxu0
      %v4950 = vadd.f32 %v4757, %v4949
      %4951 = vmatprep.mubr.bf16.mxu0 %v3900
      %4952 = vmatmul.mubr.bf16.gmra.mxu0 %v3899
      %v4953 = vpop.f32.mrf.mxu0
      %v4954 = vadd.f32 %v4761, %v4953
      %v4955 = vpop.f32.mrf.mxu0
      %v4956 = vadd.f32 %v4763, %v4955
      %v4957 = vpop.f32.mrf.mxu0
      %v4958 = vadd.f32 %v4765, %v4957
      %v4959 = vpop.f32.mrf.mxu0
      %v4960 = vadd.f32 %v4767, %v4959
      %4961 = vmatprep.mubr.bf16.mxu0 %v3907
      %4962 = vmatmul.mubr.bf16.gmra.mxu0 %v3906
      %v4963 = vpop.f32.mrf.mxu0
      %v4964 = vadd.f32 %v4771, %v4963
      %v4965 = vpop.f32.mrf.mxu0
      %v4966 = vadd.f32 %v4773, %v4965
      %v4967 = vpop.f32.mrf.mxu0
      %v4968 = vadd.f32 %v4775, %v4967
      %v4969 = vpop.f32.mrf.mxu0
      %v4970 = vadd.f32 %v4777, %v4969
      %4971 = vmatprep.mubr.bf16.mxu0 %v3914
      %4972 = vmatmul.mubr.bf16.gmra.mxu0 %v3913
      %v4973 = vpop.f32.mrf.mxu0
      %v4974 = vadd.f32 %v4781, %v4973
      %v4975 = vpop.f32.mrf.mxu0
      %v4976 = vadd.f32 %v4783, %v4975
      %v4977 = vpop.f32.mrf.mxu0
      %v4978 = vadd.f32 %v4785, %v4977
      %v4979 = vpop.f32.mrf.mxu0
      %v4980 = vadd.f32 %v4787, %v4979
      %4981 = vmatprep.mubr.bf16.mxu0 %v3921
      %4982 = vmatmul.mubr.bf16.gmra.mxu0 %v3920
      %v4983 = vpop.f32.mrf.mxu0
      %v4984 = vadd.f32 %v4791, %v4983
      %v4985 = vpop.f32.mrf.mxu0
      %v4986 = vadd.f32 %v4793, %v4985
      %v4987 = vpop.f32.mrf.mxu0
      %v4988 = vadd.f32 %v4795, %v4987
      %v4989 = vpop.f32.mrf.mxu0
      %v4990 = vadd.f32 %v4797, %v4989
      %4991 = vmatprep.mubr.bf16.mxu0 %v3928
      %4992 = vmatmul.mubr.bf16.gmra.mxu0 %v3927
      %v4993 = vpop.f32.mrf.mxu0
      %v4994 = vadd.f32 %v4801, %v4993
      %v4995 = vpop.f32.mrf.mxu0
      %v4996 = vadd.f32 %v4803, %v4995
      %v4997 = vpop.f32.mrf.mxu0
      %v4998 = vadd.f32 %v4805, %v4997
      %v4999 = vpop.f32.mrf.mxu0
      %v5000 = vadd.f32 %v4807, %v4999
      %5001 = vdwg.mxu0
      %5002 = vmatprep.subr.bf16.mxu0 %v4471
      %5003 = vmatpush1.bf16.msra.mxu0 %v4470
      %5004 = vmatprep.subr.bf16.mxu0 %v4469
      %5005 = vmatpush1.bf16.msra.mxu0 %v4468
      %5006 = vmatprep.subr.bf16.mxu0 %v4467
      %5007 = vmatpush1.bf16.msra.mxu0 %v4466
      %5008 = vmatprep.subr.bf16.mxu0 %v4465
      %5009 = vmatpush1.bf16.msra.mxu0 %v4464
      %5010 = vmatprep.subr.bf16.mxu0 %v4463
      %5011 = vmatpush1.bf16.msra.mxu0 %v4462
      %5012 = vmatprep.subr.bf16.mxu0 %v4461
      %5013 = vmatpush1.bf16.msra.mxu0 %v4460
      %5014 = vmatprep.subr.bf16.mxu0 %v4459
      %5015 = vmatpush1.bf16.msra.mxu0 %v4458
      %5016 = vmatprep.subr.bf16.mxu0 %v4457
      %5017 = vmatpush1.bf16.msra.mxu0 %v4456
      %5018 = vmatprep.subr.bf16.mxu0 %v4487
      %5019 = vmatpush2.bf16.msra.mxu0 %v4486
      %5020 = vmatprep.subr.bf16.mxu0 %v4485
      %5021 = vmatpush2.bf16.msra.mxu0 %v4484
      %5022 = vmatprep.subr.bf16.mxu0 %v4483
      %5023 = vmatpush2.bf16.msra.mxu0 %v4482
      %5024 = vmatprep.subr.bf16.mxu0 %v4481
      %5025 = vmatpush2.bf16.msra.mxu0 %v4480
      %5026 = vmatprep.subr.bf16.mxu0 %v4479
      %5027 = vmatpush2.bf16.msra.mxu0 %v4478
      %5028 = vmatprep.subr.bf16.mxu0 %v4477
      %5029 = vmatpush2.bf16.msra.mxu0 %v4476
      %5030 = vmatprep.subr.bf16.mxu0 %v4475
      %5031 = vmatpush2.bf16.msra.mxu0 %v4474
      %5032 = vmatprep.subr.bf16.mxu0 %v4473
      %5033 = vmatpush2.bf16.msra.mxu0 %v4472
      %5034 = vmatprep.mubr.bf16.mxu0 %v3825
      %5035 = vmatmul.mubr.bf16.gmra.mxu0 %v3824
      %v5036 = vpop.f32.mrf.mxu0
      %v5037 = vadd.f32 %v4844, %v5036
      %v5038 = vpop.f32.mrf.mxu0
      %v5039 = vadd.f32 %v4846, %v5038
      %v5040 = vpop.f32.mrf.mxu0
      %v5041 = vadd.f32 %v4848, %v5040
      %v5042 = vpop.f32.mrf.mxu0
      %v5043 = vadd.f32 %v4850, %v5042
      %5044 = vmatprep.mubr.bf16.mxu0 %v3832
      %5045 = vmatmul.mubr.bf16.gmra.mxu0 %v3831
      %v5046 = vpop.f32.mrf.mxu0
      %v5047 = vadd.f32 %v4854, %v5046
      %v5048 = vpop.f32.mrf.mxu0
      %v5049 = vadd.f32 %v4856, %v5048
      %v5050 = vpop.f32.mrf.mxu0
      %v5051 = vadd.f32 %v4858, %v5050
      %v5052 = vpop.f32.mrf.mxu0
      %v5053 = vadd.f32 %v4860, %v5052
      %5054 = vmatprep.mubr.bf16.mxu0 %v3839
      %5055 = vmatmul.mubr.bf16.gmra.mxu0 %v3838
      %v5056 = vpop.f32.mrf.mxu0
      %v5057 = vadd.f32 %v4864, %v5056
      %v5058 = vpop.f32.mrf.mxu0
      %v5059 = vadd.f32 %v4866, %v5058
      %v5060 = vpop.f32.mrf.mxu0
      %v5061 = vadd.f32 %v4868, %v5060
      %v5062 = vpop.f32.mrf.mxu0
      %v5063 = vadd.f32 %v4870, %v5062
      %5064 = vmatprep.mubr.bf16.mxu0 %v3846
      %5065 = vmatmul.mubr.bf16.gmra.mxu0 %v3845
      %v5066 = vpop.f32.mrf.mxu0
      %v5067 = vadd.f32 %v4874, %v5066
      %v5068 = vpop.f32.mrf.mxu0
      %v5069 = vadd.f32 %v4876, %v5068
      %v5070 = vpop.f32.mrf.mxu0
      %v5071 = vadd.f32 %v4878, %v5070
      %v5072 = vpop.f32.mrf.mxu0
      %v5073 = vadd.f32 %v4880, %v5072
      %5074 = vmatprep.mubr.bf16.mxu0 %v3853
      %5075 = vmatmul.mubr.bf16.gmra.mxu0 %v3852
      %v5076 = vpop.f32.mrf.mxu0
      %v5077 = vadd.f32 %v4884, %v5076
      %v5078 = vpop.f32.mrf.mxu0
      %v5079 = vadd.f32 %v4886, %v5078
      %v5080 = vpop.f32.mrf.mxu0
      %v5081 = vadd.f32 %v4888, %v5080
      %v5082 = vpop.f32.mrf.mxu0
      %v5083 = vadd.f32 %v4890, %v5082
      %5084 = vmatprep.mubr.bf16.mxu0 %v3860
      %5085 = vmatmul.mubr.bf16.gmra.mxu0 %v3859
      %v5086 = vpop.f32.mrf.mxu0
      %v5087 = vadd.f32 %v4894, %v5086
      %v5088 = vpop.f32.mrf.mxu0
      %v5089 = vadd.f32 %v4896, %v5088
      %v5090 = vpop.f32.mrf.mxu0
      %v5091 = vadd.f32 %v4898, %v5090
      %v5092 = vpop.f32.mrf.mxu0
      %v5093 = vadd.f32 %v4900, %v5092
      %5094 = vmatprep.mubr.bf16.mxu0 %v3867
      %5095 = vmatmul.mubr.bf16.gmra.mxu0 %v3866
      %v5096 = vpop.f32.mrf.mxu0
      %v5097 = vadd.f32 %v4904, %v5096
      %v5098 = vpop.f32.mrf.mxu0
      %v5099 = vadd.f32 %v4906, %v5098
      %v5100 = vpop.f32.mrf.mxu0
      %v5101 = vadd.f32 %v4908, %v5100
      %v5102 = vpop.f32.mrf.mxu0
      %v5103 = vadd.f32 %v4910, %v5102
      %5104 = vmatprep.mubr.bf16.mxu0 %v3874
      %5105 = vmatmul.mubr.bf16.gmra.mxu0 %v3873
      %v5106 = vpop.f32.mrf.mxu0
      %v5107 = vadd.f32 %v4914, %v5106
      %v5108 = vpop.f32.mrf.mxu0
      %v5109 = vadd.f32 %v4916, %v5108
      %v5110 = vpop.f32.mrf.mxu0
      %v5111 = vadd.f32 %v4918, %v5110
      %v5112 = vpop.f32.mrf.mxu0
      %v5113 = vadd.f32 %v4920, %v5112
      %5114 = vmatprep.mubr.bf16.mxu0 %v3881
      %5115 = vmatmul.mubr.bf16.gmra.mxu0 %v3880
      %v5116 = vpop.f32.mrf.mxu0
      %v5117 = vadd.f32 %v4924, %v5116
      %v5118 = vpop.f32.mrf.mxu0
      %v5119 = vadd.f32 %v4926, %v5118
      %v5120 = vpop.f32.mrf.mxu0
      %v5121 = vadd.f32 %v4928, %v5120
      %v5122 = vpop.f32.mrf.mxu0
      %v5123 = vadd.f32 %v4930, %v5122
      %5124 = vmatprep.mubr.bf16.mxu0 %v3888
      %5125 = vmatmul.mubr.bf16.gmra.mxu0 %v3887
      %v5126 = vpop.f32.mrf.mxu0
      %v5127 = vadd.f32 %v4934, %v5126
      %v5128 = vpop.f32.mrf.mxu0
      %v5129 = vadd.f32 %v4936, %v5128
      %v5130 = vpop.f32.mrf.mxu0
      %v5131 = vadd.f32 %v4938, %v5130
      %v5132 = vpop.f32.mrf.mxu0
      %v5133 = vadd.f32 %v4940, %v5132
      %5134 = vmatprep.mubr.bf16.mxu0 %v3895
      %5135 = vmatmul.mubr.bf16.gmra.mxu0 %v3894
      %v5136 = vpop.f32.mrf.mxu0
      %v5137 = vadd.f32 %v4944, %v5136
      %v5138 = vpop.f32.mrf.mxu0
      %v5139 = vadd.f32 %v4946, %v5138
      %v5140 = vpop.f32.mrf.mxu0
      %v5141 = vadd.f32 %v4948, %v5140
      %v5142 = vpop.f32.mrf.mxu0
      %v5143 = vadd.f32 %v4950, %v5142
      %5144 = vmatprep.mubr.bf16.mxu0 %v3902
      %5145 = vmatmul.mubr.bf16.gmra.mxu0 %v3901
      %v5146 = vpop.f32.mrf.mxu0
      %v5147 = vadd.f32 %v4954, %v5146
      %v5148 = vpop.f32.mrf.mxu0
      %v5149 = vadd.f32 %v4956, %v5148
      %v5150 = vpop.f32.mrf.mxu0
      %v5151 = vadd.f32 %v4958, %v5150
      %v5152 = vpop.f32.mrf.mxu0
      %v5153 = vadd.f32 %v4960, %v5152
      %5154 = vmatprep.mubr.bf16.mxu0 %v3909
      %5155 = vmatmul.mubr.bf16.gmra.mxu0 %v3908
      %v5156 = vpop.f32.mrf.mxu0
      %v5157 = vadd.f32 %v4964, %v5156
      %v5158 = vpop.f32.mrf.mxu0
      %v5159 = vadd.f32 %v4966, %v5158
      %v5160 = vpop.f32.mrf.mxu0
      %v5161 = vadd.f32 %v4968, %v5160
      %v5162 = vpop.f32.mrf.mxu0
      %v5163 = vadd.f32 %v4970, %v5162
      %5164 = vmatprep.mubr.bf16.mxu0 %v3916
      %5165 = vmatmul.mubr.bf16.gmra.mxu0 %v3915
      %v5166 = vpop.f32.mrf.mxu0
      %v5167 = vadd.f32 %v4974, %v5166
      %v5168 = vpop.f32.mrf.mxu0
      %v5169 = vadd.f32 %v4976, %v5168
      %v5170 = vpop.f32.mrf.mxu0
      %v5171 = vadd.f32 %v4978, %v5170
      %v5172 = vpop.f32.mrf.mxu0
      %v5173 = vadd.f32 %v4980, %v5172
      %5174 = vmatprep.mubr.bf16.mxu0 %v3923
      %5175 = vmatmul.mubr.bf16.gmra.mxu0 %v3922
      %v5176 = vpop.f32.mrf.mxu0
      %v5177 = vadd.f32 %v4984, %v5176
      %v5178 = vpop.f32.mrf.mxu0
      %v5179 = vadd.f32 %v4986, %v5178
      %v5180 = vpop.f32.mrf.mxu0
      %v5181 = vadd.f32 %v4988, %v5180
      %v5182 = vpop.f32.mrf.mxu0
      %v5183 = vadd.f32 %v4990, %v5182
      %5184 = vmatprep.mubr.bf16.mxu0 %v3930
      %5185 = vmatmul.mubr.bf16.gmra.mxu0 %v3929
      %v5186 = vpop.f32.mrf.mxu0
      %v5187 = vadd.f32 %v4994, %v5186
      %v5188 = vpop.f32.mrf.mxu0
      %v5189 = vadd.f32 %v4996, %v5188
      %v5190 = vpop.f32.mrf.mxu0
      %v5191 = vadd.f32 %v4998, %v5190
      %v5192 = vpop.f32.mrf.mxu0
      %v5193 = vadd.f32 %v5000, %v5192
      %5194 = vdwg.mxu0
      %5195 = vmatprep.subr.bf16.mxu0 %v4503
      %5196 = vmatpush1.bf16.msra.mxu0 %v4502
      %5197 = vmatprep.subr.bf16.mxu0 %v4501
      %5198 = vmatpush1.bf16.msra.mxu0 %v4500
      %5199 = vmatprep.subr.bf16.mxu0 %v4499
      %5200 = vmatpush1.bf16.msra.mxu0 %v4498
      %5201 = vmatprep.subr.bf16.mxu0 %v4497
      %5202 = vmatpush1.bf16.msra.mxu0 %v4496
      %5203 = vmatprep.subr.bf16.mxu0 %v4495
      %5204 = vmatpush1.bf16.msra.mxu0 %v4494
      %5205 = vmatprep.subr.bf16.mxu0 %v4493
      %5206 = vmatpush1.bf16.msra.mxu0 %v4492
      %5207 = vmatprep.subr.bf16.mxu0 %v4491
      %5208 = vmatpush1.bf16.msra.mxu0 %v4490
      %5209 = vmatprep.subr.bf16.mxu0 %v4489
      %5210 = vmatpush1.bf16.msra.mxu0 %v4488
      %5211 = vmatprep.subr.bf16.mxu0 0
      %5212 = vmatpush2.bf16.msra.mxu0 0
      %5213 = vmatprep.subr.bf16.mxu0 0
      %5214 = vmatpush2.bf16.msra.mxu0 0
      %5215 = vmatprep.subr.bf16.mxu0 0
      %5216 = vmatpush2.bf16.msra.mxu0 0
      %5217 = vmatprep.subr.bf16.mxu0 0
      %5218 = vmatpush2.bf16.msra.mxu0 0
      %5219 = vmatprep.subr.bf16.mxu0 0
      %5220 = vmatpush2.bf16.msra.mxu0 0
      %5221 = vmatprep.subr.bf16.mxu0 0
      %5222 = vmatpush2.bf16.msra.mxu0 0
      %5223 = vmatprep.subr.bf16.mxu0 0
      %5224 = vmatpush2.bf16.msra.mxu0 0
      %5225 = vmatprep.subr.bf16.mxu0 0
      %5226 = vmatpush2.bf16.msra.mxu0 0
      %5227 = vmatprep.mubr.bf16.mxu0 0
      %5228 = vmatmul.mubr.bf16.gmra.mxu0 %v3826
      %v5229 = vpop.f32.mrf.mxu0
      %v5230 = vadd.f32 %v5037, %v5229
      %v5231 = vpop.f32.mrf.mxu0
      %v5232 = vadd.f32 %v5039, %v5231
      %v5233 = vpop.f32.mrf.mxu0
      %v5234 = vadd.f32 %v5041, %v5233
      %v5235 = vpop.f32.mrf.mxu0
      %v5236 = vadd.f32 %v5043, %v5235
      %5237 = vmatprep.mubr.bf16.mxu0 0
      %5238 = vmatmul.mubr.bf16.gmra.mxu0 %v3833
      %v5239 = vpop.f32.mrf.mxu0
      %v5240 = vadd.f32 %v5047, %v5239
      %v5241 = vpop.f32.mrf.mxu0
      %v5242 = vadd.f32 %v5049, %v5241
      %v5243 = vpop.f32.mrf.mxu0
      %v5244 = vadd.f32 %v5051, %v5243
      %v5245 = vpop.f32.mrf.mxu0
      %v5246 = vadd.f32 %v5053, %v5245
      %5247 = vmatprep.mubr.bf16.mxu0 0
      %5248 = vmatmul.mubr.bf16.gmra.mxu0 %v3840
      %v5249 = vpop.f32.mrf.mxu0
      %v5250 = vadd.f32 %v5057, %v5249
      %v5251 = vpop.f32.mrf.mxu0
      %v5252 = vadd.f32 %v5059, %v5251
      %v5253 = vpop.f32.mrf.mxu0
      %v5254 = vadd.f32 %v5061, %v5253
      %v5255 = vpop.f32.mrf.mxu0
      %v5256 = vadd.f32 %v5063, %v5255
      %5257 = vmatprep.mubr.bf16.mxu0 0
      %5258 = vmatmul.mubr.bf16.gmra.mxu0 %v3847
      %v5259 = vpop.f32.mrf.mxu0
      %v5260 = vadd.f32 %v5067, %v5259
      %v5261 = vpop.f32.mrf.mxu0
      %v5262 = vadd.f32 %v5069, %v5261
      %v5263 = vpop.f32.mrf.mxu0
      %v5264 = vadd.f32 %v5071, %v5263
      %v5265 = vpop.f32.mrf.mxu0
      %v5266 = vadd.f32 %v5073, %v5265
      %5267 = vmatprep.mubr.bf16.mxu0 0
      %5268 = vmatmul.mubr.bf16.gmra.mxu0 %v3854
      %v5269 = vpop.f32.mrf.mxu0
      %v5270 = vadd.f32 %v5077, %v5269
      %v5271 = vpop.f32.mrf.mxu0
      %v5272 = vadd.f32 %v5079, %v5271
      %v5273 = vpop.f32.mrf.mxu0
      %v5274 = vadd.f32 %v5081, %v5273
      %v5275 = vpop.f32.mrf.mxu0
      %v5276 = vadd.f32 %v5083, %v5275
      %5277 = vmatprep.mubr.bf16.mxu0 0
      %5278 = vmatmul.mubr.bf16.gmra.mxu0 %v3861
      %v5279 = vpop.f32.mrf.mxu0
      %v5280 = vadd.f32 %v5087, %v5279
      %v5281 = vpop.f32.mrf.mxu0
      %v5282 = vadd.f32 %v5089, %v5281
      %v5283 = vpop.f32.mrf.mxu0
      %v5284 = vadd.f32 %v5091, %v5283
      %v5285 = vpop.f32.mrf.mxu0
      %v5286 = vadd.f32 %v5093, %v5285
      %5287 = vmatprep.mubr.bf16.mxu0 0
      %5288 = vmatmul.mubr.bf16.gmra.mxu0 %v3868
      %v5289 = vpop.f32.mrf.mxu0
      %v5290 = vadd.f32 %v5097, %v5289
      %v5291 = vpop.f32.mrf.mxu0
      %v5292 = vadd.f32 %v5099, %v5291
      %v5293 = vpop.f32.mrf.mxu0
      %v5294 = vadd.f32 %v5101, %v5293
      %v5295 = vpop.f32.mrf.mxu0
      %v5296 = vadd.f32 %v5103, %v5295
      %5297 = vmatprep.mubr.bf16.mxu0 0
      %5298 = vmatmul.mubr.bf16.gmra.mxu0 %v3875
      %v5299 = vpop.f32.mrf.mxu0
      %v5300 = vadd.f32 %v5107, %v5299
      %v5301 = vpop.f32.mrf.mxu0
      %v5302 = vadd.f32 %v5109, %v5301
      %v5303 = vpop.f32.mrf.mxu0
      %v5304 = vadd.f32 %v5111, %v5303
      %v5305 = vpop.f32.mrf.mxu0
      %v5306 = vadd.f32 %v5113, %v5305
      %5307 = vmatprep.mubr.bf16.mxu0 0
      %5308 = vmatmul.mubr.bf16.gmra.mxu0 %v3882
      %v5309 = vpop.f32.mrf.mxu0
      %v5310 = vadd.f32 %v5117, %v5309
      %v5311 = vpop.f32.mrf.mxu0
      %v5312 = vadd.f32 %v5119, %v5311
      %v5313 = vpop.f32.mrf.mxu0
      %v5314 = vadd.f32 %v5121, %v5313
      %v5315 = vpop.f32.mrf.mxu0
      %v5316 = vadd.f32 %v5123, %v5315
      %5317 = vmatprep.mubr.bf16.mxu0 0
      %5318 = vmatmul.mubr.bf16.gmra.mxu0 %v3889
      %v5319 = vpop.f32.mrf.mxu0
      %v5320 = vadd.f32 %v5127, %v5319
      %v5321 = vpop.f32.mrf.mxu0
      %v5322 = vadd.f32 %v5129, %v5321
      %v5323 = vpop.f32.mrf.mxu0
      %v5324 = vadd.f32 %v5131, %v5323
      %v5325 = vpop.f32.mrf.mxu0
      %v5326 = vadd.f32 %v5133, %v5325
      %5327 = vmatprep.mubr.bf16.mxu0 0
      %5328 = vmatmul.mubr.bf16.gmra.mxu0 %v3896
      %v5329 = vpop.f32.mrf.mxu0
      %v5330 = vadd.f32 %v5137, %v5329
      %v5331 = vpop.f32.mrf.mxu0
      %v5332 = vadd.f32 %v5139, %v5331
      %v5333 = vpop.f32.mrf.mxu0
      %v5334 = vadd.f32 %v5141, %v5333
      %v5335 = vpop.f32.mrf.mxu0
      %v5336 = vadd.f32 %v5143, %v5335
      %5337 = vmatprep.mubr.bf16.mxu0 0
      %5338 = vmatmul.mubr.bf16.gmra.mxu0 %v3903
      %v5339 = vpop.f32.mrf.mxu0
      %v5340 = vadd.f32 %v5147, %v5339
      %v5341 = vpop.f32.mrf.mxu0
      %v5342 = vadd.f32 %v5149, %v5341
      %v5343 = vpop.f32.mrf.mxu0
      %v5344 = vadd.f32 %v5151, %v5343
      %v5345 = vpop.f32.mrf.mxu0
      %v5346 = vadd.f32 %v5153, %v5345
      %5347 = vmatprep.mubr.bf16.mxu0 0
      %5348 = vmatmul.mubr.bf16.gmra.mxu0 %v3910
      %v5349 = vpop.f32.mrf.mxu0
      %v5350 = vadd.f32 %v5157, %v5349
      %v5351 = vpop.f32.mrf.mxu0
      %v5352 = vadd.f32 %v5159, %v5351
      %v5353 = vpop.f32.mrf.mxu0
      %v5354 = vadd.f32 %v5161, %v5353
      %v5355 = vpop.f32.mrf.mxu0
      %v5356 = vadd.f32 %v5163, %v5355
      %5357 = vmatprep.mubr.bf16.mxu0 0
      %5358 = vmatmul.mubr.bf16.gmra.mxu0 %v3917
      %v5359 = vpop.f32.mrf.mxu0
      %v5360 = vadd.f32 %v5167, %v5359
      %v5361 = vpop.f32.mrf.mxu0
      %v5362 = vadd.f32 %v5169, %v5361
      %v5363 = vpop.f32.mrf.mxu0
      %v5364 = vadd.f32 %v5171, %v5363
      %v5365 = vpop.f32.mrf.mxu0
      %v5366 = vadd.f32 %v5173, %v5365
      %5367 = vmatprep.mubr.bf16.mxu0 0
      %5368 = vmatmul.mubr.bf16.gmra.mxu0 %v3924
      %v5369 = vpop.f32.mrf.mxu0
      %v5370 = vadd.f32 %v5177, %v5369
      %v5371 = vpop.f32.mrf.mxu0
      %v5372 = vadd.f32 %v5179, %v5371
      %v5373 = vpop.f32.mrf.mxu0
      %v5374 = vadd.f32 %v5181, %v5373
      %v5375 = vpop.f32.mrf.mxu0
      %v5376 = vadd.f32 %v5183, %v5375
      %5377 = vmatprep.mubr.bf16.mxu0 0
      %5378 = vmatmul.mubr.bf16.gmra.mxu0 %v3931
      %v5379 = vpop.f32.mrf.mxu0
      %v5380 = vadd.f32 %v5187, %v5379
      %v5381 = vpop.f32.mrf.mxu0
      %v5382 = vadd.f32 %v5189, %v5381
      %v5383 = vpop.f32.mrf.mxu0
      %v5384 = vadd.f32 %v5191, %v5383
      %v5385 = vpop.f32.mrf.mxu0
      %v5386 = vadd.f32 %v5193, %v5385
      %5387 = vdwg.mxu0
      %v5388 = vtanh.pop %v5230
      %v5389 = vtanh.pop %v5232
      %v5390 = vtanh.pop %v5234
      %v5391 = vtanh.pop %v5236
      %v5392 = vtanh.pop %v5240
      %v5393 = vtanh.pop %v5242
      %v5394 = vtanh.pop %v5244
      %v5395 = vtanh.pop %v5246
      %v5396 = vtanh.pop %v5250
      %v5397 = vtanh.pop %v5252
      %v5398 = vtanh.pop %v5254
      %v5399 = vtanh.pop %v5256
      %v5400 = vtanh.pop %v5260
      %v5401 = vtanh.pop %v5262
      %v5402 = vtanh.pop %v5264
      %v5403 = vtanh.pop %v5266
      %v5404 = vtanh.pop %v5270
      %v5405 = vtanh.pop %v5272
      %v5406 = vtanh.pop %v5274
      %v5407 = vtanh.pop %v5276
      %v5408 = vtanh.pop %v5280
      %v5409 = vtanh.pop %v5282
      %v5410 = vtanh.pop %v5284
      %v5411 = vtanh.pop %v5286
      %v5412 = vtanh.pop %v5290
      %v5413 = vtanh.pop %v5292
      %v5414 = vtanh.pop %v5294
      %v5415 = vtanh.pop %v5296
      %v5416 = vtanh.pop %v5300
      %v5417 = vtanh.pop %v5302
      %v5418 = vtanh.pop %v5304
      %v5419 = vtanh.pop %v5306
      %v5420 = vtanh.pop %v5310
      %v5421 = vtanh.pop %v5312
      %v5422 = vtanh.pop %v5314
      %v5423 = vtanh.pop %v5316
      %v5424 = vtanh.pop %v5320
      %v5425 = vtanh.pop %v5322
      %v5426 = vtanh.pop %v5324
      %v5427 = vtanh.pop %v5326
      %v5428 = vtanh.pop %v5330
      %v5429 = vtanh.pop %v5332
      %v5430 = vtanh.pop %v5334
      %v5431 = vtanh.pop %v5336
      %v5432 = vtanh.pop %v5340
      %v5433 = vtanh.pop %v5342
      %v5434 = vtanh.pop %v5344
      %v5435 = vtanh.pop %v5346
      %v5436 = vtanh.pop %v5350
      %v5437 = vtanh.pop %v5352
      %v5438 = vtanh.pop %v5354
      %v5439 = vtanh.pop %v5356
      %v5440 = vtanh.pop %v5360
      %v5441 = vtanh.pop %v5362
      %v5442 = vtanh.pop %v5364
      %v5443 = vtanh.pop %v5366
      %v5444 = vtanh.pop %v5370
      %v5445 = vtanh.pop %v5372
      %v5446 = vtanh.pop %v5374
      %v5447 = vtanh.pop %v5376
      %v5448 = vtanh.pop %v5380
      %v5449 = vtanh.pop %v5382
      %v5450 = vtanh.pop %v5384
      %v5451 = vtanh.pop %v5386
      %v5452 = vld [vmem:[%s5] sm:$0x3]
      %v5454 = vlaneseq
      %v5455 = vshrl.u32 %v5454, 7
      %v5456 = vsub.s32 0, %v5455
      %v5457 = vrot.slane %v5452, %v5456
      %v5458 = vlaneseq
      %v5459 = vshrl.u32 %v5458, 7
      %v5460 = vsub.s32 1, %v5459
      %v5461 = vrot.slane %v5452, %v5460
      %v5464 = vmul.f32 %v5388, %v5457
      %v5465 = vmul.f32 %v5389, %v5461
      %v5466 = vmul.f32 %v5390, %v5457
      %v5467 = vmul.f32 %v5391, %v5461
      %v5468 = vmul.f32 %v5392, %v5457
      %v5469 = vmul.f32 %v5393, %v5461
      %v5470 = vmul.f32 %v5394, %v5457
      %v5471 = vmul.f32 %v5395, %v5461
      %v5472 = vmul.f32 %v5396, %v5457
      %v5473 = vmul.f32 %v5397, %v5461
      %v5474 = vmul.f32 %v5398, %v5457
      %v5475 = vmul.f32 %v5399, %v5461
      %v5476 = vmul.f32 %v5400, %v5457
      %v5477 = vmul.f32 %v5401, %v5461
      %v5478 = vmul.f32 %v5402, %v5457
      %v5479 = vmul.f32 %v5403, %v5461
      %v5480 = vmul.f32 %v5404, %v5457
      %v5481 = vmul.f32 %v5405, %v5461
      %v5482 = vmul.f32 %v5406, %v5457
      %v5483 = vmul.f32 %v5407, %v5461
      %v5484 = vmul.f32 %v5408, %v5457
      %v5485 = vmul.f32 %v5409, %v5461
      %v5486 = vmul.f32 %v5410, %v5457
      %v5487 = vmul.f32 %v5411, %v5461
      %v5488 = vmul.f32 %v5412, %v5457
      %v5489 = vmul.f32 %v5413, %v5461
      %v5490 = vmul.f32 %v5414, %v5457
      %v5491 = vmul.f32 %v5415, %v5461
      %v5492 = vmul.f32 %v5416, %v5457
      %v5493 = vmul.f32 %v5417, %v5461
      %v5494 = vmul.f32 %v5418, %v5457
      %v5495 = vmul.f32 %v5419, %v5461
      %v5496 = vmul.f32 %v5420, %v5457
      %v5497 = vmul.f32 %v5421, %v5461
      %v5498 = vmul.f32 %v5422, %v5457
      %v5499 = vmul.f32 %v5423, %v5461
      %v5500 = vmul.f32 %v5424, %v5457
      %v5501 = vmul.f32 %v5425, %v5461
      %v5502 = vmul.f32 %v5426, %v5457
      %v5503 = vmul.f32 %v5427, %v5461
      %v5504 = vmul.f32 %v5428, %v5457
      %v5505 = vmul.f32 %v5429, %v5461
      %v5506 = vmul.f32 %v5430, %v5457
      %v5507 = vmul.f32 %v5431, %v5461
      %v5508 = vmul.f32 %v5432, %v5457
      %v5509 = vmul.f32 %v5433, %v5461
      %v5510 = vmul.f32 %v5434, %v5457
      %v5511 = vmul.f32 %v5435, %v5461
      %v5512 = vmul.f32 %v5436, %v5457
      %v5513 = vmul.f32 %v5437, %v5461
      %v5514 = vmul.f32 %v5438, %v5457
      %v5515 = vmul.f32 %v5439, %v5461
      %v5516 = vmul.f32 %v5440, %v5457
      %v5517 = vmul.f32 %v5441, %v5461
      %v5518 = vmul.f32 %v5442, %v5457
      %v5519 = vmul.f32 %v5443, %v5461
      %v5520 = vmul.f32 %v5444, %v5457
      %v5521 = vmul.f32 %v5445, %v5461
      %v5522 = vmul.f32 %v5446, %v5457
      %v5523 = vmul.f32 %v5447, %v5461
      %v5524 = vmul.f32 %v5448, %v5457
      %v5525 = vmul.f32 %v5449, %v5461
      %v5526 = vmul.f32 %v5450, %v5457
      %v5527 = vmul.f32 %v5451, %v5461
      %vm5528 = vcmask 523264
      %v5529 = vsel %vm5528, %v5465, 0.0
      %v5530 = vadd.f32 %v5464, %v5529
      %5531 = vadd.xlane.f32.xlu0 %v5530
      %v5532 = vpop.xlane.xlu0 %5531
      %v5533 = vsel %vm5528, %v5467, 0.0
      %v5534 = vadd.f32 %v5466, %v5533
      %5535 = vadd.xlane.f32.xlu0 %v5534
      %v5536 = vpop.xlane.xlu0 %5535
      %v5537 = vsel %vm5528, %v5469, 0.0
      %v5538 = vadd.f32 %v5468, %v5537
      %5539 = vadd.xlane.f32.xlu0 %v5538
      %v5540 = vpop.xlane.xlu0 %5539
      %v5541 = vsel %vm5528, %v5471, 0.0
      %v5542 = vadd.f32 %v5470, %v5541
      %5543 = vadd.xlane.f32.xlu0 %v5542
      %v5544 = vpop.xlane.xlu0 %5543
      %v5545 = vsel %vm5528, %v5473, 0.0
      %v5546 = vadd.f32 %v5472, %v5545
      %5547 = vadd.xlane.f32.xlu0 %v5546
      %v5548 = vpop.xlane.xlu0 %5547
      %v5549 = vsel %vm5528, %v5475, 0.0
      %v5550 = vadd.f32 %v5474, %v5549
      %5551 = vadd.xlane.f32.xlu0 %v5550
      %v5552 = vpop.xlane.xlu0 %5551
      %v5553 = vsel %vm5528, %v5477, 0.0
      %v5554 = vadd.f32 %v5476, %v5553
      %5555 = vadd.xlane.f32.xlu0 %v5554
      %v5556 = vpop.xlane.xlu0 %5555
      %v5557 = vsel %vm5528, %v5479, 0.0
      %v5558 = vadd.f32 %v5478, %v5557
      %5559 = vadd.xlane.f32.xlu0 %v5558
      %v5560 = vpop.xlane.xlu0 %5559
      %v5561 = vsel %vm5528, %v5481, 0.0
      %v5562 = vadd.f32 %v5480, %v5561
      %5563 = vadd.xlane.f32.xlu0 %v5562
      %v5564 = vpop.xlane.xlu0 %5563
      %v5565 = vsel %vm5528, %v5483, 0.0
      %v5566 = vadd.f32 %v5482, %v5565
      %5567 = vadd.xlane.f32.xlu0 %v5566
      %v5568 = vpop.xlane.xlu0 %5567
      %v5569 = vsel %vm5528, %v5485, 0.0
      %v5570 = vadd.f32 %v5484, %v5569
      %5571 = vadd.xlane.f32.xlu0 %v5570
      %v5572 = vpop.xlane.xlu0 %5571
      %v5573 = vsel %vm5528, %v5487, 0.0
      %v5574 = vadd.f32 %v5486, %v5573
      %5575 = vadd.xlane.f32.xlu0 %v5574
      %v5576 = vpop.xlane.xlu0 %5575
      %v5577 = vsel %vm5528, %v5489, 0.0
      %v5578 = vadd.f32 %v5488, %v5577
      %5579 = vadd.xlane.f32.xlu0 %v5578
      %v5580 = vpop.xlane.xlu0 %5579
      %v5581 = vsel %vm5528, %v5491, 0.0
      %v5582 = vadd.f32 %v5490, %v5581
      %5583 = vadd.xlane.f32.xlu0 %v5582
      %v5584 = vpop.xlane.xlu0 %5583
      %v5585 = vsel %vm5528, %v5493, 0.0
      %v5586 = vadd.f32 %v5492, %v5585
      %5587 = vadd.xlane.f32.xlu0 %v5586
      %v5588 = vpop.xlane.xlu0 %5587
      %v5589 = vsel %vm5528, %v5495, 0.0
      %v5590 = vadd.f32 %v5494, %v5589
      %5591 = vadd.xlane.f32.xlu0 %v5590
      %v5592 = vpop.xlane.xlu0 %5591
      %v5593 = vsel %vm5528, %v5497, 0.0
      %v5594 = vadd.f32 %v5496, %v5593
      %5595 = vadd.xlane.f32.xlu0 %v5594
      %v5596 = vpop.xlane.xlu0 %5595
      %v5597 = vsel %vm5528, %v5499, 0.0
      %v5598 = vadd.f32 %v5498, %v5597
      %5599 = vadd.xlane.f32.xlu0 %v5598
      %v5600 = vpop.xlane.xlu0 %5599
      %v5601 = vsel %vm5528, %v5501, 0.0
      %v5602 = vadd.f32 %v5500, %v5601
      %5603 = vadd.xlane.f32.xlu0 %v5602
      %v5604 = vpop.xlane.xlu0 %5603
      %v5605 = vsel %vm5528, %v5503, 0.0
      %v5606 = vadd.f32 %v5502, %v5605
      %5607 = vadd.xlane.f32.xlu0 %v5606
      %v5608 = vpop.xlane.xlu0 %5607
      %v5609 = vsel %vm5528, %v5505, 0.0
      %v5610 = vadd.f32 %v5504, %v5609
      %5611 = vadd.xlane.f32.xlu0 %v5610
      %v5612 = vpop.xlane.xlu0 %5611
      %v5613 = vsel %vm5528, %v5507, 0.0
      %v5614 = vadd.f32 %v5506, %v5613
      %5615 = vadd.xlane.f32.xlu0 %v5614
      %v5616 = vpop.xlane.xlu0 %5615
      %v5617 = vsel %vm5528, %v5509, 0.0
      %v5618 = vadd.f32 %v5508, %v5617
      %5619 = vadd.xlane.f32.xlu0 %v5618
      %v5620 = vpop.xlane.xlu0 %5619
      %v5621 = vsel %vm5528, %v5511, 0.0
      %v5622 = vadd.f32 %v5510, %v5621
      %5623 = vadd.xlane.f32.xlu0 %v5622
      %v5624 = vpop.xlane.xlu0 %5623
      %v5625 = vsel %vm5528, %v5513, 0.0
      %v5626 = vadd.f32 %v5512, %v5625
      %5627 = vadd.xlane.f32.xlu0 %v5626
      %v5628 = vpop.xlane.xlu0 %5627
      %v5629 = vsel %vm5528, %v5515, 0.0
      %v5630 = vadd.f32 %v5514, %v5629
      %5631 = vadd.xlane.f32.xlu0 %v5630
      %v5632 = vpop.xlane.xlu0 %5631
      %v5633 = vsel %vm5528, %v5517, 0.0
      %v5634 = vadd.f32 %v5516, %v5633
      %5635 = vadd.xlane.f32.xlu0 %v5634
      %v5636 = vpop.xlane.xlu0 %5635
      %v5637 = vsel %vm5528, %v5519, 0.0
      %v5638 = vadd.f32 %v5518, %v5637
      %5639 = vadd.xlane.f32.xlu0 %v5638
      %v5640 = vpop.xlane.xlu0 %5639
      %v5641 = vsel %vm5528, %v5521, 0.0
      %v5642 = vadd.f32 %v5520, %v5641
      %5643 = vadd.xlane.f32.xlu0 %v5642
      %v5644 = vpop.xlane.xlu0 %5643
      %v5645 = vsel %vm5528, %v5523, 0.0
      %v5646 = vadd.f32 %v5522, %v5645
      %5647 = vadd.xlane.f32.xlu0 %v5646
      %v5648 = vpop.xlane.xlu0 %5647
      %v5649 = vsel %vm5528, %v5525, 0.0
      %v5650 = vadd.f32 %v5524, %v5649
      %5651 = vadd.xlane.f32.xlu0 %v5650
      %v5652 = vpop.xlane.xlu0 %5651
      %v5653 = vsel %vm5528, %v5527, 0.0
      %v5654 = vadd.f32 %v5526, %v5653
      %5655 = vadd.xlane.f32.xlu0 %v5654
      %v5656 = vpop.xlane.xlu0 %5655
      %s5657 = sld [smem:[#allocation2]]
      %v5658 = vstv %s5657
      %v5659 = vadd.f32 %v5532, %v5658
      %v5660 = vadd.f32 %v5536, %v5658
      %v5661 = vadd.f32 %v5540, %v5658
      %v5662 = vadd.f32 %v5544, %v5658
      %v5663 = vadd.f32 %v5548, %v5658
      %v5664 = vadd.f32 %v5552, %v5658
      %v5665 = vadd.f32 %v5556, %v5658
      %v5666 = vadd.f32 %v5560, %v5658
      %v5667 = vadd.f32 %v5564, %v5658
      %v5668 = vadd.f32 %v5568, %v5658
      %v5669 = vadd.f32 %v5572, %v5658
      %v5670 = vadd.f32 %v5576, %v5658
      %v5671 = vadd.f32 %v5580, %v5658
      %v5672 = vadd.f32 %v5584, %v5658
      %v5673 = vadd.f32 %v5588, %v5658
      %v5674 = vadd.f32 %v5592, %v5658
      %v5675 = vadd.f32 %v5596, %v5658
      %v5676 = vadd.f32 %v5600, %v5658
      %v5677 = vadd.f32 %v5604, %v5658
      %v5678 = vadd.f32 %v5608, %v5658
      %v5679 = vadd.f32 %v5612, %v5658
      %v5680 = vadd.f32 %v5616, %v5658
      %v5681 = vadd.f32 %v5620, %v5658
      %v5682 = vadd.f32 %v5624, %v5658
      %v5683 = vadd.f32 %v5628, %v5658
      %v5684 = vadd.f32 %v5632, %v5658
      %v5685 = vadd.f32 %v5636, %v5658
      %v5686 = vadd.f32 %v5640, %v5658
      %v5687 = vadd.f32 %v5644, %v5658
      %v5688 = vadd.f32 %v5648, %v5658
      %v5689 = vadd.f32 %v5652, %v5658
      %v5690 = vadd.f32 %v5656, %v5658
      %vm5691 = vcmask 7168
      %5692 = vst.msk [vmem:[%s284] sm:$0xff] %vm5691, %v5659
      %5693 = vst.msk [vmem:[%s284 + $0x8] sm:$0xff] %vm5691, %v5660
      %5694 = vst.msk [vmem:[%s284 + $0x10] sm:$0xff] %vm5691, %v5661
      %5695 = vst.msk [vmem:[%s284 + $0x18] sm:$0xff] %vm5691, %v5662
      %5696 = vst.msk [vmem:[%s284 + $0x20] sm:$0xff] %vm5691, %v5663
      %5697 = vst.msk [vmem:[%s284 + $0x28] sm:$0xff] %vm5691, %v5664
      %5698 = vst.msk [vmem:[%s284 + $0x30] sm:$0xff] %vm5691, %v5665
      %5699 = vst.msk [vmem:[%s284 + $0x38] sm:$0xff] %vm5691, %v5666
      %5700 = vst.msk [vmem:[%s284 + $0x40] sm:$0xff] %vm5691, %v5667
      %5701 = vst.msk [vmem:[%s284 + $0x48] sm:$0xff] %vm5691, %v5668
      %5702 = vst.msk [vmem:[%s284 + $0x50] sm:$0xff] %vm5691, %v5669
      %5703 = vst.msk [vmem:[%s284 + $0x58] sm:$0xff] %vm5691, %v5670
      %5704 = vst.msk [vmem:[%s284 + $0x60] sm:$0xff] %vm5691, %v5671
      %5705 = vst.msk [vmem:[%s284 + $0x68] sm:$0xff] %vm5691, %v5672
      %5706 = vst.msk [vmem:[%s284 + $0x70] sm:$0xff] %vm5691, %v5673
      %5707 = vst.msk [vmem:[%s284 + $0x78] sm:$0xff] %vm5691, %v5674
      %5708 = vst.msk [vmem:[%s284 + $0x80] sm:$0xff] %vm5691, %v5675
      %5709 = vst.msk [vmem:[%s284 + $0x88] sm:$0xff] %vm5691, %v5676
      %5710 = vst.msk [vmem:[%s284 + $0x90] sm:$0xff] %vm5691, %v5677
      %5711 = vst.msk [vmem:[%s284 + $0x98] sm:$0xff] %vm5691, %v5678
      %5712 = vst.msk [vmem:[%s284 + $0xa0] sm:$0xff] %vm5691, %v5679
      %5713 = vst.msk [vmem:[%s284 + $0xa8] sm:$0xff] %vm5691, %v5680
      %5714 = vst.msk [vmem:[%s284 + $0xb0] sm:$0xff] %vm5691, %v5681
      %5715 = vst.msk [vmem:[%s284 + $0xb8] sm:$0xff] %vm5691, %v5682
      %5716 = vst.msk [vmem:[%s284 + $0xc0] sm:$0xff] %vm5691, %v5683
      %5717 = vst.msk [vmem:[%s284 + $0xc8] sm:$0xff] %vm5691, %v5684
      %5718 = vst.msk [vmem:[%s284 + $0xd0] sm:$0xff] %vm5691, %v5685
      %5719 = vst.msk [vmem:[%s284 + $0xd8] sm:$0xff] %vm5691, %v5686
      %5720 = vst.msk [vmem:[%s284 + $0xe0] sm:$0xff] %vm5691, %v5687
      %5721 = vst.msk [vmem:[%s284 + $0xe8] sm:$0xff] %vm5691, %v5688
      %5722 = vst.msk [vmem:[%s284 + $0xf0] sm:$0xff] %vm5691, %v5689
      %5723 = vst.msk [vmem:[%s284 + $0xf8] sm:$0xff] %vm5691, %v5690
      %s5724 = smul.u32 32, %s19
      %p5725 = scmp.lt.s32.totalorder %s5724, 127
      %s5726 = scalar_select %p5725, %s5724, 127
      %s5727 = smul.addr %s5726, 8
      %s5728 = scalar_lea.vmem %s7, %s5727
      // Predicated region
      $region49: #{simple_nn_for_vector_find_v9.1} parent=47 // pred_check
        %p5729 = pneg %p189
      $region50: #{simple_nn_for_vector_find_v9.1} parent=47 // pred_check_branch
        %5731 = sbr.rel (%p5729) target = $region52
      $region51: #{simple_nn_for_vector_find_v9.1} parent=47 // pred_region
        %s5732 = smul.u32 32, %s19
      $region52: #{simple_nn_for_vector_find_v9.1} parent=47 // pred_fallthru
        _
    $region48: #{simple_nn_for_vector_find_v9.1} parent=5 // pred_fallthru
      _
    %p5733 = scmp.le.s32.totalorder 2, %s14
    // Predicated region
    $region53: #{simple_nn_for_vector_find_v9.1} parent=5 // pred_check
      %p5734 = pneg %p5733
    $region54: #{simple_nn_for_vector_find_v9.1} parent=5 // pred_check_branch
      %5736 = sbr.rel (%p5734) target = $region56
    $region55: #{simple_nn_for_vector_find_v9.1} parent=5 // pred_region
      %s5737 = ssub.s32 %s14, 2
      // Predicated region
      $region57: #{simple_nn_for_vector_find_v9.1} parent=55 // pred_check
        %p5738 = pneg %p195
      $region58: #{simple_nn_for_vector_find_v9.1} parent=55 // pred_check_branch
        %5740 = sbr.rel (%p5738) target = $region60
      $region59: #{simple_nn_for_vector_find_v9.1} parent=55 // pred_region
        %s5741 = smul.u32 32, %s20
        %p5742 = scmp.lt.s32.totalorder %s5741, 127
        %s5743 = scalar_select %p5742, %s5741, 127
        %s5744 = smul.addr %s5743, 8
        %s5745 = scalar_lea.vmem %s7, %s5744
      $region60: #{simple_nn_for_vector_find_v9.1} parent=55 // pred_fallthru
        _
    $region56: #{simple_nn_for_vector_find_v9.1} parent=5 // pred_fallthru
      _
  $region6: #{simple_nn_for_vector_find_v9.1} parent=0 // loop_footer
    %s18 = sadd.s32 1, %s14
  $region7: #{simple_nn_for_vector_find_v9.1} parent=0 // loop_footer_branch
    %13 = sbr.rel target = $region3
  $region8: #{simple_nn_for_vector_find_v9.1} parent=0 // loop_exit
    _

</llo_original>
